<compile_context>
chip_gen: v5e
topology: v5e:2x2
jax: 0.10.0
libtpu: 0.0.40
codegen_flags: <defaults>
</compile_context>

<pallas_src>
import functools

import jax
import jax.numpy as jnp
import numpy as np
from jax.experimental import pallas as pl
from jax.experimental.pallas import tpu as pltpu

LATENT_DIM = 128
NUM_PARTS = 24
SEQ_LEN = 32
POOLS = (4, 4, 2)
FUSED_LANES = 12       # [x_prev(3) | x(3) | x_next(3) | t==0 | t==T-1 | 1]
CIN_FUSED = 16         # FUSED_LANES zero-padded to 16 (full last dim of block)
MAX_CHUNK_ROWS = 1024  # rows (markers * time) processed per grid step
SUB_TILE_ROWS = 128    # stage-0 streaming sub-tile target


def _conv1x3(x, mask_first, mask_last, w_ref, b_ref, layer, rows):
    """Conv2d(kernel=(1,3), padding=(0,1)) along time, channels-last.

    x:          (rows, C) f32, rows ordered marker-major / time-minor.
    mask_first: (rows, 1) bool, True where t == 0        (zeros the t-1 tap)
    mask_last:  (rows, 1) bool, True where t == t_len-1  (zeros the t+1 tap)
    w_ref:      (5, 3, C, C); tap k multiplies the input at time t-1+k.
    b_ref:      (5, 1, C)
    Roll wrap-around rows are always masked because tile boundaries coincide
    with marker boundaries.
    """
    x_prev = jnp.where(mask_first, 0.0, pltpu.roll(x, shift=1, axis=0))
    x_next = jnp.where(mask_last, 0.0, pltpu.roll(x, shift=rows - 1, axis=0))
    dn = (((1,), (0,)), ((), ()))
    y = (jax.lax.dot_general(x_prev, w_ref[layer, 0], dn,
                             preferred_element_type=jnp.float32)
         + jax.lax.dot_general(x, w_ref[layer, 1], dn,
                               preferred_element_type=jnp.float32)
         + jax.lax.dot_general(x_next, w_ref[layer, 2], dn,
                               preferred_element_type=jnp.float32))
    return y + b_ref[layer]


def _maxpool_time(z, pool_ref, rows, pool):
    """max_pool2d(kernel=(1,pool)) along time.

    Running max over the next pool-1 rows via pltpu.roll + maximum (rides the
    XLU/VPU slots under the MXU), then a single stride-`pool` sublane read
    from the VMEM scratch.  t_len % pool == 0, so no window crosses a marker
    boundary and the roll wrap-around rows are never read.
    """
    acc = z
    for k in range(1, pool):
        acc = jnp.maximum(acc, pltpu.roll(z, shift=rows - k, axis=0))
    out_rows = rows // pool
    pool_ref[pl.ds(0, rows), :] = acc
    return pool_ref[pl.ds(0, out_rows, stride=pool), :]


def _time_masks(rows, t_len):
    """(rows, 1) first/last-time-step masks; t_len is a power of two."""
    tpos = jax.lax.broadcasted_iota(jnp.int32, (rows, 1), 0) & (t_len - 1)
    return tpos == 0, tpos == t_len - 1


def _marker_segmenter_kernel(x_ref, wcat_ref, wc_ref, bc_ref,
                             wsa_ref, bsa_ref, wsb_ref, bsb_ref, out_ref,
                             act_ref, pool_ref, mfeat_ref,
                             *, chunk_m, sub_m, seq_len, latent):
    c = pl.program_id(1)
    n_chunks = pl.num_programs(1)
    dn = (((1,), (0,)), ((), ()))
    p0, p1, p2 = POOLS

    # ---- stage 0: fused [embedding + conv0a] -> conv0b -> relu -> pool4 ----
    # Streamed over sub_m-marker sub-tiles to bound the live vreg set.
    t0 = seq_len
    sub_rows = sub_m * t0
    out_sub = sub_rows // p0
    n_sub = chunk_m // sub_m
    mf0, ml0 = _time_masks(sub_rows, t0)
    w_cat = wcat_ref[...]                                       # (16, latent)

    def stage0(s, carry):
        r_in = pl.multiple_of(s * sub_rows, sub_rows)
        x = x_ref[pl.ds(r_in, sub_rows), :]                     # (sub_rows, 16)
        h = jax.lax.dot_general(x, w_cat, dn,
                                preferred_element_type=jnp.float32)
        h = _conv1x3(h, mf0, ml0, wc_ref, bc_ref, 0, sub_rows)  # conv0b
        h = jnp.maximum(h, 0.0)
        h = _maxpool_time(h, pool_ref, sub_rows, p0)
        r_out = pl.multiple_of(s * out_sub, out_sub)
        act_ref[pl.ds(r_out, out_sub), :] = h
        return carry

    jax.lax.fori_loop(0, n_sub, stage0, 0, unroll=True)

    # ---- stage 1: conv1a -> conv1b -> relu -> pool4 (whole chunk) ----------
    t1 = t0 // p0
    rows1 = chunk_m * t1
    mf1, ml1 = _time_masks(rows1, t1)
    h = act_ref[...]                                            # (rows1, latent)
    h = _conv1x3(h, mf1, ml1, wc_ref, bc_ref, 1, rows1)
    h = _conv1x3(h, mf1, ml1, wc_ref, bc_ref, 2, rows1)
    h = jnp.maximum(h, 0.0)
    h = _maxpool_time(h, pool_ref, rows1, p1)

    # ---- stage 2: conv2a -> conv2b -> relu -> pool2 -------------------------
    t2 = t1 // p1
    rows2 = chunk_m * t2
    mf2, ml2 = _time_masks(rows2, t2)
    h = _conv1x3(h, mf2, ml2, wc_ref, bc_ref, 3, rows2)
    h = _conv1x3(h, mf2, ml2, wc_ref, bc_ref, 4, rows2)
    h = jnp.maximum(h, 0.0)
    h = _maxpool_time(h, pool_ref, rows2, p2)

    t3 = t2 // p2                                               # = seq_len // 32
    if t3 == 1:
        feat = h                                                # (chunk_m, latent)
    else:
        # torch permute(0,2,1,3)+flatten => features ordered (latent, T//32)
        feat = jnp.swapaxes(h.reshape(chunk_m, t3, latent), 1, 2)
        feat = feat.reshape(chunk_m, latent * t3)

    start = c * chunk_m
    if chunk_m % 8 == 0:
        start = pl.multiple_of(start, 8)
    mfeat_ref[pl.ds(start, chunk_m), :] = feat

    # ---- segmentation head: once per batch, after the last marker chunk ----
    # (output block index is constant in c, so the block is written back to
    #  HBM only after the last chunk of each batch -- keep it that way.)
    @pl.when(c == n_chunks - 1)
    def _():
        mf = mfeat_ref[...]                                     # (M, f_half)
        g = jnp.sum(mf, axis=0, keepdims=True)                  # global marker sum
        # concat([g, mf]) @ wsa  ==  g @ wsa[0] + mf @ wsa[1]
        a = (jax.lax.dot_general(g, wsa_ref[0], dn,
                                 preferred_element_type=jnp.float32)
             + jax.lax.dot_general(mf, wsa_ref[1], dn,
                                   preferred_element_type=jnp.float32)
             + bsa_ref[...])
        a = jnp.maximum(a, 0.0)
        out = jax.lax.dot_general(a, wsb_ref[...], dn,
                                  preferred_element_type=jnp.float32) + bsb_ref[...]
        out_ref[...] = out.astype(out_ref.dtype)


def _pick_chunk_markers(m, t, max_rows=MAX_CHUNK_ROWS):
    best = 1
    for d in range(1, m + 1):
        if m % d == 0 and d * t <= max_rows:
            best = d
    return best


def _pick_sub_markers(chunk_m, t, target_rows=SUB_TILE_ROWS):
    best = 1
    for d in range(1, chunk_m + 1):
        if chunk_m % d == 0 and d * t <= target_rows:
            best = d
    return best


def marker_segmenter_forward(marker_pos, params, *, num_parts=NUM_PARTS,
                             latent_dim=LATENT_DIM, sequence_length=SEQ_LEN):
    b, t, m, _ = marker_pos.shape
    assert t == sequence_length and t % 32 == 0
    assert t & (t - 1) == 0, "time length must be a power of two"
    f_half = (sequence_length // 32) * latent_dim
    f_dim = 2 * f_half
    parts_pad = ((num_parts + 127) // 128) * 128    # lane-dense head writeback

    chunk_m = _pick_chunk_markers(m, t)
    n_chunks = m // chunk_m
    chunk_rows = chunk_m * t
    sub_m = _pick_sub_markers(chunk_m, t)
    pool_rows = max(sub_m * t, chunk_rows // POOLS[0])
    assert chunk_rows % 8 == 0

    hi = jax.lax.Precision.HIGHEST

    # ---- host glue: fused stage-0 input (B, M*T, 16) -----------------------
    # lanes: [x(t-1) xyz | x(t) xyz | x(t+1) xyz | t==0 | t==T-1 | 1 | 0-pad]
    mp = jnp.transpose(marker_pos, (0, 2, 1, 3)).astype(jnp.float32)   # (B,M,T,3)
    mp_prev = jnp.pad(mp, ((0, 0), (0, 0), (1, 0), (0, 0)))[:, :, :t, :]
    mp_next = jnp.pad(mp, ((0, 0), (0, 0), (0, 1), (0, 0)))[:, :, 1:, :]
    t_idx = jnp.arange(t)
    flags = jnp.stack([(t_idx == 0).astype(jnp.float32),
                       (t_idx == t - 1).astype(jnp.float32),
                       jnp.ones((t,), jnp.float32)], axis=-1)           # (T, 3)
    flags = jnp.broadcast_to(flags[None, None], (b, m, t, 3))
    x_cat = jnp.concatenate([mp_prev, mp, mp_next, flags], axis=-1)     # (B,M,T,12)
    x_cat = jnp.pad(x_cat, ((0, 0), (0, 0), (0, 0), (0, CIN_FUSED - FUSED_LANES)))
    x_cat = x_cat.reshape(b, m * t, CIN_FUSED)

    # ---- fold embedding + conv0a into one (16, latent) weight --------------
    #  conv0a(t) = sum_{k valid} (x[t-1+k] @ we + be) @ w0a[k] + b0a
    #            = x_prev @ (we@w0a[0]) + x @ (we@w0a[1]) + x_next @ (we@w0a[2])
    #              + [t==0]*(-be@w0a[0]) + [t==T-1]*(-be@w0a[2]) + bias_mid
    w0a = params["wc"][0]                              # (3, latent, latent)
    we, be = params["we"], params["be"]
    wf = [jnp.matmul(we, w0a[k], precision=hi) for k in range(3)]
    delta_first = -jnp.matmul(be, w0a[0], precision=hi)
    delta_last = -jnp.matmul(be, w0a[2], precision=hi)
    bias_mid = (jnp.matmul(be, w0a[0] + w0a[1] + w0a[2], precision=hi)
                + params["bc"][0])
    w_cat = jnp.concatenate(wf + [delta_first, delta_last, bias_mid], axis=0)
    w_cat = jnp.pad(w_cat, ((0, CIN_FUSED - FUSED_LANES), (0, 0)))      # (16, L)

    wc_rest = params["wc"][1:]                         # conv0b,1a,1b,2a,2b
    bc_rest = params["bc"][1:]
    wsa = params["wsa"].reshape(2, f_half, f_dim)      # [global | marker] halves
    wsb = jnp.pad(params["wsb"], ((0, 0), (0, parts_pad - num_parts)))
    bsb = jnp.pad(params["bsb"], ((0, 0), (0, parts_pad - num_parts)))

    kernel = functools.partial(_marker_segmenter_kernel, chunk_m=chunk_m,
                               sub_m=sub_m, seq_len=t, latent=latent_dim)
    out_pad = pl.pallas_call(
        kernel,
        out_shape=jax.ShapeDtypeStruct((b, m, parts_pad), jnp.float32),
        grid_spec=pltpu.PrefetchScalarGridSpec(
            num_scalar_prefetch=0,
            grid=(b, n_chunks),
            in_specs=[
                pl.BlockSpec((None, chunk_rows, CIN_FUSED),
                             lambda i, c: (i, c, 0)),
                pl.BlockSpec((CIN_FUSED, latent_dim), lambda i, c: (0, 0)),
                pl.BlockSpec((5, 3, latent_dim, latent_dim),
                             lambda i, c: (0, 0, 0, 0)),
                pl.BlockSpec((5, 1, latent_dim), lambda i, c: (0, 0, 0)),
                pl.BlockSpec((2, f_half, f_dim), lambda i, c: (0, 0, 0)),
                pl.BlockSpec((1, f_dim), lambda i, c: (0, 0)),
                pl.BlockSpec((f_dim, parts_pad), lambda i, c: (0, 0)),
                pl.BlockSpec((1, parts_pad), lambda i, c: (0, 0)),
            ],
            out_specs=pl.BlockSpec((None, m, parts_pad), lambda i, c: (i, 0, 0)),
            scratch_shapes=[
                pltpu.VMEM((chunk_rows // POOLS[0], latent_dim), jnp.float32),
                pltpu.VMEM((pool_rows, latent_dim), jnp.float32),
                pltpu.VMEM((m, f_half), jnp.float32),
            ]),
        compiler_params=pltpu.CompilerParams(
            dimension_semantics=("parallel", "arbitrary"),
            vmem_limit_bytes=32 * 1024 * 1024),
    )(x_cat, w_cat, wc_rest, bc_rest, wsa, params["bsa"], wsb, bsb)
    return out_pad[..., :num_parts]


def init_params(key, num_parts=NUM_PARTS, latent_dim=LATENT_DIM,
                sequence_length=SEQ_LEN):
    """Deterministic synthetic parameters with the module's shapes.

    Conv2d(L, L, (1,3)) weights are stored as (3, C_in, C_out) (tap, in, out),
    i.e. torch_weight[:, :, 0, k].T; Linear weights are stored transposed.
    """
    f_dim = (sequence_length // 32) * latent_dim * 2
    ks = jax.random.split(key, 8)
    return {
        "we": 0.1 * jax.random.normal(ks[0], (3, latent_dim), jnp.float32),
        "be": 0.1 * jax.random.normal(ks[1], (1, latent_dim), jnp.float32),
        "wc": 0.05 * jax.random.normal(ks[2], (6, 3, latent_dim, latent_dim),
                                       jnp.float32),
        "bc": 0.05 * jax.random.normal(ks[3], (6, 1, latent_dim), jnp.float32),
        "wsa": 0.05 * jax.random.normal(ks[4], (f_dim, f_dim), jnp.float32),
        "bsa": 0.05 * jax.random.normal(ks[5], (1, f_dim), jnp.float32),
        "wsb": 0.05 * jax.random.normal(ks[6], (f_dim, num_parts), jnp.float32),
        "bsb": 0.05 * jax.random.normal(ks[7], (1, num_parts), jnp.float32),
    }


def reference_forward(marker_pos, p):
    """Plain-JAX mirror of the PyTorch forward (root_orient=None path)."""
    hi = jax.lax.Precision.HIGHEST
    emb = jnp.einsum("btmi,il->btml", marker_pos, p["we"], precision=hi) + p["be"][0]
    h = jnp.transpose(emb, (0, 2, 1, 3))                      # (B, M, T, L)

    def conv(x, w3, bias):
        xp = jnp.pad(x, ((0, 0), (0, 0), (1, 1), (0, 0)))
        return (jnp.einsum("bmtc,cd->bmtd", xp[:, :, :-2], w3[0], precision=hi)
                + jnp.einsum("bmtc,cd->bmtd", xp[:, :, 1:-1], w3[1], precision=hi)
                + jnp.einsum("bmtc,cd->bmtd", xp[:, :, 2:], w3[2], precision=hi)
                + bias[0])

    def pool(x, k):
        bb, mm, tt, cc = x.shape
        return jnp.max(x.reshape(bb, mm, tt // k, k, cc), axis=3)

    for s in range(3):
        h = conv(h, p["wc"][2 * s], p["bc"][2 * s])
        h = jax.nn.relu(conv(h, p["wc"][2 * s + 1], p["bc"][2 * s + 1]))
        h = pool(h, POOLS[s])

    b, m = h.shape[0], h.shape[1]
    h = jnp.transpose(h, (0, 1, 3, 2)).reshape(b, m, -1)      # flatten as (L, T//32)
    g = jnp.sum(h, axis=1, keepdims=True)
    feats = jnp.concatenate([jnp.broadcast_to(g, h.shape), h], axis=-1)
    a = jax.nn.relu(jnp.einsum("bmf,fg->bmg", feats, p["wsa"], precision=hi)
                    + p["bsa"][0])
    return jnp.einsum("bmf,fp->bmp", a, p["wsb"], precision=hi) + p["bsb"][0]


if __name__ == "__main__":
    batch, num_markers = 2, 16
    key = jax.random.PRNGKey(0)
    kx, kp = jax.random.split(key)
    marker_pos = jax.random.normal(
        kx, (batch, SEQ_LEN, num_markers, 3), jnp.float32)
    params = init_params(kp)

    out = jax.block_until_ready(marker_segmenter_forward(marker_pos, params))
    assert out.shape == (batch, num_markers, NUM_PARTS)

    ref = jax.block_until_ready(reference_forward(marker_pos, params))
    np.testing.assert_allclose(np.asarray(out), np.asarray(ref),
                               rtol=5e-2, atol=1e-2)
    print("KERNEL_OK")
</pallas_src>

<mosaic_0001>
module attributes {stable_mosaic.version = 11 : i64} {
  func.func @_marker_segmenter_kernel(%arg0: i32, %arg1: i32, %arg2: memref<1x512x16xf32, #tpu.memory_space<vmem>>, %arg3: memref<16x128xf32, #tpu.memory_space<vmem>>, %arg4: memref<5x3x128x128xf32, #tpu.memory_space<vmem>>, %arg5: memref<5x1x128xf32, #tpu.memory_space<vmem>>, %arg6: memref<2x128x256xf32, #tpu.memory_space<vmem>>, %arg7: memref<1x256xf32, #tpu.memory_space<vmem>>, %arg8: memref<256x128xf32, #tpu.memory_space<vmem>>, %arg9: memref<1x128xf32, #tpu.memory_space<vmem>>, %arg10: memref<1x16x128xf32, #tpu.memory_space<vmem>>, %arg11: memref<128x128xf32, #tpu.memory_space<vmem>>, %arg12: memref<128x128xf32, #tpu.memory_space<vmem>>, %arg13: memref<16x128xf32, #tpu.memory_space<vmem>>) attributes {dimension_semantics = [#tpu.dimension_semantics<parallel>, #tpu.dimension_semantics<arbitrary>], iteration_bounds = array<i64: 2, 1>, scalar_prefetch = 0 : i64, scratch_operands = 3 : i64, tpu.core_type = #tpu.core_type<tc>, window_params = [{transform_indices = @transform_0, window_bounds = array<i64: 1, 512, 16>}, {pipeline_mode = #tpu.pipeline_mode<synchronous>, transform_indices = @transform_1, window_bounds = array<i64: 16, 128>}, {pipeline_mode = #tpu.pipeline_mode<synchronous>, transform_indices = @transform_2, window_bounds = array<i64: 5, 3, 128, 128>}, {pipeline_mode = #tpu.pipeline_mode<synchronous>, transform_indices = @transform_3, window_bounds = array<i64: 5, 1, 128>}, {pipeline_mode = #tpu.pipeline_mode<synchronous>, transform_indices = @transform_4, window_bounds = array<i64: 2, 128, 256>}, {pipeline_mode = #tpu.pipeline_mode<synchronous>, transform_indices = @transform_5, window_bounds = array<i64: 1, 256>}, {pipeline_mode = #tpu.pipeline_mode<synchronous>, transform_indices = @transform_6, window_bounds = array<i64: 256, 128>}, {pipeline_mode = #tpu.pipeline_mode<synchronous>, transform_indices = @transform_7, window_bounds = array<i64: 1, 128>}, {transform_indices = @transform_8, window_bounds = array<i64: 1, 16, 128>}]} {
    %0 = tpu.iota {dimensions = array<i32: 0>} : vector<128x1xi32>
    %c31_i32 = arith.constant 31 : i32
    %1 = vector.broadcast %c31_i32 : i32 to vector<128x1xi32>
    %2 = arith.andi %0, %1 : vector<128x1xi32>
    %c0_i32 = arith.constant 0 : i32
    %3 = vector.broadcast %c0_i32 : i32 to vector<128x1xi32>
    %4 = arith.cmpi eq, %2, %3 : vector<128x1xi32>
    %c31_i32_0 = arith.constant 31 : i32
    %5 = vector.broadcast %c31_i32_0 : i32 to vector<128x1xi32>
    %6 = arith.cmpi eq, %2, %5 : vector<128x1xi32>
    %c0 = arith.constant 0 : index
    %c0_1 = arith.constant 0 : index
    %7 = vector.load %arg3[%c0, %c0_1] : memref<16x128xf32, #tpu.memory_space<vmem>>, vector<16x128xf32>
    %c0_i32_2 = arith.constant 0 : i32
    %c128_i32 = arith.constant 128 : i32
    %8 = arith.muli %c0_i32_2, %c128_i32 : i32
    %9 = tpu.assume_multiple %8, 128 : i32
    %c0_3 = arith.constant 0 : index
    %10 = arith.index_cast %9 : i32 to index
    %c0_4 = arith.constant 0 : index
    %11 = vector.load %arg2[%c0_3, %10, %c0_4] : memref<1x512x16xf32, #tpu.memory_space<vmem>>, vector<1x128x16xf32>
    %12 = vector.shape_cast %11 : vector<1x128x16xf32> to vector<128x16xf32>
    %cst = arith.constant dense<0.000000e+00> : vector<128x128xf32>
    %13 = tpu.matmul %12, %7, %cst {dimension_numbers = #tpu.dot_dimension_numbers<[1], [0], [0], [1], [0, 0, 1, 1], [], []>} : vector<128x16xf32>, vector<16x128xf32>, vector<128x128xf32> -> vector<128x128xf32>
    %c1_i32 = arith.constant 1 : i32
    %14 = tpu.dynamic_rotate %13 by %c1_i32 dim 0 : vector<128x128xf32>, i32 -> vector<128x128xf32>
    %cst_5 = arith.constant 0.000000e+00 : f32
    %15 = vector.shape_cast %4 : vector<128x1xi1> to vector<128x1xi1>
    %16 = vector.broadcast %15 : vector<128x1xi1> to vector<128x128xi1>
    %17 = vector.broadcast %cst_5 : f32 to vector<128x128xf32>
    %18 = arith.select %16, %17, %14 : vector<128x128xi1>, vector<128x128xf32>
    %c127_i32 = arith.constant 127 : i32
    %19 = tpu.dynamic_rotate %13 by %c127_i32 dim 0 : vector<128x128xf32>, i32 -> vector<128x128xf32>
    %cst_6 = arith.constant 0.000000e+00 : f32
    %20 = vector.shape_cast %6 : vector<128x1xi1> to vector<128x1xi1>
    %21 = vector.broadcast %20 : vector<128x1xi1> to vector<128x128xi1>
    %22 = vector.broadcast %cst_6 : f32 to vector<128x128xf32>
    %23 = arith.select %21, %22, %19 : vector<128x128xi1>, vector<128x128xf32>
    %c0_7 = arith.constant 0 : index
    %c0_8 = arith.constant 0 : index
    %c0_9 = arith.constant 0 : index
    %c0_10 = arith.constant 0 : index
    %24 = vector.load %arg4[%c0_7, %c0_8, %c0_9, %c0_10] : memref<5x3x128x128xf32, #tpu.memory_space<vmem>>, vector<1x1x128x128xf32>
    %25 = vector.shape_cast %24 : vector<1x1x128x128xf32> to vector<128x128xf32>
    %cst_11 = arith.constant dense<0.000000e+00> : vector<128x128xf32>
    %26 = tpu.matmul %18, %25, %cst_11 {dimension_numbers = #tpu.dot_dimension_numbers<[1], [0], [0], [1], [0, 0, 1, 1], [], []>} : vector<128x128xf32>, vector<128x128xf32>, vector<128x128xf32> -> vector<128x128xf32>
    %c0_12 = arith.constant 0 : index
    %c1 = arith.constant 1 : index
    %c0_13 = arith.constant 0 : index
    %c0_14 = arith.constant 0 : index
    %27 = vector.load %arg4[%c0_12, %c1, %c0_13, %c0_14] : memref<5x3x128x128xf32, #tpu.memory_space<vmem>>, vector<1x1x128x128xf32>
    %28 = vector.shape_cast %27 : vector<1x1x128x128xf32> to vector<128x128xf32>
    %cst_15 = arith.constant dense<0.000000e+00> : vector<128x128xf32>
    %29 = tpu.matmul %13, %28, %cst_15 {dimension_numbers = #tpu.dot_dimension_numbers<[1], [0], [0], [1], [0, 0, 1, 1], [], []>} : vector<128x128xf32>, vector<128x128xf32>, vector<128x128xf32> -> vector<128x128xf32>
    %30 = arith.addf %26, %29 : vector<128x128xf32>
    %c0_16 = arith.constant 0 : index
    %c2 = arith.constant 2 : index
    %c0_17 = arith.constant 0 : index
    %c0_18 = arith.constant 0 : index
    %31 = vector.load %arg4[%c0_16, %c2, %c0_17, %c0_18] : memref<5x3x128x128xf32, #tpu.memory_space<vmem>>, vector<1x1x128x128xf32>
    %32 = vector.shape_cast %31 : vector<1x1x128x128xf32> to vector<128x128xf32>
    %cst_19 = arith.constant dense<0.000000e+00> : vector<128x128xf32>
    %33 = tpu.matmul %23, %32, %cst_19 {dimension_numbers = #tpu.dot_dimension_numbers<[1], [0], [0], [1], [0, 0, 1, 1], [], []>} : vector<128x128xf32>, vector<128x128xf32>, vector<128x128xf32> -> vector<128x128xf32>
    %34 = arith.addf %30, %33 : vector<128x128xf32>
    %c0_20 = arith.constant 0 : index
    %c0_21 = arith.constant 0 : index
    %c0_22 = arith.constant 0 : index
    %35 = vector.load %arg5[%c0_20, %c0_21, %c0_22] : memref<5x1x128xf32, #tpu.memory_space<vmem>>, vector<1x1x128xf32>
    %36 = vector.shape_cast %35 : vector<1x1x128xf32> to vector<1x128xf32>
    %37 = vector.broadcast %36 : vector<1x128xf32> to vector<128x128xf32>
    %38 = arith.addf %34, %37 : vector<128x128xf32>
    %cst_23 = arith.constant 0.000000e+00 : f32
    %39 = vector.broadcast %cst_23 : f32 to vector<128x128xf32>
    %40 = arith.maximumf %38, %39 : vector<128x128xf32>
    %c127_i32_24 = arith.constant 127 : i32
    %41 = tpu.dynamic_rotate %40 by %c127_i32_24 dim 0 : vector<128x128xf32>, i32 -> vector<128x128xf32>
    %42 = arith.maximumf %40, %41 : vector<128x128xf32>
    %c126_i32 = arith.constant 126 : i32
    %43 = tpu.dynamic_rotate %40 by %c126_i32 dim 0 : vector<128x128xf32>, i32 -> vector<128x128xf32>
    %44 = arith.maximumf %42, %43 : vector<128x128xf32>
    %c125_i32 = arith.constant 125 : i32
    %45 = tpu.dynamic_rotate %40 by %c125_i32 dim 0 : vector<128x128xf32>, i32 -> vector<128x128xf32>
    %46 = arith.maximumf %44, %45 : vector<128x128xf32>
    %c0_25 = arith.constant 0 : index
    %c0_26 = arith.constant 0 : index
    %47 = vector.load %arg12[%c0_25, %c0_26] : memref<128x128xf32, #tpu.memory_space<vmem>>, vector<128x128xf32>
    tpu.vector_store %arg12[%c0_25, %c0_26], %46 {strides = array<i32>} : memref<128x128xf32, #tpu.memory_space<vmem>>, vector<128x128xf32>,
    %c0_27 = arith.constant 0 : index
    %c0_28 = arith.constant 0 : index
    %48 = tpu.strided_load %arg12[%c0_27, %c0_28] {strides = array<i32: 4, 1>} : memref<128x128xf32, #tpu.memory_space<vmem>>, vector<32x128xf32>
    %c32_i32 = arith.constant 32 : i32
    %49 = arith.muli %c0_i32_2, %c32_i32 : i32
    %50 = tpu.assume_multiple %49, 32 : i32
    %51 = arith.index_cast %50 : i32 to index
    %c0_29 = arith.constant 0 : index
    %52 = vector.load %arg11[%51, %c0_29] : memref<128x128xf32, #tpu.memory_space<vmem>>, vector<32x128xf32>
    tpu.vector_store %arg11[%51, %c0_29], %48 {strides = array<i32>} : memref<128x128xf32, #tpu.memory_space<vmem>>, vector<32x128xf32>,
    %c1_i32_30 = arith.constant 1 : i32
    %c128_i32_31 = arith.constant 128 : i32
    %53 = arith.muli %c1_i32_30, %c128_i32_31 : i32
    %54 = tpu.assume_multiple %53, 128 : i32
    %c0_32 = arith.constant 0 : index
    %55 = arith.index_cast %54 : i32 to index
    %c0_33 = arith.constant 0 : index
    %56 = vector.load %arg2[%c0_32, %55, %c0_33] : memref<1x512x16xf32, #tpu.memory_space<vmem>>, vector<1x128x16xf32>
    %57 = vector.shape_cast %56 : vector<1x128x16xf32> to vector<128x16xf32>
    %cst_34 = arith.constant dense<0.000000e+00> : vector<128x128xf32>
    %58 = tpu.matmul %57, %7, %cst_34 {dimension_numbers = #tpu.dot_dimension_numbers<[1], [0], [0], [1], [0, 0, 1, 1], [], []>} : vector<128x16xf32>, vector<16x128xf32>, vector<128x128xf32> -> vector<128x128xf32>
    %c1_i32_35 = arith.constant 1 : i32
    %59 = tpu.dynamic_rotate %58 by %c1_i32_35 dim 0 : vector<128x128xf32>, i32 -> vector<128x128xf32>
    %cst_36 = arith.constant 0.000000e+00 : f32
    %60 = vector.shape_cast %4 : vector<128x1xi1> to vector<128x1xi1>
    %61 = vector.broadcast %60 : vector<128x1xi1> to vector<128x128xi1>
    %62 = vector.broadcast %cst_36 : f32 to vector<128x128xf32>
    %63 = arith.select %61, %62, %59 : vector<128x128xi1>, vector<128x128xf32>
    %c127_i32_37 = arith.constant 127 : i32
    %64 = tpu.dynamic_rotate %58 by %c127_i32_37 dim 0 : vector<128x128xf32>, i32 -> vector<128x128xf32>
    %cst_38 = arith.constant 0.000000e+00 : f32
    %65 = vector.shape_cast %6 : vector<128x1xi1> to vector<128x1xi1>
    %66 = vector.broadcast %65 : vector<128x1xi1> to vector<128x128xi1>
    %67 = vector.broadcast %cst_38 : f32 to vector<128x128xf32>
    %68 = arith.select %66, %67, %64 : vector<128x128xi1>, vector<128x128xf32>
    %c0_39 = arith.constant 0 : index
    %c0_40 = arith.constant 0 : index
    %c0_41 = arith.constant 0 : index
    %c0_42 = arith.constant 0 : index
    %69 = vector.load %arg4[%c0_39, %c0_40, %c0_41, %c0_42] : memref<5x3x128x128xf32, #tpu.memory_space<vmem>>, vector<1x1x128x128xf32>
    %70 = vector.shape_cast %69 : vector<1x1x128x128xf32> to vector<128x128xf32>
    %cst_43 = arith.constant dense<0.000000e+00> : vector<128x128xf32>
    %71 = tpu.matmul %63, %70, %cst_43 {dimension_numbers = #tpu.dot_dimension_numbers<[1], [0], [0], [1], [0, 0, 1, 1], [], []>} : vector<128x128xf32>, vector<128x128xf32>, vector<128x128xf32> -> vector<128x128xf32>
    %c0_44 = arith.constant 0 : index
    %c1_45 = arith.constant 1 : index
    %c0_46 = arith.constant 0 : index
    %c0_47 = arith.constant 0 : index
    %72 = vector.load %arg4[%c0_44, %c1_45, %c0_46, %c0_47] : memref<5x3x128x128xf32, #tpu.memory_space<vmem>>, vector<1x1x128x128xf32>
    %73 = vector.shape_cast %72 : vector<1x1x128x128xf32> to vector<128x128xf32>
    %cst_48 = arith.constant dense<0.000000e+00> : vector<128x128xf32>
    %74 = tpu.matmul %58, %73, %cst_48 {dimension_numbers = #tpu.dot_dimension_numbers<[1], [0], [0], [1], [0, 0, 1, 1], [], []>} : vector<128x128xf32>, vector<128x128xf32>, vector<128x128xf32> -> vector<128x128xf32>
    %75 = arith.addf %71, %74 : vector<128x128xf32>
    %c0_49 = arith.constant 0 : index
    %c2_50 = arith.constant 2 : index
    %c0_51 = arith.constant 0 : index
    %c0_52 = arith.constant 0 : index
    %76 = vector.load %arg4[%c0_49, %c2_50, %c0_51, %c0_52] : memref<5x3x128x128xf32, #tpu.memory_space<vmem>>, vector<1x1x128x128xf32>
    %77 = vector.shape_cast %76 : vector<1x1x128x128xf32> to vector<128x128xf32>
    %cst_53 = arith.constant dense<0.000000e+00> : vector<128x128xf32>
    %78 = tpu.matmul %68, %77, %cst_53 {dimension_numbers = #tpu.dot_dimension_numbers<[1], [0], [0], [1], [0, 0, 1, 1], [], []>} : vector<128x128xf32>, vector<128x128xf32>, vector<128x128xf32> -> vector<128x128xf32>
    %79 = arith.addf %75, %78 : vector<128x128xf32>
    %c0_54 = arith.constant 0 : index
    %c0_55 = arith.constant 0 : index
    %c0_56 = arith.constant 0 : index
    %80 = vector.load %arg5[%c0_54, %c0_55, %c0_56] : memref<5x1x128xf32, #tpu.memory_space<vmem>>, vector<1x1x128xf32>
    %81 = vector.shape_cast %80 : vector<1x1x128xf32> to vector<1x128xf32>
    %82 = vector.broadcast %81 : vector<1x128xf32> to vector<128x128xf32>
    %83 = arith.addf %79, %82 : vector<128x128xf32>
    %cst_57 = arith.constant 0.000000e+00 : f32
    %84 = vector.broadcast %cst_57 : f32 to vector<128x128xf32>
    %85 = arith.maximumf %83, %84 : vector<128x128xf32>
    %c127_i32_58 = arith.constant 127 : i32
    %86 = tpu.dynamic_rotate %85 by %c127_i32_58 dim 0 : vector<128x128xf32>, i32 -> vector<128x128xf32>
    %87 = arith.maximumf %85, %86 : vector<128x128xf32>
    %c126_i32_59 = arith.constant 126 : i32
    %88 = tpu.dynamic_rotate %85 by %c126_i32_59 dim 0 : vector<128x128xf32>, i32 -> vector<128x128xf32>
    %89 = arith.maximumf %87, %88 : vector<128x128xf32>
    %c125_i32_60 = arith.constant 125 : i32
    %90 = tpu.dynamic_rotate %85 by %c125_i32_60 dim 0 : vector<128x128xf32>, i32 -> vector<128x128xf32>
    %91 = arith.maximumf %89, %90 : vector<128x128xf32>
    %c0_61 = arith.constant 0 : index
    %c0_62 = arith.constant 0 : index
    %92 = vector.load %arg12[%c0_61, %c0_62] : memref<128x128xf32, #tpu.memory_space<vmem>>, vector<128x128xf32>
    tpu.vector_store %arg12[%c0_61, %c0_62], %91 {strides = array<i32>} : memref<128x128xf32, #tpu.memory_space<vmem>>, vector<128x128xf32>,
    %c0_63 = arith.constant 0 : index
    %c0_64 = arith.constant 0 : index
    %93 = tpu.strided_load %arg12[%c0_63, %c0_64] {strides = array<i32: 4, 1>} : memref<128x128xf32, #tpu.memory_space<vmem>>, vector<32x128xf32>
    %c32_i32_65 = arith.constant 32 : i32
    %94 = arith.muli %c1_i32_30, %c32_i32_65 : i32
    %95 = tpu.assume_multiple %94, 32 : i32
    %96 = arith.index_cast %95 : i32 to index
    %c0_66 = arith.constant 0 : index
    %97 = vector.load %arg11[%96, %c0_66] : memref<128x128xf32, #tpu.memory_space<vmem>>, vector<32x128xf32>
    tpu.vector_store %arg11[%96, %c0_66], %93 {strides = array<i32>} : memref<128x128xf32, #tpu.memory_space<vmem>>, vector<32x128xf32>,
    %c2_i32 = arith.constant 2 : i32
    %c128_i32_67 = arith.constant 128 : i32
    %98 = arith.muli %c2_i32, %c128_i32_67 : i32
    %99 = tpu.assume_multiple %98, 128 : i32
    %c0_68 = arith.constant 0 : index
    %100 = arith.index_cast %99 : i32 to index
    %c0_69 = arith.constant 0 : index
    %101 = vector.load %arg2[%c0_68, %100, %c0_69] : memref<1x512x16xf32, #tpu.memory_space<vmem>>, vector<1x128x16xf32>
    %102 = vector.shape_cast %101 : vector<1x128x16xf32> to vector<128x16xf32>
    %cst_70 = arith.constant dense<0.000000e+00> : vector<128x128xf32>
    %103 = tpu.matmul %102, %7, %cst_70 {dimension_numbers = #tpu.dot_dimension_numbers<[1], [0], [0], [1], [0, 0, 1, 1], [], []>} : vector<128x16xf32>, vector<16x128xf32>, vector<128x128xf32> -> vector<128x128xf32>
    %c1_i32_71 = arith.constant 1 : i32
    %104 = tpu.dynamic_rotate %103 by %c1_i32_71 dim 0 : vector<128x128xf32>, i32 -> vector<128x128xf32>
    %cst_72 = arith.constant 0.000000e+00 : f32
    %105 = vector.shape_cast %4 : vector<128x1xi1> to vector<128x1xi1>
    %106 = vector.broadcast %105 : vector<128x1xi1> to vector<128x128xi1>
    %107 = vector.broadcast %cst_72 : f32 to vector<128x128xf32>
    %108 = arith.select %106, %107, %104 : vector<128x128xi1>, vector<128x128xf32>
    %c127_i32_73 = arith.constant 127 : i32
    %109 = tpu.dynamic_rotate %103 by %c127_i32_73 dim 0 : vector<128x128xf32>, i32 -> vector<128x128xf32>
    %cst_74 = arith.constant 0.000000e+00 : f32
    %110 = vector.shape_cast %6 : vector<128x1xi1> to vector<128x1xi1>
    %111 = vector.broadcast %110 : vector<128x1xi1> to vector<128x128xi1>
    %112 = vector.broadcast %cst_74 : f32 to vector<128x128xf32>
    %113 = arith.select %111, %112, %109 : vector<128x128xi1>, vector<128x128xf32>
    %c0_75 = arith.constant 0 : index
    %c0_76 = arith.constant 0 : index
    %c0_77 = arith.constant 0 : index
    %c0_78 = arith.constant 0 : index
    %114 = vector.load %arg4[%c0_75, %c0_76, %c0_77, %c0_78] : memref<5x3x128x128xf32, #tpu.memory_space<vmem>>, vector<1x1x128x128xf32>
    %115 = vector.shape_cast %114 : vector<1x1x128x128xf32> to vector<128x128xf32>
    %cst_79 = arith.constant dense<0.000000e+00> : vector<128x128xf32>
    %116 = tpu.matmul %108, %115, %cst_79 {dimension_numbers = #tpu.dot_dimension_numbers<[1], [0], [0], [1], [0, 0, 1, 1], [], []>} : vector<128x128xf32>, vector<128x128xf32>, vector<128x128xf32> -> vector<128x128xf32>
    %c0_80 = arith.constant 0 : index
    %c1_81 = arith.constant 1 : index
    %c0_82 = arith.constant 0 : index
    %c0_83 = arith.constant 0 : index
    %117 = vector.load %arg4[%c0_80, %c1_81, %c0_82, %c0_83] : memref<5x3x128x128xf32, #tpu.memory_space<vmem>>, vector<1x1x128x128xf32>
    %118 = vector.shape_cast %117 : vector<1x1x128x128xf32> to vector<128x128xf32>
    %cst_84 = arith.constant dense<0.000000e+00> : vector<128x128xf32>
    %119 = tpu.matmul %103, %118, %cst_84 {dimension_numbers = #tpu.dot_dimension_numbers<[1], [0], [0], [1], [0, 0, 1, 1], [], []>} : vector<128x128xf32>, vector<128x128xf32>, vector<128x128xf32> -> vector<128x128xf32>
    %120 = arith.addf %116, %119 : vector<128x128xf32>
    %c0_85 = arith.constant 0 : index
    %c2_86 = arith.constant 2 : index
    %c0_87 = arith.constant 0 : index
    %c0_88 = arith.constant 0 : index
    %121 = vector.load %arg4[%c0_85, %c2_86, %c0_87, %c0_88] : memref<5x3x128x128xf32, #tpu.memory_space<vmem>>, vector<1x1x128x128xf32>
    %122 = vector.shape_cast %121 : vector<1x1x128x128xf32> to vector<128x128xf32>
    %cst_89 = arith.constant dense<0.000000e+00> : vector<128x128xf32>
    %123 = tpu.matmul %113, %122, %cst_89 {dimension_numbers = #tpu.dot_dimension_numbers<[1], [0], [0], [1], [0, 0, 1, 1], [], []>} : vector<128x128xf32>, vector<128x128xf32>, vector<128x128xf32> -> vector<128x128xf32>
    %124 = arith.addf %120, %123 : vector<128x128xf32>
    %c0_90 = arith.constant 0 : index
    %c0_91 = arith.constant 0 : index
    %c0_92 = arith.constant 0 : index
    %125 = vector.load %arg5[%c0_90, %c0_91, %c0_92] : memref<5x1x128xf32, #tpu.memory_space<vmem>>, vector<1x1x128xf32>
    %126 = vector.shape_cast %125 : vector<1x1x128xf32> to vector<1x128xf32>
    %127 = vector.broadcast %126 : vector<1x128xf32> to vector<128x128xf32>
    %128 = arith.addf %124, %127 : vector<128x128xf32>
    %cst_93 = arith.constant 0.000000e+00 : f32
    %129 = vector.broadcast %cst_93 : f32 to vector<128x128xf32>
    %130 = arith.maximumf %128, %129 : vector<128x128xf32>
    %c127_i32_94 = arith.constant 127 : i32
    %131 = tpu.dynamic_rotate %130 by %c127_i32_94 dim 0 : vector<128x128xf32>, i32 -> vector<128x128xf32>
    %132 = arith.maximumf %130, %131 : vector<128x128xf32>
    %c126_i32_95 = arith.constant 126 : i32
    %133 = tpu.dynamic_rotate %130 by %c126_i32_95 dim 0 : vector<128x128xf32>, i32 -> vector<128x128xf32>
    %134 = arith.maximumf %132, %133 : vector<128x128xf32>
    %c125_i32_96 = arith.constant 125 : i32
    %135 = tpu.dynamic_rotate %130 by %c125_i32_96 dim 0 : vector<128x128xf32>, i32 -> vector<128x128xf32>
    %136 = arith.maximumf %134, %135 : vector<128x128xf32>
    %c0_97 = arith.constant 0 : index
    %c0_98 = arith.constant 0 : index
    %137 = vector.load %arg12[%c0_97, %c0_98] : memref<128x128xf32, #tpu.memory_space<vmem>>, vector<128x128xf32>
    tpu.vector_store %arg12[%c0_97, %c0_98], %136 {strides = array<i32>} : memref<128x128xf32, #tpu.memory_space<vmem>>, vector<128x128xf32>,
    %c0_99 = arith.constant 0 : index
    %c0_100 = arith.constant 0 : index
    %138 = tpu.strided_load %arg12[%c0_99, %c0_100] {strides = array<i32: 4, 1>} : memref<128x128xf32, #tpu.memory_space<vmem>>, vector<32x128xf32>
    %c32_i32_101 = arith.constant 32 : i32
    %139 = arith.muli %c2_i32, %c32_i32_101 : i32
    %140 = tpu.assume_multiple %139, 32 : i32
    %141 = arith.index_cast %140 : i32 to index
    %c0_102 = arith.constant 0 : index
    %142 = vector.load %arg11[%141, %c0_102] : memref<128x128xf32, #tpu.memory_space<vmem>>, vector<32x128xf32>
    tpu.vector_store %arg11[%141, %c0_102], %138 {strides = array<i32>} : memref<128x128xf32, #tpu.memory_space<vmem>>, vector<32x128xf32>,
    %c3_i32 = arith.constant 3 : i32
    %c128_i32_103 = arith.constant 128 : i32
    %143 = arith.muli %c3_i32, %c128_i32_103 : i32
    %144 = tpu.assume_multiple %143, 128 : i32
    %c0_104 = arith.constant 0 : index
    %145 = arith.index_cast %144 : i32 to index
    %c0_105 = arith.constant 0 : index
    %146 = vector.load %arg2[%c0_104, %145, %c0_105] : memref<1x512x16xf32, #tpu.memory_space<vmem>>, vector<1x128x16xf32>
    %147 = vector.shape_cast %146 : vector<1x128x16xf32> to vector<128x16xf32>
    %cst_106 = arith.constant dense<0.000000e+00> : vector<128x128xf32>
    %148 = tpu.matmul %147, %7, %cst_106 {dimension_numbers = #tpu.dot_dimension_numbers<[1], [0], [0], [1], [0, 0, 1, 1], [], []>} : vector<128x16xf32>, vector<16x128xf32>, vector<128x128xf32> -> vector<128x128xf32>
    %c1_i32_107 = arith.constant 1 : i32
    %149 = tpu.dynamic_rotate %148 by %c1_i32_107 dim 0 : vector<128x128xf32>, i32 -> vector<128x128xf32>
    %cst_108 = arith.constant 0.000000e+00 : f32
    %150 = vector.shape_cast %4 : vector<128x1xi1> to vector<128x1xi1>
    %151 = vector.broadcast %150 : vector<128x1xi1> to vector<128x128xi1>
    %152 = vector.broadcast %cst_108 : f32 to vector<128x128xf32>
    %153 = arith.select %151, %152, %149 : vector<128x128xi1>, vector<128x128xf32>
    %c127_i32_109 = arith.constant 127 : i32
    %154 = tpu.dynamic_rotate %148 by %c127_i32_109 dim 0 : vector<128x128xf32>, i32 -> vector<128x128xf32>
    %cst_110 = arith.constant 0.000000e+00 : f32
    %155 = vector.shape_cast %6 : vector<128x1xi1> to vector<128x1xi1>
    %156 = vector.broadcast %155 : vector<128x1xi1> to vector<128x128xi1>
    %157 = vector.broadcast %cst_110 : f32 to vector<128x128xf32>
    %158 = arith.select %156, %157, %154 : vector<128x128xi1>, vector<128x128xf32>
    %c0_111 = arith.constant 0 : index
    %c0_112 = arith.constant 0 : index
    %c0_113 = arith.constant 0 : index
    %c0_114 = arith.constant 0 : index
    %159 = vector.load %arg4[%c0_111, %c0_112, %c0_113, %c0_114] : memref<5x3x128x128xf32, #tpu.memory_space<vmem>>, vector<1x1x128x128xf32>
    %160 = vector.shape_cast %159 : vector<1x1x128x128xf32> to vector<128x128xf32>
    %cst_115 = arith.constant dense<0.000000e+00> : vector<128x128xf32>
    %161 = tpu.matmul %153, %160, %cst_115 {dimension_numbers = #tpu.dot_dimension_numbers<[1], [0], [0], [1], [0, 0, 1, 1], [], []>} : vector<128x128xf32>, vector<128x128xf32>, vector<128x128xf32> -> vector<128x128xf32>
    %c0_116 = arith.constant 0 : index
    %c1_117 = arith.constant 1 : index
    %c0_118 = arith.constant 0 : index
    %c0_119 = arith.constant 0 : index
    %162 = vector.load %arg4[%c0_116, %c1_117, %c0_118, %c0_119] : memref<5x3x128x128xf32, #tpu.memory_space<vmem>>, vector<1x1x128x128xf32>
    %163 = vector.shape_cast %162 : vector<1x1x128x128xf32> to vector<128x128xf32>
    %cst_120 = arith.constant dense<0.000000e+00> : vector<128x128xf32>
    %164 = tpu.matmul %148, %163, %cst_120 {dimension_numbers = #tpu.dot_dimension_numbers<[1], [0], [0], [1], [0, 0, 1, 1], [], []>} : vector<128x128xf32>, vector<128x128xf32>, vector<128x128xf32> -> vector<128x128xf32>
    %165 = arith.addf %161, %164 : vector<128x128xf32>
    %c0_121 = arith.constant 0 : index
    %c2_122 = arith.constant 2 : index
    %c0_123 = arith.constant 0 : index
    %c0_124 = arith.constant 0 : index
    %166 = vector.load %arg4[%c0_121, %c2_122, %c0_123, %c0_124] : memref<5x3x128x128xf32, #tpu.memory_space<vmem>>, vector<1x1x128x128xf32>
    %167 = vector.shape_cast %166 : vector<1x1x128x128xf32> to vector<128x128xf32>
    %cst_125 = arith.constant dense<0.000000e+00> : vector<128x128xf32>
    %168 = tpu.matmul %158, %167, %cst_125 {dimension_numbers = #tpu.dot_dimension_numbers<[1], [0], [0], [1], [0, 0, 1, 1], [], []>} : vector<128x128xf32>, vector<128x128xf32>, vector<128x128xf32> -> vector<128x128xf32>
    %169 = arith.addf %165, %168 : vector<128x128xf32>
    %c0_126 = arith.constant 0 : index
    %c0_127 = arith.constant 0 : index
    %c0_128 = arith.constant 0 : index
    %170 = vector.load %arg5[%c0_126, %c0_127, %c0_128] : memref<5x1x128xf32, #tpu.memory_space<vmem>>, vector<1x1x128xf32>
    %171 = vector.shape_cast %170 : vector<1x1x128xf32> to vector<1x128xf32>
    %172 = vector.broadcast %171 : vector<1x128xf32> to vector<128x128xf32>
    %173 = arith.addf %169, %172 : vector<128x128xf32>
    %cst_129 = arith.constant 0.000000e+00 : f32
    %174 = vector.broadcast %cst_129 : f32 to vector<128x128xf32>
    %175 = arith.maximumf %173, %174 : vector<128x128xf32>
    %c127_i32_130 = arith.constant 127 : i32
    %176 = tpu.dynamic_rotate %175 by %c127_i32_130 dim 0 : vector<128x128xf32>, i32 -> vector<128x128xf32>
    %177 = arith.maximumf %175, %176 : vector<128x128xf32>
    %c126_i32_131 = arith.constant 126 : i32
    %178 = tpu.dynamic_rotate %175 by %c126_i32_131 dim 0 : vector<128x128xf32>, i32 -> vector<128x128xf32>
    %179 = arith.maximumf %177, %178 : vector<128x128xf32>
    %c125_i32_132 = arith.constant 125 : i32
    %180 = tpu.dynamic_rotate %175 by %c125_i32_132 dim 0 : vector<128x128xf32>, i32 -> vector<128x128xf32>
    %181 = arith.maximumf %179, %180 : vector<128x128xf32>
    %c0_133 = arith.constant 0 : index
    %c0_134 = arith.constant 0 : index
    %182 = vector.load %arg12[%c0_133, %c0_134] : memref<128x128xf32, #tpu.memory_space<vmem>>, vector<128x128xf32>
    tpu.vector_store %arg12[%c0_133, %c0_134], %181 {strides = array<i32>} : memref<128x128xf32, #tpu.memory_space<vmem>>, vector<128x128xf32>,
    %c0_135 = arith.constant 0 : index
    %c0_136 = arith.constant 0 : index
    %183 = tpu.strided_load %arg12[%c0_135, %c0_136] {strides = array<i32: 4, 1>} : memref<128x128xf32, #tpu.memory_space<vmem>>, vector<32x128xf32>
    %c32_i32_137 = arith.constant 32 : i32
    %184 = arith.muli %c3_i32, %c32_i32_137 : i32
    %185 = tpu.assume_multiple %184, 32 : i32
    %186 = arith.index_cast %185 : i32 to index
    %c0_138 = arith.constant 0 : index
    %187 = vector.load %arg11[%186, %c0_138] : memref<128x128xf32, #tpu.memory_space<vmem>>, vector<32x128xf32>
    tpu.vector_store %arg11[%186, %c0_138], %183 {strides = array<i32>} : memref<128x128xf32, #tpu.memory_space<vmem>>, vector<32x128xf32>,
    %c4_i32 = arith.constant 4 : i32
    %188 = tpu.iota {dimensions = array<i32: 0>} : vector<128x1xi32>
    %c7_i32 = arith.constant 7 : i32
    %189 = vector.broadcast %c7_i32 : i32 to vector<128x1xi32>
    %190 = arith.andi %188, %189 : vector<128x1xi32>
    %c0_i32_139 = arith.constant 0 : i32
    %191 = vector.broadcast %c0_i32_139 : i32 to vector<128x1xi32>
    %192 = arith.cmpi eq, %190, %191 : vector<128x1xi32>
    %c7_i32_140 = arith.constant 7 : i32
    %193 = vector.broadcast %c7_i32_140 : i32 to vector<128x1xi32>
    %194 = arith.cmpi eq, %190, %193 : vector<128x1xi32>
    %c0_141 = arith.constant 0 : index
    %c0_142 = arith.constant 0 : index
    %195 = vector.load %arg11[%c0_141, %c0_142] : memref<128x128xf32, #tpu.memory_space<vmem>>, vector<128x128xf32>
    %c1_i32_143 = arith.constant 1 : i32
    %196 = tpu.dynamic_rotate %195 by %c1_i32_143 dim 0 : vector<128x128xf32>, i32 -> vector<128x128xf32>
    %cst_144 = arith.constant 0.000000e+00 : f32
    %197 = vector.shape_cast %192 : vector<128x1xi1> to vector<128x1xi1>
    %198 = vector.broadcast %197 : vector<128x1xi1> to vector<128x128xi1>
    %199 = vector.broadcast %cst_144 : f32 to vector<128x128xf32>
    %200 = arith.select %198, %199, %196 : vector<128x128xi1>, vector<128x128xf32>
    %c127_i32_145 = arith.constant 127 : i32
    %201 = tpu.dynamic_rotate %195 by %c127_i32_145 dim 0 : vector<128x128xf32>, i32 -> vector<128x128xf32>
    %cst_146 = arith.constant 0.000000e+00 : f32
    %202 = vector.shape_cast %194 : vector<128x1xi1> to vector<128x1xi1>
    %203 = vector.broadcast %202 : vector<128x1xi1> to vector<128x128xi1>
    %204 = vector.broadcast %cst_146 : f32 to vector<128x128xf32>
    %205 = arith.select %203, %204, %201 : vector<128x128xi1>, vector<128x128xf32>
    %c1_147 = arith.constant 1 : index
    %c0_148 = arith.constant 0 : index
    %c0_149 = arith.constant 0 : index
    %c0_150 = arith.constant 0 : index
    %206 = vector.load %arg4[%c1_147, %c0_148, %c0_149, %c0_150] : memref<5x3x128x128xf32, #tpu.memory_space<vmem>>, vector<1x1x128x128xf32>
    %207 = vector.shape_cast %206 : vector<1x1x128x128xf32> to vector<128x128xf32>
    %cst_151 = arith.constant dense<0.000000e+00> : vector<128x128xf32>
    %208 = tpu.matmul %200, %207, %cst_151 {dimension_numbers = #tpu.dot_dimension_numbers<[1], [0], [0], [1], [0, 0, 1, 1], [], []>} : vector<128x128xf32>, vector<128x128xf32>, vector<128x128xf32> -> vector<128x128xf32>
    %c1_152 = arith.constant 1 : index
    %c1_153 = arith.constant 1 : index
    %c0_154 = arith.constant 0 : index
    %c0_155 = arith.constant 0 : index
    %209 = vector.load %arg4[%c1_152, %c1_153, %c0_154, %c0_155] : memref<5x3x128x128xf32, #tpu.memory_space<vmem>>, vector<1x1x128x128xf32>
    %210 = vector.shape_cast %209 : vector<1x1x128x128xf32> to vector<128x128xf32>
    %cst_156 = arith.constant dense<0.000000e+00> : vector<128x128xf32>
    %211 = tpu.matmul %195, %210, %cst_156 {dimension_numbers = #tpu.dot_dimension_numbers<[1], [0], [0], [1], [0, 0, 1, 1], [], []>} : vector<128x128xf32>, vector<128x128xf32>, vector<128x128xf32> -> vector<128x128xf32>
    %212 = arith.addf %208, %211 : vector<128x128xf32>
    %c1_157 = arith.constant 1 : index
    %c2_158 = arith.constant 2 : index
    %c0_159 = arith.constant 0 : index
    %c0_160 = arith.constant 0 : index
    %213 = vector.load %arg4[%c1_157, %c2_158, %c0_159, %c0_160] : memref<5x3x128x128xf32, #tpu.memory_space<vmem>>, vector<1x1x128x128xf32>
    %214 = vector.shape_cast %213 : vector<1x1x128x128xf32> to vector<128x128xf32>
    %cst_161 = arith.constant dense<0.000000e+00> : vector<128x128xf32>
    %215 = tpu.matmul %205, %214, %cst_161 {dimension_numbers = #tpu.dot_dimension_numbers<[1], [0], [0], [1], [0, 0, 1, 1], [], []>} : vector<128x128xf32>, vector<128x128xf32>, vector<128x128xf32> -> vector<128x128xf32>
    %216 = arith.addf %212, %215 : vector<128x128xf32>
    %c1_162 = arith.constant 1 : index
    %c0_163 = arith.constant 0 : index
    %c0_164 = arith.constant 0 : index
    %217 = vector.load %arg5[%c1_162, %c0_163, %c0_164] : memref<5x1x128xf32, #tpu.memory_space<vmem>>, vector<1x1x128xf32>
    %218 = vector.shape_cast %217 : vector<1x1x128xf32> to vector<1x128xf32>
    %219 = vector.broadcast %218 : vector<1x128xf32> to vector<128x128xf32>
    %220 = arith.addf %216, %219 : vector<128x128xf32>
    %c1_i32_165 = arith.constant 1 : i32
    %221 = tpu.dynamic_rotate %220 by %c1_i32_165 dim 0 : vector<128x128xf32>, i32 -> vector<128x128xf32>
    %cst_166 = arith.constant 0.000000e+00 : f32
    %222 = vector.shape_cast %192 : vector<128x1xi1> to vector<128x1xi1>
    %223 = vector.broadcast %222 : vector<128x1xi1> to vector<128x128xi1>
    %224 = vector.broadcast %cst_166 : f32 to vector<128x128xf32>
    %225 = arith.select %223, %224, %221 : vector<128x128xi1>, vector<128x128xf32>
    %c127_i32_167 = arith.constant 127 : i32
    %226 = tpu.dynamic_rotate %220 by %c127_i32_167 dim 0 : vector<128x128xf32>, i32 -> vector<128x128xf32>
    %cst_168 = arith.constant 0.000000e+00 : f32
    %227 = vector.shape_cast %194 : vector<128x1xi1> to vector<128x1xi1>
    %228 = vector.broadcast %227 : vector<128x1xi1> to vector<128x128xi1>
    %229 = vector.broadcast %cst_168 : f32 to vector<128x128xf32>
    %230 = arith.select %228, %229, %226 : vector<128x128xi1>, vector<128x128xf32>
    %c2_169 = arith.constant 2 : index
    %c0_170 = arith.constant 0 : index
    %c0_171 = arith.constant 0 : index
    %c0_172 = arith.constant 0 : index
    %231 = vector.load %arg4[%c2_169, %c0_170, %c0_171, %c0_172] : memref<5x3x128x128xf32, #tpu.memory_space<vmem>>, vector<1x1x128x128xf32>
    %232 = vector.shape_cast %231 : vector<1x1x128x128xf32> to vector<128x128xf32>
    %cst_173 = arith.constant dense<0.000000e+00> : vector<128x128xf32>
    %233 = tpu.matmul %225, %232, %cst_173 {dimension_numbers = #tpu.dot_dimension_numbers<[1], [0], [0], [1], [0, 0, 1, 1], [], []>} : vector<128x128xf32>, vector<128x128xf32>, vector<128x128xf32> -> vector<128x128xf32>
    %c2_174 = arith.constant 2 : index
    %c1_175 = arith.constant 1 : index
    %c0_176 = arith.constant 0 : index
    %c0_177 = arith.constant 0 : index
    %234 = vector.load %arg4[%c2_174, %c1_175, %c0_176, %c0_177] : memref<5x3x128x128xf32, #tpu.memory_space<vmem>>, vector<1x1x128x128xf32>
    %235 = vector.shape_cast %234 : vector<1x1x128x128xf32> to vector<128x128xf32>
    %cst_178 = arith.constant dense<0.000000e+00> : vector<128x128xf32>
    %236 = tpu.matmul %220, %235, %cst_178 {dimension_numbers = #tpu.dot_dimension_numbers<[1], [0], [0], [1], [0, 0, 1, 1], [], []>} : vector<128x128xf32>, vector<128x128xf32>, vector<128x128xf32> -> vector<128x128xf32>
    %237 = arith.addf %233, %236 : vector<128x128xf32>
    %c2_179 = arith.constant 2 : index
    %c2_180 = arith.constant 2 : index
    %c0_181 = arith.constant 0 : index
    %c0_182 = arith.constant 0 : index
    %238 = vector.load %arg4[%c2_179, %c2_180, %c0_181, %c0_182] : memref<5x3x128x128xf32, #tpu.memory_space<vmem>>, vector<1x1x128x128xf32>
    %239 = vector.shape_cast %238 : vector<1x1x128x128xf32> to vector<128x128xf32>
    %cst_183 = arith.constant dense<0.000000e+00> : vector<128x128xf32>
    %240 = tpu.matmul %230, %239, %cst_183 {dimension_numbers = #tpu.dot_dimension_numbers<[1], [0], [0], [1], [0, 0, 1, 1], [], []>} : vector<128x128xf32>, vector<128x128xf32>, vector<128x128xf32> -> vector<128x128xf32>
    %241 = arith.addf %237, %240 : vector<128x128xf32>
    %c2_184 = arith.constant 2 : index
    %c0_185 = arith.constant 0 : index
    %c0_186 = arith.constant 0 : index
    %242 = vector.load %arg5[%c2_184, %c0_185, %c0_186] : memref<5x1x128xf32, #tpu.memory_space<vmem>>, vector<1x1x128xf32>
    %243 = vector.shape_cast %242 : vector<1x1x128xf32> to vector<1x128xf32>
    %244 = vector.broadcast %243 : vector<1x128xf32> to vector<128x128xf32>
    %245 = arith.addf %241, %244 : vector<128x128xf32>
    %cst_187 = arith.constant 0.000000e+00 : f32
    %246 = vector.broadcast %cst_187 : f32 to vector<128x128xf32>
    %247 = arith.maximumf %245, %246 : vector<128x128xf32>
    %c127_i32_188 = arith.constant 127 : i32
    %248 = tpu.dynamic_rotate %247 by %c127_i32_188 dim 0 : vector<128x128xf32>, i32 -> vector<128x128xf32>
    %249 = arith.maximumf %247, %248 : vector<128x128xf32>
    %c126_i32_189 = arith.constant 126 : i32
    %250 = tpu.dynamic_rotate %247 by %c126_i32_189 dim 0 : vector<128x128xf32>, i32 -> vector<128x128xf32>
    %251 = arith.maximumf %249, %250 : vector<128x128xf32>
    %c125_i32_190 = arith.constant 125 : i32
    %252 = tpu.dynamic_rotate %247 by %c125_i32_190 dim 0 : vector<128x128xf32>, i32 -> vector<128x128xf32>
    %253 = arith.maximumf %251, %252 : vector<128x128xf32>
    %c0_191 = arith.constant 0 : index
    %c0_192 = arith.constant 0 : index
    %254 = vector.load %arg12[%c0_191, %c0_192] : memref<128x128xf32, #tpu.memory_space<vmem>>, vector<128x128xf32>
    tpu.vector_store %arg12[%c0_191, %c0_192], %253 {strides = array<i32>} : memref<128x128xf32, #tpu.memory_space<vmem>>, vector<128x128xf32>,
    %c0_193 = arith.constant 0 : index
    %c0_194 = arith.constant 0 : index
    %255 = tpu.strided_load %arg12[%c0_193, %c0_194] {strides = array<i32: 4, 1>} : memref<128x128xf32, #tpu.memory_space<vmem>>, vector<32x128xf32>
    %256 = tpu.iota {dimensions = array<i32: 0>} : vector<32x1xi32>
    %c1_i32_195 = arith.constant 1 : i32
    %257 = vector.broadcast %c1_i32_195 : i32 to vector<32x1xi32>
    %258 = arith.andi %256, %257 : vector<32x1xi32>
    %c0_i32_196 = arith.constant 0 : i32
    %259 = vector.broadcast %c0_i32_196 : i32 to vector<32x1xi32>
    %260 = arith.cmpi eq, %258, %259 : vector<32x1xi32>
    %c1_i32_197 = arith.constant 1 : i32
    %261 = vector.broadcast %c1_i32_197 : i32 to vector<32x1xi32>
    %262 = arith.cmpi eq, %258, %261 : vector<32x1xi32>
    %c1_i32_198 = arith.constant 1 : i32
    %263 = tpu.dynamic_rotate %255 by %c1_i32_198 dim 0 : vector<32x128xf32>, i32 -> vector<32x128xf32>
    %cst_199 = arith.constant 0.000000e+00 : f32
    %264 = vector.shape_cast %260 : vector<32x1xi1> to vector<32x1xi1>
    %265 = vector.broadcast %264 : vector<32x1xi1> to vector<32x128xi1>
    %266 = vector.broadcast %cst_199 : f32 to vector<32x128xf32>
    %267 = arith.select %265, %266, %263 : vector<32x128xi1>, vector<32x128xf32>
    %c31_i32_200 = arith.constant 31 : i32
    %268 = tpu.dynamic_rotate %255 by %c31_i32_200 dim 0 : vector<32x128xf32>, i32 -> vector<32x128xf32>
    %cst_201 = arith.constant 0.000000e+00 : f32
    %269 = vector.shape_cast %262 : vector<32x1xi1> to vector<32x1xi1>
    %270 = vector.broadcast %269 : vector<32x1xi1> to vector<32x128xi1>
    %271 = vector.broadcast %cst_201 : f32 to vector<32x128xf32>
    %272 = arith.select %270, %271, %268 : vector<32x128xi1>, vector<32x128xf32>
    %c3 = arith.constant 3 : index
    %c0_202 = arith.constant 0 : index
    %c0_203 = arith.constant 0 : index
    %c0_204 = arith.constant 0 : index
    %273 = vector.load %arg4[%c3, %c0_202, %c0_203, %c0_204] : memref<5x3x128x128xf32, #tpu.memory_space<vmem>>, vector<1x1x128x128xf32>
    %274 = vector.shape_cast %273 : vector<1x1x128x128xf32> to vector<128x128xf32>
    %cst_205 = arith.constant dense<0.000000e+00> : vector<32x128xf32>
    %275 = tpu.matmul %267, %274, %cst_205 {dimension_numbers = #tpu.dot_dimension_numbers<[1], [0], [0], [1], [0, 0, 1, 1], [], []>} : vector<32x128xf32>, vector<128x128xf32>, vector<32x128xf32> -> vector<32x128xf32>
    %c3_206 = arith.constant 3 : index
    %c1_207 = arith.constant 1 : index
    %c0_208 = arith.constant 0 : index
    %c0_209 = arith.constant 0 : index
    %276 = vector.load %arg4[%c3_206, %c1_207, %c0_208, %c0_209] : memref<5x3x128x128xf32, #tpu.memory_space<vmem>>, vector<1x1x128x128xf32>
    %277 = vector.shape_cast %276 : vector<1x1x128x128xf32> to vector<128x128xf32>
    %cst_210 = arith.constant dense<0.000000e+00> : vector<32x128xf32>
    %278 = tpu.matmul %255, %277, %cst_210 {dimension_numbers = #tpu.dot_dimension_numbers<[1], [0], [0], [1], [0, 0, 1, 1], [], []>} : vector<32x128xf32>, vector<128x128xf32>, vector<32x128xf32> -> vector<32x128xf32>
    %279 = arith.addf %275, %278 : vector<32x128xf32>
    %c3_211 = arith.constant 3 : index
    %c2_212 = arith.constant 2 : index
    %c0_213 = arith.constant 0 : index
    %c0_214 = arith.constant 0 : index
    %280 = vector.load %arg4[%c3_211, %c2_212, %c0_213, %c0_214] : memref<5x3x128x128xf32, #tpu.memory_space<vmem>>, vector<1x1x128x128xf32>
    %281 = vector.shape_cast %280 : vector<1x1x128x128xf32> to vector<128x128xf32>
    %cst_215 = arith.constant dense<0.000000e+00> : vector<32x128xf32>
    %282 = tpu.matmul %272, %281, %cst_215 {dimension_numbers = #tpu.dot_dimension_numbers<[1], [0], [0], [1], [0, 0, 1, 1], [], []>} : vector<32x128xf32>, vector<128x128xf32>, vector<32x128xf32> -> vector<32x128xf32>
    %283 = arith.addf %279, %282 : vector<32x128xf32>
    %c3_216 = arith.constant 3 : index
    %c0_217 = arith.constant 0 : index
    %c0_218 = arith.constant 0 : index
    %284 = vector.load %arg5[%c3_216, %c0_217, %c0_218] : memref<5x1x128xf32, #tpu.memory_space<vmem>>, vector<1x1x128xf32>
    %285 = vector.shape_cast %284 : vector<1x1x128xf32> to vector<1x128xf32>
    %286 = vector.broadcast %285 : vector<1x128xf32> to vector<32x128xf32>
    %287 = arith.addf %283, %286 : vector<32x128xf32>
    %c1_i32_219 = arith.constant 1 : i32
    %288 = tpu.dynamic_rotate %287 by %c1_i32_219 dim 0 : vector<32x128xf32>, i32 -> vector<32x128xf32>
    %cst_220 = arith.constant 0.000000e+00 : f32
    %289 = vector.shape_cast %260 : vector<32x1xi1> to vector<32x1xi1>
    %290 = vector.broadcast %289 : vector<32x1xi1> to vector<32x128xi1>
    %291 = vector.broadcast %cst_220 : f32 to vector<32x128xf32>
    %292 = arith.select %290, %291, %288 : vector<32x128xi1>, vector<32x128xf32>
    %c31_i32_221 = arith.constant 31 : i32
    %293 = tpu.dynamic_rotate %287 by %c31_i32_221 dim 0 : vector<32x128xf32>, i32 -> vector<32x128xf32>
    %cst_222 = arith.constant 0.000000e+00 : f32
    %294 = vector.shape_cast %262 : vector<32x1xi1> to vector<32x1xi1>
    %295 = vector.broadcast %294 : vector<32x1xi1> to vector<32x128xi1>
    %296 = vector.broadcast %cst_222 : f32 to vector<32x128xf32>
    %297 = arith.select %295, %296, %293 : vector<32x128xi1>, vector<32x128xf32>
    %c4 = arith.constant 4 : index
    %c0_223 = arith.constant 0 : index
    %c0_224 = arith.constant 0 : index
    %c0_225 = arith.constant 0 : index
    %298 = vector.load %arg4[%c4, %c0_223, %c0_224, %c0_225] : memref<5x3x128x128xf32, #tpu.memory_space<vmem>>, vector<1x1x128x128xf32>
    %299 = vector.shape_cast %298 : vector<1x1x128x128xf32> to vector<128x128xf32>
    %cst_226 = arith.constant dense<0.000000e+00> : vector<32x128xf32>
    %300 = tpu.matmul %292, %299, %cst_226 {dimension_numbers = #tpu.dot_dimension_numbers<[1], [0], [0], [1], [0, 0, 1, 1], [], []>} : vector<32x128xf32>, vector<128x128xf32>, vector<32x128xf32> -> vector<32x128xf32>
    %c4_227 = arith.constant 4 : index
    %c1_228 = arith.constant 1 : index
    %c0_229 = arith.constant 0 : index
    %c0_230 = arith.constant 0 : index
    %301 = vector.load %arg4[%c4_227, %c1_228, %c0_229, %c0_230] : memref<5x3x128x128xf32, #tpu.memory_space<vmem>>, vector<1x1x128x128xf32>
    %302 = vector.shape_cast %301 : vector<1x1x128x128xf32> to vector<128x128xf32>
    %cst_231 = arith.constant dense<0.000000e+00> : vector<32x128xf32>
    %303 = tpu.matmul %287, %302, %cst_231 {dimension_numbers = #tpu.dot_dimension_numbers<[1], [0], [0], [1], [0, 0, 1, 1], [], []>} : vector<32x128xf32>, vector<128x128xf32>, vector<32x128xf32> -> vector<32x128xf32>
    %304 = arith.addf %300, %303 : vector<32x128xf32>
    %c4_232 = arith.constant 4 : index
    %c2_233 = arith.constant 2 : index
    %c0_234 = arith.constant 0 : index
    %c0_235 = arith.constant 0 : index
    %305 = vector.load %arg4[%c4_232, %c2_233, %c0_234, %c0_235] : memref<5x3x128x128xf32, #tpu.memory_space<vmem>>, vector<1x1x128x128xf32>
    %306 = vector.shape_cast %305 : vector<1x1x128x128xf32> to vector<128x128xf32>
    %cst_236 = arith.constant dense<0.000000e+00> : vector<32x128xf32>
    %307 = tpu.matmul %297, %306, %cst_236 {dimension_numbers = #tpu.dot_dimension_numbers<[1], [0], [0], [1], [0, 0, 1, 1], [], []>} : vector<32x128xf32>, vector<128x128xf32>, vector<32x128xf32> -> vector<32x128xf32>
    %308 = arith.addf %304, %307 : vector<32x128xf32>
    %c4_237 = arith.constant 4 : index
    %c0_238 = arith.constant 0 : index
    %c0_239 = arith.constant 0 : index
    %309 = vector.load %arg5[%c4_237, %c0_238, %c0_239] : memref<5x1x128xf32, #tpu.memory_space<vmem>>, vector<1x1x128xf32>
    %310 = vector.shape_cast %309 : vector<1x1x128xf32> to vector<1x128xf32>
    %311 = vector.broadcast %310 : vector<1x128xf32> to vector<32x128xf32>
    %312 = arith.addf %308, %311 : vector<32x128xf32>
    %cst_240 = arith.constant 0.000000e+00 : f32
    %313 = vector.broadcast %cst_240 : f32 to vector<32x128xf32>
    %314 = arith.maximumf %312, %313 : vector<32x128xf32>
    %c31_i32_241 = arith.constant 31 : i32
    %315 = tpu.dynamic_rotate %314 by %c31_i32_241 dim 0 : vector<32x128xf32>, i32 -> vector<32x128xf32>
    %316 = arith.maximumf %314, %315 : vector<32x128xf32>
    %c0_242 = arith.constant 0 : index
    %c0_243 = arith.constant 0 : index
    %317 = vector.load %arg12[%c0_242, %c0_243] : memref<128x128xf32, #tpu.memory_space<vmem>>, vector<32x128xf32>
    tpu.vector_store %arg12[%c0_242, %c0_243], %316 {strides = array<i32>} : memref<128x128xf32, #tpu.memory_space<vmem>>, vector<32x128xf32>,
    %c0_244 = arith.constant 0 : index
    %c0_245 = arith.constant 0 : index
    %318 = tpu.strided_load %arg12[%c0_244, %c0_245] {strides = array<i32: 2, 1>} : memref<128x128xf32, #tpu.memory_space<vmem>>, vector<16x128xf32>
    %c16_i32 = arith.constant 16 : i32
    %319 = arith.muli %arg1, %c16_i32 : i32
    %320 = tpu.assume_multiple %319, 8 : i32
    %321 = arith.index_cast %320 : i32 to index
    %c0_246 = arith.constant 0 : index
    %322 = vector.load %arg13[%321, %c0_246] : memref<16x128xf32, #tpu.memory_space<vmem>>, vector<16x128xf32>
    tpu.vector_store %arg13[%321, %c0_246], %318 {strides = array<i32>} : memref<16x128xf32, #tpu.memory_space<vmem>>, vector<16x128xf32>,
    %c0_i32_247 = arith.constant 0 : i32
    %323 = arith.cmpi eq, %arg1, %c0_i32_247 : i32
    %324 = arith.extui %323 : i1 to i32
    %c0_i32_248 = arith.constant 0 : i32
    %325 = arith.cmpi ne, %324, %c0_i32_248 : i32
    scf.if %325 {
      %c0_249 = arith.constant 0 : index
      %c0_250 = arith.constant 0 : index
      %326 = vector.load %arg13[%c0_249, %c0_250] : memref<16x128xf32, #tpu.memory_space<vmem>>, vector<16x128xf32>
      %cst_251 = arith.constant dense<0.000000e+00> : vector<128xf32>
      %327 = vector.multi_reduction <add>, %326, %cst_251 [0] : vector<16x128xf32> to vector<128xf32>
      %328 = vector.shape_cast %327 : vector<128xf32> to vector<1x128xf32>
      %c0_252 = arith.constant 0 : index
      %c0_253 = arith.constant 0 : index
      %c0_254 = arith.constant 0 : index
      %329 = vector.load %arg6[%c0_252, %c0_253, %c0_254] : memref<2x128x256xf32, #tpu.memory_space<vmem>>, vector<1x128x256xf32>
      %330 = vector.shape_cast %329 : vector<1x128x256xf32> to vector<128x256xf32>
      %cst_255 = arith.constant dense<0.000000e+00> : vector<1x256xf32>
      %331 = tpu.matmul %328, %330, %cst_255 {dimension_numbers = #tpu.dot_dimension_numbers<[1], [0], [0], [1], [0, 0, 1, 1], [], []>} : vector<1x128xf32>, vector<128x256xf32>, vector<1x256xf32> -> vector<1x256xf32>
      %c1_256 = arith.constant 1 : index
      %c0_257 = arith.constant 0 : index
      %c0_258 = arith.constant 0 : index
      %332 = vector.load %arg6[%c1_256, %c0_257, %c0_258] : memref<2x128x256xf32, #tpu.memory_space<vmem>>, vector<1x128x256xf32>
      %333 = vector.shape_cast %332 : vector<1x128x256xf32> to vector<128x256xf32>
      %cst_259 = arith.constant dense<0.000000e+00> : vector<16x256xf32>
      %334 = tpu.matmul %326, %333, %cst_259 {dimension_numbers = #tpu.dot_dimension_numbers<[1], [0], [0], [1], [0, 0, 1, 1], [], []>} : vector<16x128xf32>, vector<128x256xf32>, vector<16x256xf32> -> vector<16x256xf32>
      %335 = vector.broadcast %331 : vector<1x256xf32> to vector<16x256xf32>
      %336 = arith.addf %335, %334 : vector<16x256xf32>
      %c0_260 = arith.constant 0 : index
      %c0_261 = arith.constant 0 : index
      %337 = vector.load %arg7[%c0_260, %c0_261] : memref<1x256xf32, #tpu.memory_space<vmem>>, vector<1x256xf32>
      %338 = vector.broadcast %337 : vector<1x256xf32> to vector<16x256xf32>
      %339 = arith.addf %336, %338 : vector<16x256xf32>
      %cst_262 = arith.constant 0.000000e+00 : f32
      %340 = vector.broadcast %cst_262 : f32 to vector<16x256xf32>
      %341 = arith.maximumf %339, %340 : vector<16x256xf32>
      %c0_263 = arith.constant 0 : index
      %c0_264 = arith.constant 0 : index
      %342 = vector.load %arg8[%c0_263, %c0_264] : memref<256x128xf32, #tpu.memory_space<vmem>>, vector<256x128xf32>
      %cst_265 = arith.constant dense<0.000000e+00> : vector<16x128xf32>
      %343 = tpu.matmul %341, %342, %cst_265 {dimension_numbers = #tpu.dot_dimension_numbers<[1], [0], [0], [1], [0, 0, 1, 1], [], []>} : vector<16x256xf32>, vector<256x128xf32>, vector<16x128xf32> -> vector<16x128xf32>
      %c0_266 = arith.constant 0 : index
      %c0_267 = arith.constant 0 : index
      %344 = vector.load %arg9[%c0_266, %c0_267] : memref<1x128xf32, #tpu.memory_space<vmem>>, vector<1x128xf32>
      %345 = vector.broadcast %344 : vector<1x128xf32> to vector<16x128xf32>
      %346 = arith.addf %343, %345 : vector<16x128xf32>
      %c0_268 = arith.constant 0 : index
      %c0_269 = arith.constant 0 : index
      %c0_270 = arith.constant 0 : index
      %347 = vector.load %arg10[%c0_268, %c0_269, %c0_270] : memref<1x16x128xf32, #tpu.memory_space<vmem>>, vector<1x16x128xf32>
      %348 = vector.shape_cast %347 : vector<1x16x128xf32> to vector<16x128xf32>
      %349 = vector.shape_cast %346 : vector<16x128xf32> to vector<1x16x128xf32>
      tpu.vector_store %arg10[%c0_268, %c0_269, %c0_270], %349 {strides = array<i32>} : memref<1x16x128xf32, #tpu.memory_space<vmem>>, vector<1x16x128xf32>,
    } else {
    }
    return
  }
  func.func @transform_0(%arg0: i32, %arg1: i32) -> (i32, i32, i32) {
    %c0_i32 = arith.constant 0 : i32
    %c0_i32_0 = arith.constant 0 : i32
    return %arg0, %arg1, %c0_i32 : i32, i32, i32
  }
  func.func @transform_1(%arg0: i32, %arg1: i32) -> (i32, i32) {
    %c0_i32 = arith.constant 0 : i32
    %c0_i32_0 = arith.constant 0 : i32
    %c0_i32_1 = arith.constant 0 : i32
    return %c0_i32, %c0_i32_0 : i32, i32
  }
  func.func @transform_2(%arg0: i32, %arg1: i32) -> (i32, i32, i32, i32) {
    %c0_i32 = arith.constant 0 : i32
    %c0_i32_0 = arith.constant 0 : i32
    %c0_i32_1 = arith.constant 0 : i32
    %c0_i32_2 = arith.constant 0 : i32
    %c0_i32_3 = arith.constant 0 : i32
    return %c0_i32, %c0_i32_0, %c0_i32_1, %c0_i32_2 : i32, i32, i32, i32
  }
  func.func @transform_3(%arg0: i32, %arg1: i32) -> (i32, i32, i32) {
    %c0_i32 = arith.constant 0 : i32
    %c0_i32_0 = arith.constant 0 : i32
    %c0_i32_1 = arith.constant 0 : i32
    %c0_i32_2 = arith.constant 0 : i32
    return %c0_i32, %c0_i32_0, %c0_i32_1 : i32, i32, i32
  }
  func.func @transform_4(%arg0: i32, %arg1: i32) -> (i32, i32, i32) {
    %c0_i32 = arith.constant 0 : i32
    %c0_i32_0 = arith.constant 0 : i32
    %c0_i32_1 = arith.constant 0 : i32
    %c0_i32_2 = arith.constant 0 : i32
    return %c0_i32, %c0_i32_0, %c0_i32_1 : i32, i32, i32
  }
  func.func @transform_5(%arg0: i32, %arg1: i32) -> (i32, i32) {
    %c0_i32 = arith.constant 0 : i32
    %c0_i32_0 = arith.constant 0 : i32
    %c0_i32_1 = arith.constant 0 : i32
    return %c0_i32, %c0_i32_0 : i32, i32
  }
  func.func @transform_6(%arg0: i32, %arg1: i32) -> (i32, i32) {
    %c0_i32 = arith.constant 0 : i32
    %c0_i32_0 = arith.constant 0 : i32
    %c0_i32_1 = arith.constant 0 : i32
    return %c0_i32, %c0_i32_0 : i32, i32
  }
  func.func @transform_7(%arg0: i32, %arg1: i32) -> (i32, i32) {
    %c0_i32 = arith.constant 0 : i32
    %c0_i32_0 = arith.constant 0 : i32
    %c0_i32_1 = arith.constant 0 : i32
    return %c0_i32, %c0_i32_0 : i32, i32
  }
  func.func @transform_8(%arg0: i32, %arg1: i32) -> (i32, i32, i32) {
    %c0_i32 = arith.constant 0 : i32
    %c0_i32_0 = arith.constant 0 : i32
    %c0_i32_1 = arith.constant 0 : i32
    return %arg0, %c0_i32, %c0_i32_0 : i32, i32, i32
  }
}

</mosaic_0001>

<llo_original>
// kernel: tpu_custom_call.1
$region0: #{tpu_custom_call.1}
  #allocation0 [shape = 'u32[]', space=smem, size = 0x4, offset = 0x4, fixed_abs, tag = 'smem constant byte address 0x4 - core index']
  #allocation1 [shape = 'u32[72,128]{1,0:T(1,128)}', space=vmem, size = 0x9000, scoped, tag = 'internal scratch']
  #allocation2 [shape = 'f32[128,128]{1,0:T(8,128)}', space=vmem, size = 0x10000, scoped, tag = 'scratch operand']
  #allocation3 [shape = 'f32[128,128]{1,0:T(8,128)}', space=vmem, size = 0x10000, scoped, tag = 'scratch operand']
  #allocation4 [shape = 'f32[16,128]{1,0:T(8,128)}', space=vmem, size = 0x2000, scoped, tag = 'scratch operand']
  %s0 = inlined_call_operand.vmem [shape: f32[2,512,16], index: 0, kind: input, shape index: {}]
  %s1 = inlined_call_operand.vmem [shape: f32[16,128], index: 1, kind: input, shape index: {}]
  %s2 = inlined_call_operand.hbm [shape: f32[5,3,128,128], index: 2, kind: input, shape index: {}]
  %s3 = inlined_call_operand.vmem [shape: f32[5,1,128], index: 3, kind: input, shape index: {}]
  %s4 = inlined_call_operand.vmem [shape: f32[2,128,256], index: 4, kind: input, shape index: {}]
  %s5 = inlined_call_operand.vmem [shape: f32[1,256], index: 5, kind: input, shape index: {}]
  %s6 = inlined_call_operand.vmem [shape: f32[256,128], index: 6, kind: input, shape index: {}]
  %s7 = inlined_call_operand.vmem [shape: f32[1,128], index: 7, kind: input, shape index: {}]
  %s8 = inlined_call_operand.hbm [shape: f32[2,16,128], index: 8, kind: output, shape index: {}]
  %s9 = sld [smem:[#allocation0]]
  $region73: #{tpu_custom_call.1} parent=0
    _
  %s11 = ssub.s32 1, %s9
  %s12 = scalar_select 0, %s11, %s9
  $region1: #{tpu_custom_call.1} parent=0
    #allocation5 [shape = 'u8[983040]{0}', space=vmem, size = 0xf0000, scoped, tag = 'input window, operand 2, single buffered']
    #allocation6 [shape = 's32[2]{0}', space=sflag, size = 0x8, scoped, tag = 'scoped memory for tpu_custom_call.1']
    #allocation7 [shape = 's32[2]{0}', space=sflag, size = 0x8, scoped, tag = 'scoped memory for tpu_custom_call.1']
    #allocation8 [shape = 'u8[16384]{0}', space=vmem, size = 0x4000, scoped, tag = 'output window, operand 0']
    %13 = vsyncpa [#allocation6], 0
    %14 = vsyncpa [#allocation7], 0
    %s15 = scalar_lea.sflag [#allocation7], 1
    %16 = vsyncpa %s15, 0
    loop: start=0, step=1, limit=4
    $region2: #{tpu_custom_call.1} parent=1 // loop_pre_header
      _
    $region3: #{tpu_custom_call.1} parent=1 // loop_header
      %s18 = sphi 0, %s22
      %p19 = scmp.ge.s32.totalorder %s18, 4
      %s25 = sphi 0, %s37
      %s26 = sphi 0, %s33
      %s27 = sphi 0, %s25
      %s28 = sphi 0, %s26
      %s29 = sphi 0, %s27
      %s30 = sphi 0, %s28
      %s42 = sphi 0, %s44
      %s45 = sphi 0, %s42
      %s46 = sphi 0, %s45
      %s62 = sphi 0, %s46
      %s66 = sphi 0, %s66
      %s68 = sphi 0, %s66
      %s69 = sphi 0, %s68
      %s83 = sphi 0, %s69
      %s87 = sphi 0, %s87
      %s89 = sphi 0, %s87
      %s90 = sphi 0, %s89
      %s104 = sphi 0, %s90
      %s108 = sphi 0, %s108
      %s110 = sphi 0, %s108
      %s111 = sphi 0, %s110
      %s125 = sphi 0, %s111
      %s129 = sphi 0, %s129
      %s131 = sphi 0, %s129
      %s132 = sphi 0, %s131
      %s146 = sphi 0, %s132
      %s150 = sphi 0, %s150
      %s152 = sphi 0, %s150
      %s153 = sphi 0, %s152
      %s167 = sphi 0, %s153
      %s171 = sphi 0, %s171
      %s173 = sphi 0, %s171
      %s174 = sphi 0, %s173
      %s188 = sphi 0, %s174
      %s192 = sphi 0, %s192
      %s194 = sphi 0, %s192
      %s195 = sphi 0, %s194
      %s209 = sphi 0, %s195
      %s215 = sphi 0, %s217
      %s218 = sphi 0, %s215
      %s219 = sphi 0, %s218
      %s235 = sphi 0, %s219
    $region4: #{tpu_custom_call.1} parent=1 // loop_header_branch
      %21 = sbr.rel (%p19) target = $region8
    $region5: #{tpu_custom_call.1} parent=1 // loop_body
      %s23 = ssub.s32 %s18, 1
      %s24 = ssub.s32 %s18, 2
      %s31 = sadd.s32 1, %s26
      %p32 = scmp.ge.s32.totalorder %s31, 1
      %s33 = scalar_select %p32, 0, %s31
      %s34 = sadd.s32 1, %s25
      %s35 = scalar_select %p32, %s34, %s25
      %p36 = scmp.ge.s32.totalorder %s35, 2
      %s37 = scalar_select %p36, 0, %s35
      %s38 = ssub.s32 %s25, %s37
      %s39 = ssub.s32 %s26, %s33
      %s40 = sor.u32 %s38, %s39
      %p41 = scmp.eq.s32.totalorder %s40, 0
      %s43 = sadd.s32 %s42, 1
      %s44 = scalar_select %p41, %s42, %s43
      %p47 = pneg %p41
      %p48 = scmp.eq.s32.totalorder %s18, 1
      %p49 = por %p47, %p48
      %p50 = scmp.ne.s32.totalorder %s42, %s45
      %p51 = scmp.eq.s32.totalorder %s18, 0
      %p52 = por %p50, %p51
      %p53 = scmp.ne.s32.totalorder %s42, %s45
      %p54 = scmp.eq.s32.totalorder %s23, 1
      %p55 = por %p53, %p54
      %p56 = scmp.ne.s32.totalorder %s45, %s46
      %p57 = scmp.eq.s32.totalorder %s23, 0
      %p58 = por %p56, %p57
      %p59 = scmp.ne.s32.totalorder %s45, %s46
      %p60 = scmp.eq.s32.totalorder %s24, 1
      %p61 = por %p59, %p60
      %p63 = scmp.ne.s32.totalorder %s46, %s62
      %p64 = scmp.eq.s32.totalorder %s24, 0
      %p65 = por %p63, %p64
      %s67 = sadd.s32 %s66, 1
      %p70 = scmp.eq.s32.totalorder %s18, 1
      %p71 = scmp.ne.s32.totalorder %s66, %s68
      %p72 = scmp.eq.s32.totalorder %s18, 0
      %p73 = por %p71, %p72
      %p74 = scmp.ne.s32.totalorder %s66, %s68
      %p75 = scmp.eq.s32.totalorder %s23, 1
      %p76 = por %p74, %p75
      %p77 = scmp.ne.s32.totalorder %s68, %s69
      %p78 = scmp.eq.s32.totalorder %s23, 0
      %p79 = por %p77, %p78
      %p80 = scmp.ne.s32.totalorder %s68, %s69
      %p81 = scmp.eq.s32.totalorder %s24, 1
      %p82 = por %p80, %p81
      %p84 = scmp.ne.s32.totalorder %s69, %s83
      %p85 = scmp.eq.s32.totalorder %s24, 0
      %p86 = por %p84, %p85
      %s88 = sadd.s32 %s87, 1
      %p91 = scmp.eq.s32.totalorder %s18, 1
      %p92 = scmp.ne.s32.totalorder %s87, %s89
      %p93 = scmp.eq.s32.totalorder %s18, 0
      %p94 = por %p92, %p93
      %p95 = scmp.ne.s32.totalorder %s87, %s89
      %p96 = scmp.eq.s32.totalorder %s23, 1
      %p97 = por %p95, %p96
      %p98 = scmp.ne.s32.totalorder %s89, %s90
      %p99 = scmp.eq.s32.totalorder %s23, 0
      %p100 = por %p98, %p99
      %p101 = scmp.ne.s32.totalorder %s89, %s90
      %p102 = scmp.eq.s32.totalorder %s24, 1
      %p103 = por %p101, %p102
      %p105 = scmp.ne.s32.totalorder %s90, %s104
      %p106 = scmp.eq.s32.totalorder %s24, 0
      %p107 = por %p105, %p106
      %s109 = sadd.s32 %s108, 1
      %p112 = scmp.eq.s32.totalorder %s18, 1
      %p113 = scmp.ne.s32.totalorder %s108, %s110
      %p114 = scmp.eq.s32.totalorder %s18, 0
      %p115 = por %p113, %p114
      %p116 = scmp.ne.s32.totalorder %s108, %s110
      %p117 = scmp.eq.s32.totalorder %s23, 1
      %p118 = por %p116, %p117
      %p119 = scmp.ne.s32.totalorder %s110, %s111
      %p120 = scmp.eq.s32.totalorder %s23, 0
      %p121 = por %p119, %p120
      %p122 = scmp.ne.s32.totalorder %s110, %s111
      %p123 = scmp.eq.s32.totalorder %s24, 1
      %p124 = por %p122, %p123
      %p126 = scmp.ne.s32.totalorder %s111, %s125
      %p127 = scmp.eq.s32.totalorder %s24, 0
      %p128 = por %p126, %p127
      %s130 = sadd.s32 %s129, 1
      %p133 = scmp.eq.s32.totalorder %s18, 1
      %p134 = scmp.ne.s32.totalorder %s129, %s131
      %p135 = scmp.eq.s32.totalorder %s18, 0
      %p136 = por %p134, %p135
      %p137 = scmp.ne.s32.totalorder %s129, %s131
      %p138 = scmp.eq.s32.totalorder %s23, 1
      %p139 = por %p137, %p138
      %p140 = scmp.ne.s32.totalorder %s131, %s132
      %p141 = scmp.eq.s32.totalorder %s23, 0
      %p142 = por %p140, %p141
      %p143 = scmp.ne.s32.totalorder %s131, %s132
      %p144 = scmp.eq.s32.totalorder %s24, 1
      %p145 = por %p143, %p144
      %p147 = scmp.ne.s32.totalorder %s132, %s146
      %p148 = scmp.eq.s32.totalorder %s24, 0
      %p149 = por %p147, %p148
      %s151 = sadd.s32 %s150, 1
      %p154 = scmp.eq.s32.totalorder %s18, 1
      %p155 = scmp.ne.s32.totalorder %s150, %s152
      %p156 = scmp.eq.s32.totalorder %s18, 0
      %p157 = por %p155, %p156
      %p158 = scmp.ne.s32.totalorder %s150, %s152
      %p159 = scmp.eq.s32.totalorder %s23, 1
      %p160 = por %p158, %p159
      %p161 = scmp.ne.s32.totalorder %s152, %s153
      %p162 = scmp.eq.s32.totalorder %s23, 0
      %p163 = por %p161, %p162
      %p164 = scmp.ne.s32.totalorder %s152, %s153
      %p165 = scmp.eq.s32.totalorder %s24, 1
      %p166 = por %p164, %p165
      %p168 = scmp.ne.s32.totalorder %s153, %s167
      %p169 = scmp.eq.s32.totalorder %s24, 0
      %p170 = por %p168, %p169
      %s172 = sadd.s32 %s171, 1
      %p175 = scmp.eq.s32.totalorder %s18, 1
      %p176 = scmp.ne.s32.totalorder %s171, %s173
      %p177 = scmp.eq.s32.totalorder %s18, 0
      %p178 = por %p176, %p177
      %p179 = scmp.ne.s32.totalorder %s171, %s173
      %p180 = scmp.eq.s32.totalorder %s23, 1
      %p181 = por %p179, %p180
      %p182 = scmp.ne.s32.totalorder %s173, %s174
      %p183 = scmp.eq.s32.totalorder %s23, 0
      %p184 = por %p182, %p183
      %p185 = scmp.ne.s32.totalorder %s173, %s174
      %p186 = scmp.eq.s32.totalorder %s24, 1
      %p187 = por %p185, %p186
      %p189 = scmp.ne.s32.totalorder %s174, %s188
      %p190 = scmp.eq.s32.totalorder %s24, 0
      %p191 = por %p189, %p190
      %s193 = sadd.s32 %s192, 1
      %p196 = scmp.eq.s32.totalorder %s18, 1
      %p197 = scmp.ne.s32.totalorder %s192, %s194
      %p198 = scmp.eq.s32.totalorder %s18, 0
      %p199 = por %p197, %p198
      %p200 = scmp.ne.s32.totalorder %s192, %s194
      %p201 = scmp.eq.s32.totalorder %s23, 1
      %p202 = por %p200, %p201
      %p203 = scmp.ne.s32.totalorder %s194, %s195
      %p204 = scmp.eq.s32.totalorder %s23, 0
      %p205 = por %p203, %p204
      %p206 = scmp.ne.s32.totalorder %s194, %s195
      %p207 = scmp.eq.s32.totalorder %s24, 1
      %p208 = por %p206, %p207
      %p210 = scmp.ne.s32.totalorder %s195, %s209
      %p211 = scmp.eq.s32.totalorder %s24, 0
      %p212 = por %p210, %p211
      %s213 = ssub.s32 %s25, %s37
      %p214 = scmp.eq.s32.totalorder %s213, 0
      %s216 = sadd.s32 %s215, 1
      %s217 = scalar_select %p214, %s215, %s216
      %p220 = pneg %p214
      %p221 = scmp.eq.s32.totalorder %s18, 1
      %p222 = por %p220, %p221
      %p223 = scmp.ne.s32.totalorder %s215, %s218
      %p224 = scmp.eq.s32.totalorder %s18, 0
      %p225 = por %p223, %p224
      %p226 = scmp.ne.s32.totalorder %s215, %s218
      %p227 = scmp.eq.s32.totalorder %s23, 1
      %p228 = por %p226, %p227
      %p229 = scmp.ne.s32.totalorder %s218, %s219
      %p230 = scmp.eq.s32.totalorder %s23, 0
      %p231 = por %p229, %p230
      %p232 = scmp.ne.s32.totalorder %s218, %s219
      %p233 = scmp.eq.s32.totalorder %s24, 1
      %p234 = por %p232, %p233
      %p236 = scmp.ne.s32.totalorder %s219, %s235
      %p237 = scmp.eq.s32.totalorder %s24, 0
      %p238 = por %p236, %p237
      %p239 = scmp.le.s32.totalorder 1, %s18
      %p240 = scmp.lt.s32.totalorder %s18, 3
      %p241 = pnand %p239, %p240
      %p242 = pneg %p241
      // Predicated region
      $region9: #{tpu_custom_call.1} parent=5 // pred_check
        _
      $region10: #{tpu_custom_call.1} parent=5 // pred_check_branch
        %244 = sbr.rel (%p241) target = $region12
      $region11: #{tpu_custom_call.1} parent=5 // pred_region
        %s245 = ssub.s32 %s18, 1
        // Predicated region
        $region13: #{tpu_custom_call.1} parent=11 // pred_check
          %p246 = pneg %p79
        $region14: #{tpu_custom_call.1} parent=11 // pred_check_branch
          %248 = sbr.rel (%p246) target = $region16
        $region15: #{tpu_custom_call.1} parent=11 // pred_region
          _
        $region16: #{tpu_custom_call.1} parent=11 // pred_fallthru
          _
        // Predicated region
        $region17: #{tpu_custom_call.1} parent=11 // pred_check
          %p249 = pneg %p100
        $region18: #{tpu_custom_call.1} parent=11 // pred_check_branch
          %251 = sbr.rel (%p249) target = $region20
        $region19: #{tpu_custom_call.1} parent=11 // pred_region
          %253 = vsyncadd [#allocation6], 0
          %s254 = sshll.u32 %s2, 4
          %s255 = int_to_ptr.hbm [resolvable:$true] %s254
          %s256 = sshll.u32 [#allocation5], 4
          %s257 = int_to_ptr.vmem [resolvable:$true] %s256
          %262 = dma.hbm_to_vmem [thread:$0]  %s255, 30720, %s257, [#allocation6], 128, 128, 8
        $region20: #{tpu_custom_call.1} parent=11 // pred_fallthru
          _
        // Predicated region
        $region21: #{tpu_custom_call.1} parent=11 // pred_check
          %p263 = pneg %p121
        $region22: #{tpu_custom_call.1} parent=11 // pred_check_branch
          %265 = sbr.rel (%p263) target = $region24
        $region23: #{tpu_custom_call.1} parent=11 // pred_region
          _
        $region24: #{tpu_custom_call.1} parent=11 // pred_fallthru
          _
        // Predicated region
        $region25: #{tpu_custom_call.1} parent=11 // pred_check
          %p266 = pneg %p142
        $region26: #{tpu_custom_call.1} parent=11 // pred_check_branch
          %268 = sbr.rel (%p266) target = $region28
        $region27: #{tpu_custom_call.1} parent=11 // pred_region
          _
        $region28: #{tpu_custom_call.1} parent=11 // pred_fallthru
          _
        // Predicated region
        $region29: #{tpu_custom_call.1} parent=11 // pred_check
          %p269 = pneg %p163
        $region30: #{tpu_custom_call.1} parent=11 // pred_check_branch
          %271 = sbr.rel (%p269) target = $region32
        $region31: #{tpu_custom_call.1} parent=11 // pred_region
          _
        $region32: #{tpu_custom_call.1} parent=11 // pred_fallthru
          _
        // Predicated region
        $region33: #{tpu_custom_call.1} parent=11 // pred_check
          %p272 = pneg %p184
        $region34: #{tpu_custom_call.1} parent=11 // pred_check_branch
          %274 = sbr.rel (%p272) target = $region36
        $region35: #{tpu_custom_call.1} parent=11 // pred_region
          _
        $region36: #{tpu_custom_call.1} parent=11 // pred_fallthru
          _
        // Predicated region
        $region37: #{tpu_custom_call.1} parent=11 // pred_check
          %p275 = pneg %p205
        $region38: #{tpu_custom_call.1} parent=11 // pred_check_branch
          %277 = sbr.rel (%p275) target = $region40
        $region39: #{tpu_custom_call.1} parent=11 // pred_region
          _
        $region40: #{tpu_custom_call.1} parent=11 // pred_fallthru
          _
      $region12: #{tpu_custom_call.1} parent=5 // pred_fallthru
        _
      %p278 = scmp.lt.s32.totalorder %s18, 2
      // Predicated region
      $region41: #{tpu_custom_call.1} parent=5 // pred_check
        %p279 = pneg %p278
      $region42: #{tpu_custom_call.1} parent=5 // pred_check_branch
        %281 = sbr.rel (%p279) target = $region44
      $region43: #{tpu_custom_call.1} parent=5 // pred_region
        // Predicated region
        $region45: #{tpu_custom_call.1} parent=43 // pred_check
          %p282 = pneg %p52
        $region46: #{tpu_custom_call.1} parent=43 // pred_check_branch
          %284 = sbr.rel (%p282) target = $region48
        $region47: #{tpu_custom_call.1} parent=43 // pred_region
          %s285 = smul.u32 64, %s26
          %p286 = scmp.lt.s32.totalorder %s25, 1
          %s287 = scalar_select %p286, %s25, 1
          %p288 = scmp.lt.s32.totalorder %s285, 63
          %s289 = scalar_select %p288, %s285, 63
          %s290 = smul.addr %s287, 64
          %s291 = sadd.s32 %s289, %s290
          %s292 = smul.addr %s291, 8
          %s293 = scalar_lea.vmem %s0, %s292
          %s294 = smul.u32 64, %s26
        $region48: #{tpu_custom_call.1} parent=43 // pred_fallthru
          _
      $region44: #{tpu_custom_call.1} parent=5 // pred_fallthru
        _
      %p295 = scmp.le.s32.totalorder 1, %s18
      %p296 = scmp.lt.s32.totalorder %s18, 3
      %p297 = pnand %p295, %p296
      %p298 = pneg %p297
      // Predicated region
      $region49: #{tpu_custom_call.1} parent=5 // pred_check
        _
      $region50: #{tpu_custom_call.1} parent=5 // pred_check_branch
        %300 = sbr.rel (%p297) target = $region52
      $region51: #{tpu_custom_call.1} parent=5 // pred_region
        %s301 = ssub.s32 %s18, 1
        // Predicated region
        $region53: #{tpu_custom_call.1} parent=51 // pred_check
          %p302 = pneg %p100
        $region54: #{tpu_custom_call.1} parent=51 // pred_check_branch
          %304 = sbr.rel (%p302) target = $region56
        $region55: #{tpu_custom_call.1} parent=51 // pred_region
          %306 = dma.done [#allocation6], 30720
        $region56: #{tpu_custom_call.1} parent=51 // pred_fallthru
          _
        %s307 = smul.u32 64, %s28
        %p308 = scmp.lt.s32.totalorder %s27, 1
        %s309 = scalar_select %p308, %s27, 1
        %p310 = scmp.lt.s32.totalorder %s307, 63
        %s311 = scalar_select %p310, %s307, 63
        %s312 = smul.addr %s309, 64
        %s313 = sadd.s32 %s311, %s312
        %s314 = smul.addr %s313, 8
        %s315 = scalar_lea.vmem %s0, %s314
        %p316 = pneg %p58
        %p317 = pneg %p55
        %p318 = pneg %p79
        %p319 = pneg %p76
        %p320 = pneg %p100
        %p321 = pneg %p97
        %p322 = pneg %p121
        %p323 = pneg %p118
        %p324 = pneg %p142
        %p325 = pneg %p139
        %p326 = pneg %p163
        %p327 = pneg %p160
        %p328 = pneg %p184
        %p329 = pneg %p181
        %p330 = pneg %p205
        %p331 = pneg %p202
        %p332 = pneg %p231
        %p333 = pneg %p228
        %s334 = sand.u32 %s218, 1
        %s335 = scalar_lea.sflag [#allocation7], %s334
        %s336 = sand.u32 %s218, 1
        %s337 = smul.addr %s336, 16
        %s338 = scalar_lea.vmem [#allocation8], %s337
        %s339 = smul.u32 64, %s28
        %p340 = scmp.lt.s32.totalorder %s27, 1
        %s341 = scalar_select %p340, %s27, 1
        %p342 = scmp.lt.s32.totalorder %s339, 63
        %s343 = scalar_select %p342, %s339, 63
        %s344 = smul.addr %s341, 64
        %s345 = sadd.s32 %s343, %s344
        %s346 = smul.addr %s345, 8
        %s347 = scalar_lea.vmem %s0, %s346
        %s348 = smul.u32 64, %s28
        %v349 = vlaneseq
        %v350 = vshrl.u32 %v349, 7
        %v351 = vadd.s32 %v350, 8
        %v352 = vadd.s32 %v350, 16
        %v353 = vadd.s32 %v350, 24
        %v354 = vadd.s32 %v350, 32
        %v355 = vadd.s32 %v350, 40
        %v356 = vadd.s32 %v350, 48
        %v357 = vadd.s32 %v350, 56
        %v358 = vadd.s32 %v350, 64
        %v359 = vadd.s32 %v350, 72
        %v360 = vadd.s32 %v350, 80
        %v361 = vadd.s32 %v350, 88
        %v362 = vadd.s32 %v350, 96
        %v363 = vadd.s32 %v350, 104
        %v364 = vadd.s32 %v350, 112
        %v365 = vadd.s32 %v350, 120
        %v366 = vand.u32 %v350, 31
        %v367 = vand.u32 %v351, 31
        %v368 = vand.u32 %v352, 31
        %v369 = vand.u32 %v353, 31
        %v370 = vand.u32 %v354, 31
        %v371 = vand.u32 %v355, 31
        %v372 = vand.u32 %v356, 31
        %v373 = vand.u32 %v357, 31
        %v374 = vand.u32 %v358, 31
        %v375 = vand.u32 %v359, 31
        %v376 = vand.u32 %v360, 31
        %v377 = vand.u32 %v361, 31
        %v378 = vand.u32 %v362, 31
        %v379 = vand.u32 %v363, 31
        %v380 = vand.u32 %v364, 31
        %v381 = vand.u32 %v365, 31
        %vm382 = vcmp.eq.s32.totalorder %v366, 0
        %vm383 = vcmp.eq.s32.totalorder %v367, 0
        %vm384 = vcmp.eq.s32.totalorder %v368, 0
        %vm385 = vcmp.eq.s32.totalorder %v369, 0
        %vm386 = vcmp.eq.s32.totalorder %v370, 0
        %vm387 = vcmp.eq.s32.totalorder %v371, 0
        %vm388 = vcmp.eq.s32.totalorder %v372, 0
        %vm389 = vcmp.eq.s32.totalorder %v373, 0
        %vm390 = vcmp.eq.s32.totalorder %v374, 0
        %vm391 = vcmp.eq.s32.totalorder %v375, 0
        %vm392 = vcmp.eq.s32.totalorder %v376, 0
        %vm393 = vcmp.eq.s32.totalorder %v377, 0
        %vm394 = vcmp.eq.s32.totalorder %v378, 0
        %vm395 = vcmp.eq.s32.totalorder %v379, 0
        %vm396 = vcmp.eq.s32.totalorder %v380, 0
        %vm397 = vcmp.eq.s32.totalorder %v381, 0
        %vm398 = vcmp.eq.s32.totalorder %v366, 31
        %vm399 = vcmp.eq.s32.totalorder %v367, 31
        %vm400 = vcmp.eq.s32.totalorder %v368, 31
        %vm401 = vcmp.eq.s32.totalorder %v369, 31
        %vm402 = vcmp.eq.s32.totalorder %v370, 31
        %vm403 = vcmp.eq.s32.totalorder %v371, 31
        %vm404 = vcmp.eq.s32.totalorder %v372, 31
        %vm405 = vcmp.eq.s32.totalorder %v373, 31
        %vm406 = vcmp.eq.s32.totalorder %v374, 31
        %vm407 = vcmp.eq.s32.totalorder %v375, 31
        %vm408 = vcmp.eq.s32.totalorder %v376, 31
        %vm409 = vcmp.eq.s32.totalorder %v377, 31
        %vm410 = vcmp.eq.s32.totalorder %v378, 31
        %vm411 = vcmp.eq.s32.totalorder %v379, 31
        %vm412 = vcmp.eq.s32.totalorder %v380, 31
        %vm413 = vcmp.eq.s32.totalorder %v381, 31
        %v414 = vld [vmem:[%s1] sm:$0xff]
        %v415 = vld [vmem:[%s1 + $0x8] sm:$0xff]
        %v416 = vld [vmem:[%s347] sm:$0xff]
        %v417 = vld [vmem:[%s347 + $0x8] sm:$0xff]
        %v418 = vld [vmem:[%s347 + $0x10] sm:$0xff]
        %v419 = vld [vmem:[%s347 + $0x18] sm:$0xff]
        %v420 = vld [vmem:[%s347 + $0x20] sm:$0xff]
        %v421 = vld [vmem:[%s347 + $0x28] sm:$0xff]
        %v422 = vld [vmem:[%s347 + $0x30] sm:$0xff]
        %v423 = vld [vmem:[%s347 + $0x38] sm:$0xff]
        %v424 = vld [vmem:[%s347 + $0x40] sm:$0xff]
        %v425 = vld [vmem:[%s347 + $0x48] sm:$0xff]
        %v426 = vld [vmem:[%s347 + $0x50] sm:$0xff]
        %v427 = vld [vmem:[%s347 + $0x58] sm:$0xff]
        %v428 = vld [vmem:[%s347 + $0x60] sm:$0xff]
        %v429 = vld [vmem:[%s347 + $0x68] sm:$0xff]
        %v430 = vld [vmem:[%s347 + $0x70] sm:$0xff]
        %v431 = vld [vmem:[%s347 + $0x78] sm:$0xff]
        %vm432 = vcmask 130048
        %v434 = vsel %vm432, %v416, 0
        %v437 = vsel %vm432, %v417, 0
        %v440 = vsel %vm432, %v418, 0
        %v443 = vsel %vm432, %v419, 0
        %v446 = vsel %vm432, %v420, 0
        %v449 = vsel %vm432, %v421, 0
        %v452 = vsel %vm432, %v422, 0
        %v455 = vsel %vm432, %v423, 0
        %v458 = vsel %vm432, %v424, 0
        %v461 = vsel %vm432, %v425, 0
        %v464 = vsel %vm432, %v426, 0
        %v467 = vsel %vm432, %v427, 0
        %v470 = vsel %vm432, %v428, 0
        %v473 = vsel %vm432, %v429, 0
        %v476 = vsel %vm432, %v430, 0
        %v479 = vsel %vm432, %v431, 0
        %481 = vmatpush.msra.mxu0 0.0
        %482 = vmatpush.msra.mxu0 0.0
        %483 = vmatpush.msra.mxu0 0.0
        %484 = vmatpush.msra.mxu0 0.0
        %485 = vmatpush.msra.mxu0 0.0
        %486 = vmatpush.msra.mxu0 0.0
        %487 = vmatpush.msra.mxu0 0.0
        %488 = vmatpush.msra.mxu0 0.0
        %489 = vmatpush.msra.mxu0 0.0
        %490 = vmatpush.msra.mxu0 0.0
        %491 = vmatpush.msra.mxu0 0.0
        %492 = vmatpush.msra.mxu0 0.0
        %493 = vmatpush.msra.mxu0 0.0
        %494 = vmatpush.msra.mxu0 0.0
        %495 = vmatpush.msra.mxu0 %v415
        %496 = vmatpush.msra.mxu0 %v414
        %497 = vmatmul.f32.gmra.mxu0 %v434
        %v498 = vpop.f32.mrf.mxu0
        %v499 = vadd.f32 0.0, %v498
        %500 = vmatmul.f32.gmra.mxu0 %v437
        %v501 = vpop.f32.mrf.mxu0
        %v502 = vadd.f32 0.0, %v501
        %503 = vmatmul.f32.gmra.mxu0 %v440
        %v504 = vpop.f32.mrf.mxu0
        %v505 = vadd.f32 0.0, %v504
        %506 = vmatmul.f32.gmra.mxu0 %v443
        %v507 = vpop.f32.mrf.mxu0
        %v508 = vadd.f32 0.0, %v507
        %509 = vmatmul.f32.gmra.mxu0 %v446
        %v510 = vpop.f32.mrf.mxu0
        %v511 = vadd.f32 0.0, %v510
        %512 = vmatmul.f32.gmra.mxu0 %v449
        %v513 = vpop.f32.mrf.mxu0
        %v514 = vadd.f32 0.0, %v513
        %515 = vmatmul.f32.gmra.mxu0 %v452
        %v516 = vpop.f32.mrf.mxu0
        %v517 = vadd.f32 0.0, %v516
        %518 = vmatmul.f32.gmra.mxu0 %v455
        %v519 = vpop.f32.mrf.mxu0
        %v520 = vadd.f32 0.0, %v519
        %521 = vmatmul.f32.gmra.mxu0 %v458
        %v522 = vpop.f32.mrf.mxu0
        %v523 = vadd.f32 0.0, %v522
        %524 = vmatmul.f32.gmra.mxu0 %v461
        %v525 = vpop.f32.mrf.mxu0
        %v526 = vadd.f32 0.0, %v525
        %527 = vmatmul.f32.gmra.mxu0 %v464
        %v528 = vpop.f32.mrf.mxu0
        %v529 = vadd.f32 0.0, %v528
        %530 = vmatmul.f32.gmra.mxu0 %v467
        %v531 = vpop.f32.mrf.mxu0
        %v532 = vadd.f32 0.0, %v531
        %533 = vmatmul.f32.gmra.mxu0 %v470
        %v534 = vpop.f32.mrf.mxu0
        %v535 = vadd.f32 0.0, %v534
        %536 = vmatmul.f32.gmra.mxu0 %v473
        %v537 = vpop.f32.mrf.mxu0
        %v538 = vadd.f32 0.0, %v537
        %539 = vmatmul.f32.gmra.mxu0 %v476
        %v540 = vpop.f32.mrf.mxu0
        %v541 = vadd.f32 0.0, %v540
        %542 = vmatmul.f32.gmra.mxu0 %v479
        %v543 = vpop.f32.mrf.mxu0
        %v544 = vadd.f32 0.0, %v543
        %545 = vdwg.mxu0
        %v546 = vrot.slane %v499, 7
        %v547 = vrot.slane %v502, 7
        %v548 = vrot.slane %v505, 7
        %v549 = vrot.slane %v508, 7
        %v550 = vrot.slane %v511, 7
        %v551 = vrot.slane %v514, 7
        %v552 = vrot.slane %v517, 7
        %v553 = vrot.slane %v520, 7
        %v554 = vrot.slane %v523, 7
        %v555 = vrot.slane %v526, 7
        %v556 = vrot.slane %v529, 7
        %v557 = vrot.slane %v532, 7
        %v558 = vrot.slane %v535, 7
        %v559 = vrot.slane %v538, 7
        %v560 = vrot.slane %v541, 7
        %v561 = vrot.slane %v544, 7
        %vm562 = vcmp.lt.s32.totalorder %v350, 1
        %v563 = vsel %vm562, %v560, %v561
        %v564 = vsel %vm562, %v559, %v560
        %v565 = vsel %vm562, %v558, %v559
        %v566 = vsel %vm562, %v557, %v558
        %v567 = vsel %vm562, %v556, %v557
        %v568 = vsel %vm562, %v555, %v556
        %v569 = vsel %vm562, %v554, %v555
        %v570 = vsel %vm562, %v553, %v554
        %v571 = vsel %vm562, %v552, %v553
        %v572 = vsel %vm562, %v551, %v552
        %v573 = vsel %vm562, %v550, %v551
        %v574 = vsel %vm562, %v549, %v550
        %v575 = vsel %vm562, %v548, %v549
        %v576 = vsel %vm562, %v547, %v548
        %v577 = vsel %vm562, %v546, %v547
        %v578 = vsel %vm562, %v561, %v546
        %v579 = vsel %vm382, 1, 0
        %v580 = vsel %vm383, 1, 0
        %v581 = vsel %vm384, 1, 0
        %v582 = vsel %vm385, 1, 0
        %v583 = vsel %vm386, 1, 0
        %v584 = vsel %vm387, 1, 0
        %v585 = vsel %vm388, 1, 0
        %v586 = vsel %vm389, 1, 0
        %v587 = vsel %vm390, 1, 0
        %v588 = vsel %vm391, 1, 0
        %v589 = vsel %vm392, 1, 0
        %v590 = vsel %vm393, 1, 0
        %v591 = vsel %vm394, 1, 0
        %v592 = vsel %vm395, 1, 0
        %v593 = vsel %vm396, 1, 0
        %v594 = vsel %vm397, 1, 0
        %vm595 = vcmp.eq.s32.totalorder %v579, 1
        %vm596 = vcmp.eq.s32.totalorder %v580, 1
        %vm597 = vcmp.eq.s32.totalorder %v581, 1
        %vm598 = vcmp.eq.s32.totalorder %v582, 1
        %vm599 = vcmp.eq.s32.totalorder %v583, 1
        %vm600 = vcmp.eq.s32.totalorder %v584, 1
        %vm601 = vcmp.eq.s32.totalorder %v585, 1
        %vm602 = vcmp.eq.s32.totalorder %v586, 1
        %vm603 = vcmp.eq.s32.totalorder %v587, 1
        %vm604 = vcmp.eq.s32.totalorder %v588, 1
        %vm605 = vcmp.eq.s32.totalorder %v589, 1
        %vm606 = vcmp.eq.s32.totalorder %v590, 1
        %vm607 = vcmp.eq.s32.totalorder %v591, 1
        %vm608 = vcmp.eq.s32.totalorder %v592, 1
        %vm609 = vcmp.eq.s32.totalorder %v593, 1
        %vm610 = vcmp.eq.s32.totalorder %v594, 1
        %v611 = vsel %vm595, 0.0, %v578
        %v612 = vsel %vm596, 0.0, %v577
        %v613 = vsel %vm597, 0.0, %v576
        %v614 = vsel %vm598, 0.0, %v575
        %v615 = vsel %vm599, 0.0, %v574
        %v616 = vsel %vm600, 0.0, %v573
        %v617 = vsel %vm601, 0.0, %v572
        %v618 = vsel %vm602, 0.0, %v571
        %v619 = vsel %vm603, 0.0, %v570
        %v620 = vsel %vm604, 0.0, %v569
        %v621 = vsel %vm605, 0.0, %v568
        %v622 = vsel %vm606, 0.0, %v567
        %v623 = vsel %vm607, 0.0, %v566
        %v624 = vsel %vm608, 0.0, %v565
        %v625 = vsel %vm609, 0.0, %v564
        %v626 = vsel %vm610, 0.0, %v563
        %v627 = vrot.slane %v499, 1
        %v628 = vrot.slane %v502, 1
        %v629 = vrot.slane %v505, 1
        %v630 = vrot.slane %v508, 1
        %v631 = vrot.slane %v511, 1
        %v632 = vrot.slane %v514, 1
        %v633 = vrot.slane %v517, 1
        %v634 = vrot.slane %v520, 1
        %v635 = vrot.slane %v523, 1
        %v636 = vrot.slane %v526, 1
        %v637 = vrot.slane %v529, 1
        %v638 = vrot.slane %v532, 1
        %v639 = vrot.slane %v535, 1
        %v640 = vrot.slane %v538, 1
        %v641 = vrot.slane %v541, 1
        %v642 = vrot.slane %v544, 1
        %vm643 = vcmp.lt.s32.totalorder %v350, 7
        %v644 = vsel %vm643, %v641, %v642
        %v645 = vsel %vm643, %v640, %v641
        %v646 = vsel %vm643, %v639, %v640
        %v647 = vsel %vm643, %v638, %v639
        %v648 = vsel %vm643, %v637, %v638
        %v649 = vsel %vm643, %v636, %v637
        %v650 = vsel %vm643, %v635, %v636
        %v651 = vsel %vm643, %v634, %v635
        %v652 = vsel %vm643, %v633, %v634
        %v653 = vsel %vm643, %v632, %v633
        %v654 = vsel %vm643, %v631, %v632
        %v655 = vsel %vm643, %v630, %v631
        %v656 = vsel %vm643, %v629, %v630
        %v657 = vsel %vm643, %v628, %v629
        %v658 = vsel %vm643, %v627, %v628
        %v659 = vsel %vm643, %v642, %v627
        %v660 = vsel %vm398, 1, 0
        %v661 = vsel %vm399, 1, 0
        %v662 = vsel %vm400, 1, 0
        %v663 = vsel %vm401, 1, 0
        %v664 = vsel %vm402, 1, 0
        %v665 = vsel %vm403, 1, 0
        %v666 = vsel %vm404, 1, 0
        %v667 = vsel %vm405, 1, 0
        %v668 = vsel %vm406, 1, 0
        %v669 = vsel %vm407, 1, 0
        %v670 = vsel %vm408, 1, 0
        %v671 = vsel %vm409, 1, 0
        %v672 = vsel %vm410, 1, 0
        %v673 = vsel %vm411, 1, 0
        %v674 = vsel %vm412, 1, 0
        %v675 = vsel %vm413, 1, 0
        %vm676 = vcmp.eq.s32.totalorder %v660, 1
        %vm677 = vcmp.eq.s32.totalorder %v661, 1
        %vm678 = vcmp.eq.s32.totalorder %v662, 1
        %vm679 = vcmp.eq.s32.totalorder %v663, 1
        %vm680 = vcmp.eq.s32.totalorder %v664, 1
        %vm681 = vcmp.eq.s32.totalorder %v665, 1
        %vm682 = vcmp.eq.s32.totalorder %v666, 1
        %vm683 = vcmp.eq.s32.totalorder %v667, 1
        %vm684 = vcmp.eq.s32.totalorder %v668, 1
        %vm685 = vcmp.eq.s32.totalorder %v669, 1
        %vm686 = vcmp.eq.s32.totalorder %v670, 1
        %vm687 = vcmp.eq.s32.totalorder %v671, 1
        %vm688 = vcmp.eq.s32.totalorder %v672, 1
        %vm689 = vcmp.eq.s32.totalorder %v673, 1
        %vm690 = vcmp.eq.s32.totalorder %v674, 1
        %vm691 = vcmp.eq.s32.totalorder %v675, 1
        %v692 = vsel %vm676, 0.0, %v658
        %v693 = vsel %vm677, 0.0, %v657
        %v694 = vsel %vm678, 0.0, %v656
        %v695 = vsel %vm679, 0.0, %v655
        %v696 = vsel %vm680, 0.0, %v654
        %v697 = vsel %vm681, 0.0, %v653
        %v698 = vsel %vm682, 0.0, %v652
        %v699 = vsel %vm683, 0.0, %v651
        %v700 = vsel %vm684, 0.0, %v650
        %v701 = vsel %vm685, 0.0, %v649
        %v702 = vsel %vm686, 0.0, %v648
        %v703 = vsel %vm687, 0.0, %v647
        %v704 = vsel %vm688, 0.0, %v646
        %v705 = vsel %vm689, 0.0, %v645
        %v706 = vsel %vm690, 0.0, %v644
        %v707 = vsel %vm691, 0.0, %v659
        %v708 = vld [vmem:[#allocation5] sm:$0xff]
        %v709 = vld [vmem:[#allocation5 + $0x8] sm:$0xff]
        %v710 = vld [vmem:[#allocation5 + $0x10] sm:$0xff]
        %v711 = vld [vmem:[#allocation5 + $0x18] sm:$0xff]
        %v712 = vld [vmem:[#allocation5 + $0x20] sm:$0xff]
        %v713 = vld [vmem:[#allocation5 + $0x28] sm:$0xff]
        %v714 = vld [vmem:[#allocation5 + $0x30] sm:$0xff]
        %v715 = vld [vmem:[#allocation5 + $0x38] sm:$0xff]
        %v716 = vld [vmem:[#allocation5 + $0x40] sm:$0xff]
        %v717 = vld [vmem:[#allocation5 + $0x48] sm:$0xff]
        %v718 = vld [vmem:[#allocation5 + $0x50] sm:$0xff]
        %v719 = vld [vmem:[#allocation5 + $0x58] sm:$0xff]
        %v720 = vld [vmem:[#allocation5 + $0x60] sm:$0xff]
        %v721 = vld [vmem:[#allocation5 + $0x68] sm:$0xff]
        %v722 = vld [vmem:[#allocation5 + $0x70] sm:$0xff]
        %v723 = vld [vmem:[#allocation5 + $0x78] sm:$0xff]
        %s724 = scalar_lea.vmem [#allocation5], 128
        %v725 = vld [vmem:[%s724] sm:$0xff]
        %v726 = vld [vmem:[%s724 + $0x8] sm:$0xff]
        %v727 = vld [vmem:[%s724 + $0x10] sm:$0xff]
        %v728 = vld [vmem:[%s724 + $0x18] sm:$0xff]
        %v729 = vld [vmem:[%s724 + $0x20] sm:$0xff]
        %v730 = vld [vmem:[%s724 + $0x28] sm:$0xff]
        %v731 = vld [vmem:[%s724 + $0x30] sm:$0xff]
        %v732 = vld [vmem:[%s724 + $0x38] sm:$0xff]
        %v733 = vld [vmem:[%s724 + $0x40] sm:$0xff]
        %v734 = vld [vmem:[%s724 + $0x48] sm:$0xff]
        %v735 = vld [vmem:[%s724 + $0x50] sm:$0xff]
        %v736 = vld [vmem:[%s724 + $0x58] sm:$0xff]
        %v737 = vld [vmem:[%s724 + $0x60] sm:$0xff]
        %v738 = vld [vmem:[%s724 + $0x68] sm:$0xff]
        %v739 = vld [vmem:[%s724 + $0x70] sm:$0xff]
        %v740 = vld [vmem:[%s724 + $0x78] sm:$0xff]
        %741 = vmatpush.msra.mxu0 %v740
        %742 = vmatpush.msra.mxu0 %v739
        %743 = vmatpush.msra.mxu0 %v738
        %744 = vmatpush.msra.mxu0 %v737
        %745 = vmatpush.msra.mxu0 %v736
        %746 = vmatpush.msra.mxu0 %v735
        %747 = vmatpush.msra.mxu0 %v734
        %748 = vmatpush.msra.mxu0 %v733
        %749 = vmatpush.msra.mxu0 %v732
        %750 = vmatpush.msra.mxu0 %v731
        %751 = vmatpush.msra.mxu0 %v730
        %752 = vmatpush.msra.mxu0 %v729
        %753 = vmatpush.msra.mxu0 %v728
        %754 = vmatpush.msra.mxu0 %v727
        %755 = vmatpush.msra.mxu0 %v726
        %756 = vmatpush.msra.mxu0 %v725
        %757 = vmatmul.f32.gmra.mxu0 %v499
        %v758 = vpop.f32.mrf.mxu0
        %v759 = vadd.f32 0.0, %v758
        %760 = vmatmul.f32.gmra.mxu0 %v502
        %v761 = vpop.f32.mrf.mxu0
        %v762 = vadd.f32 0.0, %v761
        %763 = vmatmul.f32.gmra.mxu0 %v505
        %v764 = vpop.f32.mrf.mxu0
        %v765 = vadd.f32 0.0, %v764
        %766 = vmatmul.f32.gmra.mxu0 %v508
        %v767 = vpop.f32.mrf.mxu0
        %v768 = vadd.f32 0.0, %v767
        %769 = vmatmul.f32.gmra.mxu0 %v511
        %v770 = vpop.f32.mrf.mxu0
        %v771 = vadd.f32 0.0, %v770
        %772 = vmatmul.f32.gmra.mxu0 %v514
        %v773 = vpop.f32.mrf.mxu0
        %v774 = vadd.f32 0.0, %v773
        %775 = vmatmul.f32.gmra.mxu0 %v517
        %v776 = vpop.f32.mrf.mxu0
        %v777 = vadd.f32 0.0, %v776
        %778 = vmatmul.f32.gmra.mxu0 %v520
        %v779 = vpop.f32.mrf.mxu0
        %v780 = vadd.f32 0.0, %v779
        %781 = vmatmul.f32.gmra.mxu0 %v523
        %v782 = vpop.f32.mrf.mxu0
        %v783 = vadd.f32 0.0, %v782
        %784 = vmatmul.f32.gmra.mxu0 %v526
        %v785 = vpop.f32.mrf.mxu0
        %v786 = vadd.f32 0.0, %v785
        %787 = vmatmul.f32.gmra.mxu0 %v529
        %v788 = vpop.f32.mrf.mxu0
        %v789 = vadd.f32 0.0, %v788
        %790 = vmatmul.f32.gmra.mxu0 %v532
        %v791 = vpop.f32.mrf.mxu0
        %v792 = vadd.f32 0.0, %v791
        %793 = vmatmul.f32.gmra.mxu0 %v535
        %v794 = vpop.f32.mrf.mxu0
        %v795 = vadd.f32 0.0, %v794
        %796 = vmatmul.f32.gmra.mxu0 %v538
        %v797 = vpop.f32.mrf.mxu0
        %v798 = vadd.f32 0.0, %v797
        %799 = vmatmul.f32.gmra.mxu0 %v541
        %v800 = vpop.f32.mrf.mxu0
        %v801 = vadd.f32 0.0, %v800
        %802 = vmatmul.f32.gmra.mxu0 %v544
        %v803 = vpop.f32.mrf.mxu0
        %v804 = vadd.f32 0.0, %v803
        %805 = vdwg.mxu0
        %806 = vmatpush.msra.mxu0 %v723
        %807 = vmatpush.msra.mxu0 %v722
        %808 = vmatpush.msra.mxu0 %v721
        %809 = vmatpush.msra.mxu0 %v720
        %810 = vmatpush.msra.mxu0 %v719
        %811 = vmatpush.msra.mxu0 %v718
        %812 = vmatpush.msra.mxu0 %v717
        %813 = vmatpush.msra.mxu0 %v716
        %814 = vmatpush.msra.mxu0 %v715
        %815 = vmatpush.msra.mxu0 %v714
        %816 = vmatpush.msra.mxu0 %v713
        %817 = vmatpush.msra.mxu0 %v712
        %818 = vmatpush.msra.mxu0 %v711
        %819 = vmatpush.msra.mxu0 %v710
        %820 = vmatpush.msra.mxu0 %v709
        %821 = vmatpush.msra.mxu0 %v708
        %822 = vmatmul.f32.gmra.mxu0 %v611
        %v823 = vpop.f32.mrf.mxu0
        %v824 = vadd.f32 %v759, %v823
        %825 = vmatmul.f32.gmra.mxu0 %v612
        %v826 = vpop.f32.mrf.mxu0
        %v827 = vadd.f32 %v762, %v826
        %828 = vmatmul.f32.gmra.mxu0 %v613
        %v829 = vpop.f32.mrf.mxu0
        %v830 = vadd.f32 %v765, %v829
        %831 = vmatmul.f32.gmra.mxu0 %v614
        %v832 = vpop.f32.mrf.mxu0
        %v833 = vadd.f32 %v768, %v832
        %834 = vmatmul.f32.gmra.mxu0 %v615
        %v835 = vpop.f32.mrf.mxu0
        %v836 = vadd.f32 %v771, %v835
        %837 = vmatmul.f32.gmra.mxu0 %v616
        %v838 = vpop.f32.mrf.mxu0
        %v839 = vadd.f32 %v774, %v838
        %840 = vmatmul.f32.gmra.mxu0 %v617
        %v841 = vpop.f32.mrf.mxu0
        %v842 = vadd.f32 %v777, %v841
        %843 = vmatmul.f32.gmra.mxu0 %v618
        %v844 = vpop.f32.mrf.mxu0
        %v845 = vadd.f32 %v780, %v844
        %846 = vmatmul.f32.gmra.mxu0 %v619
        %v847 = vpop.f32.mrf.mxu0
        %v848 = vadd.f32 %v783, %v847
        %849 = vmatmul.f32.gmra.mxu0 %v620
        %v850 = vpop.f32.mrf.mxu0
        %v851 = vadd.f32 %v786, %v850
        %852 = vmatmul.f32.gmra.mxu0 %v621
        %v853 = vpop.f32.mrf.mxu0
        %v854 = vadd.f32 %v789, %v853
        %855 = vmatmul.f32.gmra.mxu0 %v622
        %v856 = vpop.f32.mrf.mxu0
        %v857 = vadd.f32 %v792, %v856
        %858 = vmatmul.f32.gmra.mxu0 %v623
        %v859 = vpop.f32.mrf.mxu0
        %v860 = vadd.f32 %v795, %v859
        %861 = vmatmul.f32.gmra.mxu0 %v624
        %v862 = vpop.f32.mrf.mxu0
        %v863 = vadd.f32 %v798, %v862
        %864 = vmatmul.f32.gmra.mxu0 %v625
        %v865 = vpop.f32.mrf.mxu0
        %v866 = vadd.f32 %v801, %v865
        %867 = vmatmul.f32.gmra.mxu0 %v626
        %v868 = vpop.f32.mrf.mxu0
        %v869 = vadd.f32 %v804, %v868
        %870 = vdwg.mxu0
        %s871 = scalar_lea.vmem [#allocation5], 256
        %v872 = vld [vmem:[%s871] sm:$0xff]
        %v873 = vld [vmem:[%s871 + $0x8] sm:$0xff]
        %v874 = vld [vmem:[%s871 + $0x10] sm:$0xff]
        %v875 = vld [vmem:[%s871 + $0x18] sm:$0xff]
        %v876 = vld [vmem:[%s871 + $0x20] sm:$0xff]
        %v877 = vld [vmem:[%s871 + $0x28] sm:$0xff]
        %v878 = vld [vmem:[%s871 + $0x30] sm:$0xff]
        %v879 = vld [vmem:[%s871 + $0x38] sm:$0xff]
        %v880 = vld [vmem:[%s871 + $0x40] sm:$0xff]
        %v881 = vld [vmem:[%s871 + $0x48] sm:$0xff]
        %v882 = vld [vmem:[%s871 + $0x50] sm:$0xff]
        %v883 = vld [vmem:[%s871 + $0x58] sm:$0xff]
        %v884 = vld [vmem:[%s871 + $0x60] sm:$0xff]
        %v885 = vld [vmem:[%s871 + $0x68] sm:$0xff]
        %v886 = vld [vmem:[%s871 + $0x70] sm:$0xff]
        %v887 = vld [vmem:[%s871 + $0x78] sm:$0xff]
        %888 = vmatpush.msra.mxu0 %v887
        %889 = vmatpush.msra.mxu0 %v886
        %890 = vmatpush.msra.mxu0 %v885
        %891 = vmatpush.msra.mxu0 %v884
        %892 = vmatpush.msra.mxu0 %v883
        %893 = vmatpush.msra.mxu0 %v882
        %894 = vmatpush.msra.mxu0 %v881
        %895 = vmatpush.msra.mxu0 %v880
        %896 = vmatpush.msra.mxu0 %v879
        %897 = vmatpush.msra.mxu0 %v878
        %898 = vmatpush.msra.mxu0 %v877
        %899 = vmatpush.msra.mxu0 %v876
        %900 = vmatpush.msra.mxu0 %v875
        %901 = vmatpush.msra.mxu0 %v874
        %902 = vmatpush.msra.mxu0 %v873
        %903 = vmatpush.msra.mxu0 %v872
        %904 = vmatmul.f32.gmra.mxu0 %v692
        %v905 = vpop.f32.mrf.mxu0
        %v906 = vadd.f32 0.0, %v905
        %907 = vmatmul.f32.gmra.mxu0 %v693
        %v908 = vpop.f32.mrf.mxu0
        %v909 = vadd.f32 0.0, %v908
        %910 = vmatmul.f32.gmra.mxu0 %v694
        %v911 = vpop.f32.mrf.mxu0
        %v912 = vadd.f32 0.0, %v911
        %913 = vmatmul.f32.gmra.mxu0 %v695
        %v914 = vpop.f32.mrf.mxu0
        %v915 = vadd.f32 0.0, %v914
        %916 = vmatmul.f32.gmra.mxu0 %v696
        %v917 = vpop.f32.mrf.mxu0
        %v918 = vadd.f32 0.0, %v917
        %919 = vmatmul.f32.gmra.mxu0 %v697
        %v920 = vpop.f32.mrf.mxu0
        %v921 = vadd.f32 0.0, %v920
        %922 = vmatmul.f32.gmra.mxu0 %v698
        %v923 = vpop.f32.mrf.mxu0
        %v924 = vadd.f32 0.0, %v923
        %925 = vmatmul.f32.gmra.mxu0 %v699
        %v926 = vpop.f32.mrf.mxu0
        %v927 = vadd.f32 0.0, %v926
        %928 = vmatmul.f32.gmra.mxu0 %v700
        %v929 = vpop.f32.mrf.mxu0
        %v930 = vadd.f32 0.0, %v929
        %931 = vmatmul.f32.gmra.mxu0 %v701
        %v932 = vpop.f32.mrf.mxu0
        %v933 = vadd.f32 0.0, %v932
        %934 = vmatmul.f32.gmra.mxu0 %v702
        %v935 = vpop.f32.mrf.mxu0
        %v936 = vadd.f32 0.0, %v935
        %937 = vmatmul.f32.gmra.mxu0 %v703
        %v938 = vpop.f32.mrf.mxu0
        %v939 = vadd.f32 0.0, %v938
        %940 = vmatmul.f32.gmra.mxu0 %v704
        %v941 = vpop.f32.mrf.mxu0
        %v942 = vadd.f32 0.0, %v941
        %943 = vmatmul.f32.gmra.mxu0 %v705
        %v944 = vpop.f32.mrf.mxu0
        %v945 = vadd.f32 0.0, %v944
        %946 = vmatmul.f32.gmra.mxu0 %v706
        %v947 = vpop.f32.mrf.mxu0
        %v948 = vadd.f32 0.0, %v947
        %949 = vmatmul.f32.gmra.mxu0 %v707
        %v950 = vpop.f32.mrf.mxu0
        %v951 = vadd.f32 0.0, %v950
        %952 = vdwg.mxu0
        %v953 = vadd.f32 %v824, %v906
        %v954 = vadd.f32 %v827, %v909
        %v955 = vadd.f32 %v830, %v912
        %v956 = vadd.f32 %v833, %v915
        %v957 = vadd.f32 %v836, %v918
        %v958 = vadd.f32 %v839, %v921
        %v959 = vadd.f32 %v842, %v924
        %v960 = vadd.f32 %v845, %v927
        %v961 = vadd.f32 %v848, %v930
        %v962 = vadd.f32 %v851, %v933
        %v963 = vadd.f32 %v854, %v936
        %v964 = vadd.f32 %v857, %v939
        %v965 = vadd.f32 %v860, %v942
        %v966 = vadd.f32 %v863, %v945
        %v967 = vadd.f32 %v866, %v948
        %v968 = vadd.f32 %v869, %v951
        %v969 = vld [vmem:[%s3] sm:$0x1]
        %v971 = vperm.slane %v969, 0
        %v973 = vadd.f32 %v953, %v971
        %v974 = vadd.f32 %v954, %v971
        %v975 = vadd.f32 %v955, %v971
        %v976 = vadd.f32 %v956, %v971
        %v977 = vadd.f32 %v957, %v971
        %v978 = vadd.f32 %v958, %v971
        %v979 = vadd.f32 %v959, %v971
        %v980 = vadd.f32 %v960, %v971
        %v981 = vadd.f32 %v961, %v971
        %v982 = vadd.f32 %v962, %v971
        %v983 = vadd.f32 %v963, %v971
        %v984 = vadd.f32 %v964, %v971
        %v985 = vadd.f32 %v965, %v971
        %v986 = vadd.f32 %v966, %v971
        %v987 = vadd.f32 %v967, %v971
        %v988 = vadd.f32 %v968, %v971
        %v989 = vmax.f32 %v973, 0.0
        %v990 = vmax.f32 %v974, 0.0
        %v991 = vmax.f32 %v975, 0.0
        %v992 = vmax.f32 %v976, 0.0
        %v993 = vmax.f32 %v977, 0.0
        %v994 = vmax.f32 %v978, 0.0
        %v995 = vmax.f32 %v979, 0.0
        %v996 = vmax.f32 %v980, 0.0
        %v997 = vmax.f32 %v981, 0.0
        %v998 = vmax.f32 %v982, 0.0
        %v999 = vmax.f32 %v983, 0.0
        %v1000 = vmax.f32 %v984, 0.0
        %v1001 = vmax.f32 %v985, 0.0
        %v1002 = vmax.f32 %v986, 0.0
        %v1003 = vmax.f32 %v987, 0.0
        %v1004 = vmax.f32 %v988, 0.0
        %v1005 = vrot.slane %v989, 1
        %v1006 = vrot.slane %v990, 1
        %v1007 = vrot.slane %v991, 1
        %v1008 = vrot.slane %v992, 1
        %v1009 = vrot.slane %v993, 1
        %v1010 = vrot.slane %v994, 1
        %v1011 = vrot.slane %v995, 1
        %v1012 = vrot.slane %v996, 1
        %v1013 = vrot.slane %v997, 1
        %v1014 = vrot.slane %v998, 1
        %v1015 = vrot.slane %v999, 1
        %v1016 = vrot.slane %v1000, 1
        %v1017 = vrot.slane %v1001, 1
        %v1018 = vrot.slane %v1002, 1
        %v1019 = vrot.slane %v1003, 1
        %v1020 = vrot.slane %v1004, 1
        %v1021 = vsel %vm643, %v1019, %v1020
        %v1022 = vsel %vm643, %v1018, %v1019
        %v1023 = vsel %vm643, %v1017, %v1018
        %v1024 = vsel %vm643, %v1016, %v1017
        %v1025 = vsel %vm643, %v1015, %v1016
        %v1026 = vsel %vm643, %v1014, %v1015
        %v1027 = vsel %vm643, %v1013, %v1014
        %v1028 = vsel %vm643, %v1012, %v1013
        %v1029 = vsel %vm643, %v1011, %v1012
        %v1030 = vsel %vm643, %v1010, %v1011
        %v1031 = vsel %vm643, %v1009, %v1010
        %v1032 = vsel %vm643, %v1008, %v1009
        %v1033 = vsel %vm643, %v1007, %v1008
        %v1034 = vsel %vm643, %v1006, %v1007
        %v1035 = vsel %vm643, %v1005, %v1006
        %v1036 = vsel %vm643, %v1020, %v1005
        %v1037 = vmax.f32 %v989, %v1035
        %v1038 = vmax.f32 %v990, %v1034
        %v1039 = vmax.f32 %v991, %v1033
        %v1040 = vmax.f32 %v992, %v1032
        %v1041 = vmax.f32 %v993, %v1031
        %v1042 = vmax.f32 %v994, %v1030
        %v1043 = vmax.f32 %v995, %v1029
        %v1044 = vmax.f32 %v996, %v1028
        %v1045 = vmax.f32 %v997, %v1027
        %v1046 = vmax.f32 %v998, %v1026
        %v1047 = vmax.f32 %v999, %v1025
        %v1048 = vmax.f32 %v1000, %v1024
        %v1049 = vmax.f32 %v1001, %v1023
        %v1050 = vmax.f32 %v1002, %v1022
        %v1051 = vmax.f32 %v1003, %v1021
        %v1052 = vmax.f32 %v1004, %v1036
        %v1053 = vrot.slane %v989, 2
        %v1054 = vrot.slane %v990, 2
        %v1055 = vrot.slane %v991, 2
        %v1056 = vrot.slane %v992, 2
        %v1057 = vrot.slane %v993, 2
        %v1058 = vrot.slane %v994, 2
        %v1059 = vrot.slane %v995, 2
        %v1060 = vrot.slane %v996, 2
        %v1061 = vrot.slane %v997, 2
        %v1062 = vrot.slane %v998, 2
        %v1063 = vrot.slane %v999, 2
        %v1064 = vrot.slane %v1000, 2
        %v1065 = vrot.slane %v1001, 2
        %v1066 = vrot.slane %v1002, 2
        %v1067 = vrot.slane %v1003, 2
        %v1068 = vrot.slane %v1004, 2
        %vm1069 = vcmp.lt.s32.totalorder %v350, 6
        %v1070 = vsel %vm1069, %v1067, %v1068
        %v1071 = vsel %vm1069, %v1066, %v1067
        %v1072 = vsel %vm1069, %v1065, %v1066
        %v1073 = vsel %vm1069, %v1064, %v1065
        %v1074 = vsel %vm1069, %v1063, %v1064
        %v1075 = vsel %vm1069, %v1062, %v1063
        %v1076 = vsel %vm1069, %v1061, %v1062
        %v1077 = vsel %vm1069, %v1060, %v1061
        %v1078 = vsel %vm1069, %v1059, %v1060
        %v1079 = vsel %vm1069, %v1058, %v1059
        %v1080 = vsel %vm1069, %v1057, %v1058
        %v1081 = vsel %vm1069, %v1056, %v1057
        %v1082 = vsel %vm1069, %v1055, %v1056
        %v1083 = vsel %vm1069, %v1054, %v1055
        %v1084 = vsel %vm1069, %v1053, %v1054
        %v1085 = vsel %vm1069, %v1068, %v1053
        %v1086 = vmax.f32 %v1037, %v1084
        %v1087 = vmax.f32 %v1038, %v1083
        %v1088 = vmax.f32 %v1039, %v1082
        %v1089 = vmax.f32 %v1040, %v1081
        %v1090 = vmax.f32 %v1041, %v1080
        %v1091 = vmax.f32 %v1042, %v1079
        %v1092 = vmax.f32 %v1043, %v1078
        %v1093 = vmax.f32 %v1044, %v1077
        %v1094 = vmax.f32 %v1045, %v1076
        %v1095 = vmax.f32 %v1046, %v1075
        %v1096 = vmax.f32 %v1047, %v1074
        %v1097 = vmax.f32 %v1048, %v1073
        %v1098 = vmax.f32 %v1049, %v1072
        %v1099 = vmax.f32 %v1050, %v1071
        %v1100 = vmax.f32 %v1051, %v1070
        %v1101 = vmax.f32 %v1052, %v1085
        %v1102 = vrot.slane %v989, 3
        %v1103 = vrot.slane %v990, 3
        %v1104 = vrot.slane %v991, 3
        %v1105 = vrot.slane %v992, 3
        %v1106 = vrot.slane %v993, 3
        %v1107 = vrot.slane %v994, 3
        %v1108 = vrot.slane %v995, 3
        %v1109 = vrot.slane %v996, 3
        %v1110 = vrot.slane %v997, 3
        %v1111 = vrot.slane %v998, 3
        %v1112 = vrot.slane %v999, 3
        %v1113 = vrot.slane %v1000, 3
        %v1114 = vrot.slane %v1001, 3
        %v1115 = vrot.slane %v1002, 3
        %v1116 = vrot.slane %v1003, 3
        %v1117 = vrot.slane %v1004, 3
        %vm1118 = vcmp.lt.s32.totalorder %v350, 5
        %v1119 = vsel %vm1118, %v1116, %v1117
        %v1120 = vsel %vm1118, %v1115, %v1116
        %v1121 = vsel %vm1118, %v1114, %v1115
        %v1122 = vsel %vm1118, %v1113, %v1114
        %v1123 = vsel %vm1118, %v1112, %v1113
        %v1124 = vsel %vm1118, %v1111, %v1112
        %v1125 = vsel %vm1118, %v1110, %v1111
        %v1126 = vsel %vm1118, %v1109, %v1110
        %v1127 = vsel %vm1118, %v1108, %v1109
        %v1128 = vsel %vm1118, %v1107, %v1108
        %v1129 = vsel %vm1118, %v1106, %v1107
        %v1130 = vsel %vm1118, %v1105, %v1106
        %v1131 = vsel %vm1118, %v1104, %v1105
        %v1132 = vsel %vm1118, %v1103, %v1104
        %v1133 = vsel %vm1118, %v1102, %v1103
        %v1134 = vsel %vm1118, %v1117, %v1102
        %v1135 = vmax.f32 %v1086, %v1133
        %v1136 = vmax.f32 %v1087, %v1132
        %v1137 = vmax.f32 %v1088, %v1131
        %v1138 = vmax.f32 %v1089, %v1130
        %v1139 = vmax.f32 %v1090, %v1129
        %v1140 = vmax.f32 %v1091, %v1128
        %v1141 = vmax.f32 %v1092, %v1127
        %v1142 = vmax.f32 %v1093, %v1126
        %v1143 = vmax.f32 %v1094, %v1125
        %v1144 = vmax.f32 %v1095, %v1124
        %v1145 = vmax.f32 %v1096, %v1123
        %v1146 = vmax.f32 %v1097, %v1122
        %v1147 = vmax.f32 %v1098, %v1121
        %v1148 = vmax.f32 %v1099, %v1120
        %v1149 = vmax.f32 %v1100, %v1119
        %v1150 = vmax.f32 %v1101, %v1134
        %1151 = vst [vmem:[#allocation3] sm:$0xff] %v1135
        %1152 = vst [vmem:[#allocation3 + $0x8] sm:$0xff] %v1136
        %1153 = vst [vmem:[#allocation3 + $0x10] sm:$0xff] %v1137
        %1154 = vst [vmem:[#allocation3 + $0x18] sm:$0xff] %v1138
        %1155 = vst [vmem:[#allocation3 + $0x20] sm:$0xff] %v1139
        %1156 = vst [vmem:[#allocation3 + $0x28] sm:$0xff] %v1140
        %1157 = vst [vmem:[#allocation3 + $0x30] sm:$0xff] %v1141
        %1158 = vst [vmem:[#allocation3 + $0x38] sm:$0xff] %v1142
        %1159 = vst [vmem:[#allocation3 + $0x40] sm:$0xff] %v1143
        %1160 = vst [vmem:[#allocation3 + $0x48] sm:$0xff] %v1144
        %1161 = vst [vmem:[#allocation3 + $0x50] sm:$0xff] %v1145
        %1162 = vst [vmem:[#allocation3 + $0x58] sm:$0xff] %v1146
        %1163 = vst [vmem:[#allocation3 + $0x60] sm:$0xff] %v1147
        %1164 = vst [vmem:[#allocation3 + $0x68] sm:$0xff] %v1148
        %1165 = vst [vmem:[#allocation3 + $0x70] sm:$0xff] %v1149
        %1166 = vst [vmem:[#allocation3 + $0x78] sm:$0xff] %v1150
        %v1167 = vld [vmem:[#allocation3] ss:$4 sm:$0xff]
        %s1168 = scalar_lea.vmem [#allocation3], 32
        %v1169 = vld [vmem:[%s1168] ss:$4 sm:$0xff]
        %s1170 = scalar_lea.vmem [#allocation3], 64
        %v1171 = vld [vmem:[%s1170] ss:$4 sm:$0xff]
        %s1172 = scalar_lea.vmem [#allocation3], 96
        %v1173 = vld [vmem:[%s1172] ss:$4 sm:$0xff]
        %1174 = vst [vmem:[#allocation2] sm:$0xff] %v1167
        %1175 = vst [vmem:[#allocation2 + $0x8] sm:$0xff] %v1169
        %1176 = vst [vmem:[#allocation2 + $0x10] sm:$0xff] %v1171
        %1177 = vst [vmem:[#allocation2 + $0x18] sm:$0xff] %v1173
        %s1178 = scalar_lea.vmem %s347, 128
        %v1179 = vld [vmem:[%s1178] sm:$0xff]
        %v1180 = vld [vmem:[%s1178 + $0x8] sm:$0xff]
        %v1181 = vld [vmem:[%s1178 + $0x10] sm:$0xff]
        %v1182 = vld [vmem:[%s1178 + $0x18] sm:$0xff]
        %v1183 = vld [vmem:[%s1178 + $0x20] sm:$0xff]
        %v1184 = vld [vmem:[%s1178 + $0x28] sm:$0xff]
        %v1185 = vld [vmem:[%s1178 + $0x30] sm:$0xff]
        %v1186 = vld [vmem:[%s1178 + $0x38] sm:$0xff]
        %v1187 = vld [vmem:[%s1178 + $0x40] sm:$0xff]
        %v1188 = vld [vmem:[%s1178 + $0x48] sm:$0xff]
        %v1189 = vld [vmem:[%s1178 + $0x50] sm:$0xff]
        %v1190 = vld [vmem:[%s1178 + $0x58] sm:$0xff]
        %v1191 = vld [vmem:[%s1178 + $0x60] sm:$0xff]
        %v1192 = vld [vmem:[%s1178 + $0x68] sm:$0xff]
        %v1193 = vld [vmem:[%s1178 + $0x70] sm:$0xff]
        %v1194 = vld [vmem:[%s1178 + $0x78] sm:$0xff]
        %v1196 = vsel %vm432, %v1179, 0
        %v1199 = vsel %vm432, %v1180, 0
        %v1202 = vsel %vm432, %v1181, 0
        %v1205 = vsel %vm432, %v1182, 0
        %v1208 = vsel %vm432, %v1183, 0
        %v1211 = vsel %vm432, %v1184, 0
        %v1214 = vsel %vm432, %v1185, 0
        %v1217 = vsel %vm432, %v1186, 0
        %v1220 = vsel %vm432, %v1187, 0
        %v1223 = vsel %vm432, %v1188, 0
        %v1226 = vsel %vm432, %v1189, 0
        %v1229 = vsel %vm432, %v1190, 0
        %v1232 = vsel %vm432, %v1191, 0
        %v1235 = vsel %vm432, %v1192, 0
        %v1238 = vsel %vm432, %v1193, 0
        %v1241 = vsel %vm432, %v1194, 0
        %1243 = vmatpush.msra.mxu0 0.0
        %1244 = vmatpush.msra.mxu0 0.0
        %1245 = vmatpush.msra.mxu0 0.0
        %1246 = vmatpush.msra.mxu0 0.0
        %1247 = vmatpush.msra.mxu0 0.0
        %1248 = vmatpush.msra.mxu0 0.0
        %1249 = vmatpush.msra.mxu0 0.0
        %1250 = vmatpush.msra.mxu0 0.0
        %1251 = vmatpush.msra.mxu0 0.0
        %1252 = vmatpush.msra.mxu0 0.0
        %1253 = vmatpush.msra.mxu0 0.0
        %1254 = vmatpush.msra.mxu0 0.0
        %1255 = vmatpush.msra.mxu0 0.0
        %1256 = vmatpush.msra.mxu0 0.0
        %1257 = vmatpush.msra.mxu0 %v415
        %1258 = vmatpush.msra.mxu0 %v414
        %1259 = vmatmul.f32.gmra.mxu0 %v1196
        %v1260 = vpop.f32.mrf.mxu0
        %v1261 = vadd.f32 0.0, %v1260
        %1262 = vmatmul.f32.gmra.mxu0 %v1199
        %v1263 = vpop.f32.mrf.mxu0
        %v1264 = vadd.f32 0.0, %v1263
        %1265 = vmatmul.f32.gmra.mxu0 %v1202
        %v1266 = vpop.f32.mrf.mxu0
        %v1267 = vadd.f32 0.0, %v1266
        %1268 = vmatmul.f32.gmra.mxu0 %v1205
        %v1269 = vpop.f32.mrf.mxu0
        %v1270 = vadd.f32 0.0, %v1269
        %1271 = vmatmul.f32.gmra.mxu0 %v1208
        %v1272 = vpop.f32.mrf.mxu0
        %v1273 = vadd.f32 0.0, %v1272
        %1274 = vmatmul.f32.gmra.mxu0 %v1211
        %v1275 = vpop.f32.mrf.mxu0
        %v1276 = vadd.f32 0.0, %v1275
        %1277 = vmatmul.f32.gmra.mxu0 %v1214
        %v1278 = vpop.f32.mrf.mxu0
        %v1279 = vadd.f32 0.0, %v1278
        %1280 = vmatmul.f32.gmra.mxu0 %v1217
        %v1281 = vpop.f32.mrf.mxu0
        %v1282 = vadd.f32 0.0, %v1281
        %1283 = vmatmul.f32.gmra.mxu0 %v1220
        %v1284 = vpop.f32.mrf.mxu0
        %v1285 = vadd.f32 0.0, %v1284
        %1286 = vmatmul.f32.gmra.mxu0 %v1223
        %v1287 = vpop.f32.mrf.mxu0
        %v1288 = vadd.f32 0.0, %v1287
        %1289 = vmatmul.f32.gmra.mxu0 %v1226
        %v1290 = vpop.f32.mrf.mxu0
        %v1291 = vadd.f32 0.0, %v1290
        %1292 = vmatmul.f32.gmra.mxu0 %v1229
        %v1293 = vpop.f32.mrf.mxu0
        %v1294 = vadd.f32 0.0, %v1293
        %1295 = vmatmul.f32.gmra.mxu0 %v1232
        %v1296 = vpop.f32.mrf.mxu0
        %v1297 = vadd.f32 0.0, %v1296
        %1298 = vmatmul.f32.gmra.mxu0 %v1235
        %v1299 = vpop.f32.mrf.mxu0
        %v1300 = vadd.f32 0.0, %v1299
        %1301 = vmatmul.f32.gmra.mxu0 %v1238
        %v1302 = vpop.f32.mrf.mxu0
        %v1303 = vadd.f32 0.0, %v1302
        %1304 = vmatmul.f32.gmra.mxu0 %v1241
        %v1305 = vpop.f32.mrf.mxu0
        %v1306 = vadd.f32 0.0, %v1305
        %1307 = vdwg.mxu0
        %v1308 = vrot.slane %v1261, 7
        %v1309 = vrot.slane %v1264, 7
        %v1310 = vrot.slane %v1267, 7
        %v1311 = vrot.slane %v1270, 7
        %v1312 = vrot.slane %v1273, 7
        %v1313 = vrot.slane %v1276, 7
        %v1314 = vrot.slane %v1279, 7
        %v1315 = vrot.slane %v1282, 7
        %v1316 = vrot.slane %v1285, 7
        %v1317 = vrot.slane %v1288, 7
        %v1318 = vrot.slane %v1291, 7
        %v1319 = vrot.slane %v1294, 7
        %v1320 = vrot.slane %v1297, 7
        %v1321 = vrot.slane %v1300, 7
        %v1322 = vrot.slane %v1303, 7
        %v1323 = vrot.slane %v1306, 7
        %v1324 = vsel %vm562, %v1322, %v1323
        %v1325 = vsel %vm562, %v1321, %v1322
        %v1326 = vsel %vm562, %v1320, %v1321
        %v1327 = vsel %vm562, %v1319, %v1320
        %v1328 = vsel %vm562, %v1318, %v1319
        %v1329 = vsel %vm562, %v1317, %v1318
        %v1330 = vsel %vm562, %v1316, %v1317
        %v1331 = vsel %vm562, %v1315, %v1316
        %v1332 = vsel %vm562, %v1314, %v1315
        %v1333 = vsel %vm562, %v1313, %v1314
        %v1334 = vsel %vm562, %v1312, %v1313
        %v1335 = vsel %vm562, %v1311, %v1312
        %v1336 = vsel %vm562, %v1310, %v1311
        %v1337 = vsel %vm562, %v1309, %v1310
        %v1338 = vsel %vm562, %v1308, %v1309
        %v1339 = vsel %vm562, %v1323, %v1308
        %v1340 = vsel %vm595, 0.0, %v1339
        %v1341 = vsel %vm596, 0.0, %v1338
        %v1342 = vsel %vm597, 0.0, %v1337
        %v1343 = vsel %vm598, 0.0, %v1336
        %v1344 = vsel %vm599, 0.0, %v1335
        %v1345 = vsel %vm600, 0.0, %v1334
        %v1346 = vsel %vm601, 0.0, %v1333
        %v1347 = vsel %vm602, 0.0, %v1332
        %v1348 = vsel %vm603, 0.0, %v1331
        %v1349 = vsel %vm604, 0.0, %v1330
        %v1350 = vsel %vm605, 0.0, %v1329
        %v1351 = vsel %vm606, 0.0, %v1328
        %v1352 = vsel %vm607, 0.0, %v1327
        %v1353 = vsel %vm608, 0.0, %v1326
        %v1354 = vsel %vm609, 0.0, %v1325
        %v1355 = vsel %vm610, 0.0, %v1324
        %v1356 = vrot.slane %v1261, 1
        %v1357 = vrot.slane %v1264, 1
        %v1358 = vrot.slane %v1267, 1
        %v1359 = vrot.slane %v1270, 1
        %v1360 = vrot.slane %v1273, 1
        %v1361 = vrot.slane %v1276, 1
        %v1362 = vrot.slane %v1279, 1
        %v1363 = vrot.slane %v1282, 1
        %v1364 = vrot.slane %v1285, 1
        %v1365 = vrot.slane %v1288, 1
        %v1366 = vrot.slane %v1291, 1
        %v1367 = vrot.slane %v1294, 1
        %v1368 = vrot.slane %v1297, 1
        %v1369 = vrot.slane %v1300, 1
        %v1370 = vrot.slane %v1303, 1
        %v1371 = vrot.slane %v1306, 1
        %v1372 = vsel %vm643, %v1370, %v1371
        %v1373 = vsel %vm643, %v1369, %v1370
        %v1374 = vsel %vm643, %v1368, %v1369
        %v1375 = vsel %vm643, %v1367, %v1368
        %v1376 = vsel %vm643, %v1366, %v1367
        %v1377 = vsel %vm643, %v1365, %v1366
        %v1378 = vsel %vm643, %v1364, %v1365
        %v1379 = vsel %vm643, %v1363, %v1364
        %v1380 = vsel %vm643, %v1362, %v1363
        %v1381 = vsel %vm643, %v1361, %v1362
        %v1382 = vsel %vm643, %v1360, %v1361
        %v1383 = vsel %vm643, %v1359, %v1360
        %v1384 = vsel %vm643, %v1358, %v1359
        %v1385 = vsel %vm643, %v1357, %v1358
        %v1386 = vsel %vm643, %v1356, %v1357
        %v1387 = vsel %vm643, %v1371, %v1356
        %v1388 = vsel %vm676, 0.0, %v1386
        %v1389 = vsel %vm677, 0.0, %v1385
        %v1390 = vsel %vm678, 0.0, %v1384
        %v1391 = vsel %vm679, 0.0, %v1383
        %v1392 = vsel %vm680, 0.0, %v1382
        %v1393 = vsel %vm681, 0.0, %v1381
        %v1394 = vsel %vm682, 0.0, %v1380
        %v1395 = vsel %vm683, 0.0, %v1379
        %v1396 = vsel %vm684, 0.0, %v1378
        %v1397 = vsel %vm685, 0.0, %v1377
        %v1398 = vsel %vm686, 0.0, %v1376
        %v1399 = vsel %vm687, 0.0, %v1375
        %v1400 = vsel %vm688, 0.0, %v1374
        %v1401 = vsel %vm689, 0.0, %v1373
        %v1402 = vsel %vm690, 0.0, %v1372
        %v1403 = vsel %vm691, 0.0, %v1387
        %v1404 = vld [vmem:[#allocation5] sm:$0xff]
        %v1405 = vld [vmem:[#allocation5 + $0x8] sm:$0xff]
        %v1406 = vld [vmem:[#allocation5 + $0x10] sm:$0xff]
        %v1407 = vld [vmem:[#allocation5 + $0x18] sm:$0xff]
        %v1408 = vld [vmem:[#allocation5 + $0x20] sm:$0xff]
        %v1409 = vld [vmem:[#allocation5 + $0x28] sm:$0xff]
        %v1410 = vld [vmem:[#allocation5 + $0x30] sm:$0xff]
        %v1411 = vld [vmem:[#allocation5 + $0x38] sm:$0xff]
        %v1412 = vld [vmem:[#allocation5 + $0x40] sm:$0xff]
        %v1413 = vld [vmem:[#allocation5 + $0x48] sm:$0xff]
        %v1414 = vld [vmem:[#allocation5 + $0x50] sm:$0xff]
        %v1415 = vld [vmem:[#allocation5 + $0x58] sm:$0xff]
        %v1416 = vld [vmem:[#allocation5 + $0x60] sm:$0xff]
        %v1417 = vld [vmem:[#allocation5 + $0x68] sm:$0xff]
        %v1418 = vld [vmem:[#allocation5 + $0x70] sm:$0xff]
        %v1419 = vld [vmem:[#allocation5 + $0x78] sm:$0xff]
        %v1420 = vld [vmem:[%s724] sm:$0xff]
        %v1421 = vld [vmem:[%s724 + $0x8] sm:$0xff]
        %v1422 = vld [vmem:[%s724 + $0x10] sm:$0xff]
        %v1423 = vld [vmem:[%s724 + $0x18] sm:$0xff]
        %v1424 = vld [vmem:[%s724 + $0x20] sm:$0xff]
        %v1425 = vld [vmem:[%s724 + $0x28] sm:$0xff]
        %v1426 = vld [vmem:[%s724 + $0x30] sm:$0xff]
        %v1427 = vld [vmem:[%s724 + $0x38] sm:$0xff]
        %v1428 = vld [vmem:[%s724 + $0x40] sm:$0xff]
        %v1429 = vld [vmem:[%s724 + $0x48] sm:$0xff]
        %v1430 = vld [vmem:[%s724 + $0x50] sm:$0xff]
        %v1431 = vld [vmem:[%s724 + $0x58] sm:$0xff]
        %v1432 = vld [vmem:[%s724 + $0x60] sm:$0xff]
        %v1433 = vld [vmem:[%s724 + $0x68] sm:$0xff]
        %v1434 = vld [vmem:[%s724 + $0x70] sm:$0xff]
        %v1435 = vld [vmem:[%s724 + $0x78] sm:$0xff]
        %1436 = vmatpush.msra.mxu0 %v1435
        %1437 = vmatpush.msra.mxu0 %v1434
        %1438 = vmatpush.msra.mxu0 %v1433
        %1439 = vmatpush.msra.mxu0 %v1432
        %1440 = vmatpush.msra.mxu0 %v1431
        %1441 = vmatpush.msra.mxu0 %v1430
        %1442 = vmatpush.msra.mxu0 %v1429
        %1443 = vmatpush.msra.mxu0 %v1428
        %1444 = vmatpush.msra.mxu0 %v1427
        %1445 = vmatpush.msra.mxu0 %v1426
        %1446 = vmatpush.msra.mxu0 %v1425
        %1447 = vmatpush.msra.mxu0 %v1424
        %1448 = vmatpush.msra.mxu0 %v1423
        %1449 = vmatpush.msra.mxu0 %v1422
        %1450 = vmatpush.msra.mxu0 %v1421
        %1451 = vmatpush.msra.mxu0 %v1420
        %1452 = vmatmul.f32.gmra.mxu0 %v1261
        %v1453 = vpop.f32.mrf.mxu0
        %v1454 = vadd.f32 0.0, %v1453
        %1455 = vmatmul.f32.gmra.mxu0 %v1264
        %v1456 = vpop.f32.mrf.mxu0
        %v1457 = vadd.f32 0.0, %v1456
        %1458 = vmatmul.f32.gmra.mxu0 %v1267
        %v1459 = vpop.f32.mrf.mxu0
        %v1460 = vadd.f32 0.0, %v1459
        %1461 = vmatmul.f32.gmra.mxu0 %v1270
        %v1462 = vpop.f32.mrf.mxu0
        %v1463 = vadd.f32 0.0, %v1462
        %1464 = vmatmul.f32.gmra.mxu0 %v1273
        %v1465 = vpop.f32.mrf.mxu0
        %v1466 = vadd.f32 0.0, %v1465
        %1467 = vmatmul.f32.gmra.mxu0 %v1276
        %v1468 = vpop.f32.mrf.mxu0
        %v1469 = vadd.f32 0.0, %v1468
        %1470 = vmatmul.f32.gmra.mxu0 %v1279
        %v1471 = vpop.f32.mrf.mxu0
        %v1472 = vadd.f32 0.0, %v1471
        %1473 = vmatmul.f32.gmra.mxu0 %v1282
        %v1474 = vpop.f32.mrf.mxu0
        %v1475 = vadd.f32 0.0, %v1474
        %1476 = vmatmul.f32.gmra.mxu0 %v1285
        %v1477 = vpop.f32.mrf.mxu0
        %v1478 = vadd.f32 0.0, %v1477
        %1479 = vmatmul.f32.gmra.mxu0 %v1288
        %v1480 = vpop.f32.mrf.mxu0
        %v1481 = vadd.f32 0.0, %v1480
        %1482 = vmatmul.f32.gmra.mxu0 %v1291
        %v1483 = vpop.f32.mrf.mxu0
        %v1484 = vadd.f32 0.0, %v1483
        %1485 = vmatmul.f32.gmra.mxu0 %v1294
        %v1486 = vpop.f32.mrf.mxu0
        %v1487 = vadd.f32 0.0, %v1486
        %1488 = vmatmul.f32.gmra.mxu0 %v1297
        %v1489 = vpop.f32.mrf.mxu0
        %v1490 = vadd.f32 0.0, %v1489
        %1491 = vmatmul.f32.gmra.mxu0 %v1300
        %v1492 = vpop.f32.mrf.mxu0
        %v1493 = vadd.f32 0.0, %v1492
        %1494 = vmatmul.f32.gmra.mxu0 %v1303
        %v1495 = vpop.f32.mrf.mxu0
        %v1496 = vadd.f32 0.0, %v1495
        %1497 = vmatmul.f32.gmra.mxu0 %v1306
        %v1498 = vpop.f32.mrf.mxu0
        %v1499 = vadd.f32 0.0, %v1498
        %1500 = vdwg.mxu0
        %1501 = vmatpush.msra.mxu0 %v1419
        %1502 = vmatpush.msra.mxu0 %v1418
        %1503 = vmatpush.msra.mxu0 %v1417
        %1504 = vmatpush.msra.mxu0 %v1416
        %1505 = vmatpush.msra.mxu0 %v1415
        %1506 = vmatpush.msra.mxu0 %v1414
        %1507 = vmatpush.msra.mxu0 %v1413
        %1508 = vmatpush.msra.mxu0 %v1412
        %1509 = vmatpush.msra.mxu0 %v1411
        %1510 = vmatpush.msra.mxu0 %v1410
        %1511 = vmatpush.msra.mxu0 %v1409
        %1512 = vmatpush.msra.mxu0 %v1408
        %1513 = vmatpush.msra.mxu0 %v1407
        %1514 = vmatpush.msra.mxu0 %v1406
        %1515 = vmatpush.msra.mxu0 %v1405
        %1516 = vmatpush.msra.mxu0 %v1404
        %1517 = vmatmul.f32.gmra.mxu0 %v1340
        %v1518 = vpop.f32.mrf.mxu0
        %v1519 = vadd.f32 %v1454, %v1518
        %1520 = vmatmul.f32.gmra.mxu0 %v1341
        %v1521 = vpop.f32.mrf.mxu0
        %v1522 = vadd.f32 %v1457, %v1521
        %1523 = vmatmul.f32.gmra.mxu0 %v1342
        %v1524 = vpop.f32.mrf.mxu0
        %v1525 = vadd.f32 %v1460, %v1524
        %1526 = vmatmul.f32.gmra.mxu0 %v1343
        %v1527 = vpop.f32.mrf.mxu0
        %v1528 = vadd.f32 %v1463, %v1527
        %1529 = vmatmul.f32.gmra.mxu0 %v1344
        %v1530 = vpop.f32.mrf.mxu0
        %v1531 = vadd.f32 %v1466, %v1530
        %1532 = vmatmul.f32.gmra.mxu0 %v1345
        %v1533 = vpop.f32.mrf.mxu0
        %v1534 = vadd.f32 %v1469, %v1533
        %1535 = vmatmul.f32.gmra.mxu0 %v1346
        %v1536 = vpop.f32.mrf.mxu0
        %v1537 = vadd.f32 %v1472, %v1536
        %1538 = vmatmul.f32.gmra.mxu0 %v1347
        %v1539 = vpop.f32.mrf.mxu0
        %v1540 = vadd.f32 %v1475, %v1539
        %1541 = vmatmul.f32.gmra.mxu0 %v1348
        %v1542 = vpop.f32.mrf.mxu0
        %v1543 = vadd.f32 %v1478, %v1542
        %1544 = vmatmul.f32.gmra.mxu0 %v1349
        %v1545 = vpop.f32.mrf.mxu0
        %v1546 = vadd.f32 %v1481, %v1545
        %1547 = vmatmul.f32.gmra.mxu0 %v1350
        %v1548 = vpop.f32.mrf.mxu0
        %v1549 = vadd.f32 %v1484, %v1548
        %1550 = vmatmul.f32.gmra.mxu0 %v1351
        %v1551 = vpop.f32.mrf.mxu0
        %v1552 = vadd.f32 %v1487, %v1551
        %1553 = vmatmul.f32.gmra.mxu0 %v1352
        %v1554 = vpop.f32.mrf.mxu0
        %v1555 = vadd.f32 %v1490, %v1554
        %1556 = vmatmul.f32.gmra.mxu0 %v1353
        %v1557 = vpop.f32.mrf.mxu0
        %v1558 = vadd.f32 %v1493, %v1557
        %1559 = vmatmul.f32.gmra.mxu0 %v1354
        %v1560 = vpop.f32.mrf.mxu0
        %v1561 = vadd.f32 %v1496, %v1560
        %1562 = vmatmul.f32.gmra.mxu0 %v1355
        %v1563 = vpop.f32.mrf.mxu0
        %v1564 = vadd.f32 %v1499, %v1563
        %1565 = vdwg.mxu0
        %v1566 = vld [vmem:[%s871] sm:$0xff]
        %v1567 = vld [vmem:[%s871 + $0x8] sm:$0xff]
        %v1568 = vld [vmem:[%s871 + $0x10] sm:$0xff]
        %v1569 = vld [vmem:[%s871 + $0x18] sm:$0xff]
        %v1570 = vld [vmem:[%s871 + $0x20] sm:$0xff]
        %v1571 = vld [vmem:[%s871 + $0x28] sm:$0xff]
        %v1572 = vld [vmem:[%s871 + $0x30] sm:$0xff]
        %v1573 = vld [vmem:[%s871 + $0x38] sm:$0xff]
        %v1574 = vld [vmem:[%s871 + $0x40] sm:$0xff]
        %v1575 = vld [vmem:[%s871 + $0x48] sm:$0xff]
        %v1576 = vld [vmem:[%s871 + $0x50] sm:$0xff]
        %v1577 = vld [vmem:[%s871 + $0x58] sm:$0xff]
        %v1578 = vld [vmem:[%s871 + $0x60] sm:$0xff]
        %v1579 = vld [vmem:[%s871 + $0x68] sm:$0xff]
        %v1580 = vld [vmem:[%s871 + $0x70] sm:$0xff]
        %v1581 = vld [vmem:[%s871 + $0x78] sm:$0xff]
        %1582 = vmatpush.msra.mxu0 %v1581
        %1583 = vmatpush.msra.mxu0 %v1580
        %1584 = vmatpush.msra.mxu0 %v1579
        %1585 = vmatpush.msra.mxu0 %v1578
        %1586 = vmatpush.msra.mxu0 %v1577
        %1587 = vmatpush.msra.mxu0 %v1576
        %1588 = vmatpush.msra.mxu0 %v1575
        %1589 = vmatpush.msra.mxu0 %v1574
        %1590 = vmatpush.msra.mxu0 %v1573
        %1591 = vmatpush.msra.mxu0 %v1572
        %1592 = vmatpush.msra.mxu0 %v1571
        %1593 = vmatpush.msra.mxu0 %v1570
        %1594 = vmatpush.msra.mxu0 %v1569
        %1595 = vmatpush.msra.mxu0 %v1568
        %1596 = vmatpush.msra.mxu0 %v1567
        %1597 = vmatpush.msra.mxu0 %v1566
        %1598 = vmatmul.f32.gmra.mxu0 %v1388
        %v1599 = vpop.f32.mrf.mxu0
        %v1600 = vadd.f32 0.0, %v1599
        %1601 = vmatmul.f32.gmra.mxu0 %v1389
        %v1602 = vpop.f32.mrf.mxu0
        %v1603 = vadd.f32 0.0, %v1602
        %1604 = vmatmul.f32.gmra.mxu0 %v1390
        %v1605 = vpop.f32.mrf.mxu0
        %v1606 = vadd.f32 0.0, %v1605
        %1607 = vmatmul.f32.gmra.mxu0 %v1391
        %v1608 = vpop.f32.mrf.mxu0
        %v1609 = vadd.f32 0.0, %v1608
        %1610 = vmatmul.f32.gmra.mxu0 %v1392
        %v1611 = vpop.f32.mrf.mxu0
        %v1612 = vadd.f32 0.0, %v1611
        %1613 = vmatmul.f32.gmra.mxu0 %v1393
        %v1614 = vpop.f32.mrf.mxu0
        %v1615 = vadd.f32 0.0, %v1614
        %1616 = vmatmul.f32.gmra.mxu0 %v1394
        %v1617 = vpop.f32.mrf.mxu0
        %v1618 = vadd.f32 0.0, %v1617
        %1619 = vmatmul.f32.gmra.mxu0 %v1395
        %v1620 = vpop.f32.mrf.mxu0
        %v1621 = vadd.f32 0.0, %v1620
        %1622 = vmatmul.f32.gmra.mxu0 %v1396
        %v1623 = vpop.f32.mrf.mxu0
        %v1624 = vadd.f32 0.0, %v1623
        %1625 = vmatmul.f32.gmra.mxu0 %v1397
        %v1626 = vpop.f32.mrf.mxu0
        %v1627 = vadd.f32 0.0, %v1626
        %1628 = vmatmul.f32.gmra.mxu0 %v1398
        %v1629 = vpop.f32.mrf.mxu0
        %v1630 = vadd.f32 0.0, %v1629
        %1631 = vmatmul.f32.gmra.mxu0 %v1399
        %v1632 = vpop.f32.mrf.mxu0
        %v1633 = vadd.f32 0.0, %v1632
        %1634 = vmatmul.f32.gmra.mxu0 %v1400
        %v1635 = vpop.f32.mrf.mxu0
        %v1636 = vadd.f32 0.0, %v1635
        %1637 = vmatmul.f32.gmra.mxu0 %v1401
        %v1638 = vpop.f32.mrf.mxu0
        %v1639 = vadd.f32 0.0, %v1638
        %1640 = vmatmul.f32.gmra.mxu0 %v1402
        %v1641 = vpop.f32.mrf.mxu0
        %v1642 = vadd.f32 0.0, %v1641
        %1643 = vmatmul.f32.gmra.mxu0 %v1403
        %v1644 = vpop.f32.mrf.mxu0
        %v1645 = vadd.f32 0.0, %v1644
        %1646 = vdwg.mxu0
        %v1647 = vadd.f32 %v1519, %v1600
        %v1648 = vadd.f32 %v1522, %v1603
        %v1649 = vadd.f32 %v1525, %v1606
        %v1650 = vadd.f32 %v1528, %v1609
        %v1651 = vadd.f32 %v1531, %v1612
        %v1652 = vadd.f32 %v1534, %v1615
        %v1653 = vadd.f32 %v1537, %v1618
        %v1654 = vadd.f32 %v1540, %v1621
        %v1655 = vadd.f32 %v1543, %v1624
        %v1656 = vadd.f32 %v1546, %v1627
        %v1657 = vadd.f32 %v1549, %v1630
        %v1658 = vadd.f32 %v1552, %v1633
        %v1659 = vadd.f32 %v1555, %v1636
        %v1660 = vadd.f32 %v1558, %v1639
        %v1661 = vadd.f32 %v1561, %v1642
        %v1662 = vadd.f32 %v1564, %v1645
        %v1663 = vld [vmem:[%s3] sm:$0x1]
        %v1665 = vperm.slane %v1663, 0
        %v1667 = vadd.f32 %v1647, %v1665
        %v1668 = vadd.f32 %v1648, %v1665
        %v1669 = vadd.f32 %v1649, %v1665
        %v1670 = vadd.f32 %v1650, %v1665
        %v1671 = vadd.f32 %v1651, %v1665
        %v1672 = vadd.f32 %v1652, %v1665
        %v1673 = vadd.f32 %v1653, %v1665
        %v1674 = vadd.f32 %v1654, %v1665
        %v1675 = vadd.f32 %v1655, %v1665
        %v1676 = vadd.f32 %v1656, %v1665
        %v1677 = vadd.f32 %v1657, %v1665
        %v1678 = vadd.f32 %v1658, %v1665
        %v1679 = vadd.f32 %v1659, %v1665
        %v1680 = vadd.f32 %v1660, %v1665
        %v1681 = vadd.f32 %v1661, %v1665
        %v1682 = vadd.f32 %v1662, %v1665
        %v1683 = vmax.f32 %v1667, 0.0
        %v1684 = vmax.f32 %v1668, 0.0
        %v1685 = vmax.f32 %v1669, 0.0
        %v1686 = vmax.f32 %v1670, 0.0
        %v1687 = vmax.f32 %v1671, 0.0
        %v1688 = vmax.f32 %v1672, 0.0
        %v1689 = vmax.f32 %v1673, 0.0
        %v1690 = vmax.f32 %v1674, 0.0
        %v1691 = vmax.f32 %v1675, 0.0
        %v1692 = vmax.f32 %v1676, 0.0
        %v1693 = vmax.f32 %v1677, 0.0
        %v1694 = vmax.f32 %v1678, 0.0
        %v1695 = vmax.f32 %v1679, 0.0
        %v1696 = vmax.f32 %v1680, 0.0
        %v1697 = vmax.f32 %v1681, 0.0
        %v1698 = vmax.f32 %v1682, 0.0
        %v1699 = vrot.slane %v1683, 1
        %v1700 = vrot.slane %v1684, 1
        %v1701 = vrot.slane %v1685, 1
        %v1702 = vrot.slane %v1686, 1
        %v1703 = vrot.slane %v1687, 1
        %v1704 = vrot.slane %v1688, 1
        %v1705 = vrot.slane %v1689, 1
        %v1706 = vrot.slane %v1690, 1
        %v1707 = vrot.slane %v1691, 1
        %v1708 = vrot.slane %v1692, 1
        %v1709 = vrot.slane %v1693, 1
        %v1710 = vrot.slane %v1694, 1
        %v1711 = vrot.slane %v1695, 1
        %v1712 = vrot.slane %v1696, 1
        %v1713 = vrot.slane %v1697, 1
        %v1714 = vrot.slane %v1698, 1
        %v1715 = vsel %vm643, %v1713, %v1714
        %v1716 = vsel %vm643, %v1712, %v1713
        %v1717 = vsel %vm643, %v1711, %v1712
        %v1718 = vsel %vm643, %v1710, %v1711
        %v1719 = vsel %vm643, %v1709, %v1710
        %v1720 = vsel %vm643, %v1708, %v1709
        %v1721 = vsel %vm643, %v1707, %v1708
        %v1722 = vsel %vm643, %v1706, %v1707
        %v1723 = vsel %vm643, %v1705, %v1706
        %v1724 = vsel %vm643, %v1704, %v1705
        %v1725 = vsel %vm643, %v1703, %v1704
        %v1726 = vsel %vm643, %v1702, %v1703
        %v1727 = vsel %vm643, %v1701, %v1702
        %v1728 = vsel %vm643, %v1700, %v1701
        %v1729 = vsel %vm643, %v1699, %v1700
        %v1730 = vsel %vm643, %v1714, %v1699
        %v1731 = vmax.f32 %v1683, %v1729
        %v1732 = vmax.f32 %v1684, %v1728
        %v1733 = vmax.f32 %v1685, %v1727
        %v1734 = vmax.f32 %v1686, %v1726
        %v1735 = vmax.f32 %v1687, %v1725
        %v1736 = vmax.f32 %v1688, %v1724
        %v1737 = vmax.f32 %v1689, %v1723
        %v1738 = vmax.f32 %v1690, %v1722
        %v1739 = vmax.f32 %v1691, %v1721
        %v1740 = vmax.f32 %v1692, %v1720
        %v1741 = vmax.f32 %v1693, %v1719
        %v1742 = vmax.f32 %v1694, %v1718
        %v1743 = vmax.f32 %v1695, %v1717
        %v1744 = vmax.f32 %v1696, %v1716
        %v1745 = vmax.f32 %v1697, %v1715
        %v1746 = vmax.f32 %v1698, %v1730
        %v1747 = vrot.slane %v1683, 2
        %v1748 = vrot.slane %v1684, 2
        %v1749 = vrot.slane %v1685, 2
        %v1750 = vrot.slane %v1686, 2
        %v1751 = vrot.slane %v1687, 2
        %v1752 = vrot.slane %v1688, 2
        %v1753 = vrot.slane %v1689, 2
        %v1754 = vrot.slane %v1690, 2
        %v1755 = vrot.slane %v1691, 2
        %v1756 = vrot.slane %v1692, 2
        %v1757 = vrot.slane %v1693, 2
        %v1758 = vrot.slane %v1694, 2
        %v1759 = vrot.slane %v1695, 2
        %v1760 = vrot.slane %v1696, 2
        %v1761 = vrot.slane %v1697, 2
        %v1762 = vrot.slane %v1698, 2
        %v1763 = vsel %vm1069, %v1761, %v1762
        %v1764 = vsel %vm1069, %v1760, %v1761
        %v1765 = vsel %vm1069, %v1759, %v1760
        %v1766 = vsel %vm1069, %v1758, %v1759
        %v1767 = vsel %vm1069, %v1757, %v1758
        %v1768 = vsel %vm1069, %v1756, %v1757
        %v1769 = vsel %vm1069, %v1755, %v1756
        %v1770 = vsel %vm1069, %v1754, %v1755
        %v1771 = vsel %vm1069, %v1753, %v1754
        %v1772 = vsel %vm1069, %v1752, %v1753
        %v1773 = vsel %vm1069, %v1751, %v1752
        %v1774 = vsel %vm1069, %v1750, %v1751
        %v1775 = vsel %vm1069, %v1749, %v1750
        %v1776 = vsel %vm1069, %v1748, %v1749
        %v1777 = vsel %vm1069, %v1747, %v1748
        %v1778 = vsel %vm1069, %v1762, %v1747
        %v1779 = vmax.f32 %v1731, %v1777
        %v1780 = vmax.f32 %v1732, %v1776
        %v1781 = vmax.f32 %v1733, %v1775
        %v1782 = vmax.f32 %v1734, %v1774
        %v1783 = vmax.f32 %v1735, %v1773
        %v1784 = vmax.f32 %v1736, %v1772
        %v1785 = vmax.f32 %v1737, %v1771
        %v1786 = vmax.f32 %v1738, %v1770
        %v1787 = vmax.f32 %v1739, %v1769
        %v1788 = vmax.f32 %v1740, %v1768
        %v1789 = vmax.f32 %v1741, %v1767
        %v1790 = vmax.f32 %v1742, %v1766
        %v1791 = vmax.f32 %v1743, %v1765
        %v1792 = vmax.f32 %v1744, %v1764
        %v1793 = vmax.f32 %v1745, %v1763
        %v1794 = vmax.f32 %v1746, %v1778
        %v1795 = vrot.slane %v1683, 3
        %v1796 = vrot.slane %v1684, 3
        %v1797 = vrot.slane %v1685, 3
        %v1798 = vrot.slane %v1686, 3
        %v1799 = vrot.slane %v1687, 3
        %v1800 = vrot.slane %v1688, 3
        %v1801 = vrot.slane %v1689, 3
        %v1802 = vrot.slane %v1690, 3
        %v1803 = vrot.slane %v1691, 3
        %v1804 = vrot.slane %v1692, 3
        %v1805 = vrot.slane %v1693, 3
        %v1806 = vrot.slane %v1694, 3
        %v1807 = vrot.slane %v1695, 3
        %v1808 = vrot.slane %v1696, 3
        %v1809 = vrot.slane %v1697, 3
        %v1810 = vrot.slane %v1698, 3
        %v1811 = vsel %vm1118, %v1809, %v1810
        %v1812 = vsel %vm1118, %v1808, %v1809
        %v1813 = vsel %vm1118, %v1807, %v1808
        %v1814 = vsel %vm1118, %v1806, %v1807
        %v1815 = vsel %vm1118, %v1805, %v1806
        %v1816 = vsel %vm1118, %v1804, %v1805
        %v1817 = vsel %vm1118, %v1803, %v1804
        %v1818 = vsel %vm1118, %v1802, %v1803
        %v1819 = vsel %vm1118, %v1801, %v1802
        %v1820 = vsel %vm1118, %v1800, %v1801
        %v1821 = vsel %vm1118, %v1799, %v1800
        %v1822 = vsel %vm1118, %v1798, %v1799
        %v1823 = vsel %vm1118, %v1797, %v1798
        %v1824 = vsel %vm1118, %v1796, %v1797
        %v1825 = vsel %vm1118, %v1795, %v1796
        %v1826 = vsel %vm1118, %v1810, %v1795
        %v1827 = vmax.f32 %v1779, %v1825
        %v1828 = vmax.f32 %v1780, %v1824
        %v1829 = vmax.f32 %v1781, %v1823
        %v1830 = vmax.f32 %v1782, %v1822
        %v1831 = vmax.f32 %v1783, %v1821
        %v1832 = vmax.f32 %v1784, %v1820
        %v1833 = vmax.f32 %v1785, %v1819
        %v1834 = vmax.f32 %v1786, %v1818
        %v1835 = vmax.f32 %v1787, %v1817
        %v1836 = vmax.f32 %v1788, %v1816
        %v1837 = vmax.f32 %v1789, %v1815
        %v1838 = vmax.f32 %v1790, %v1814
        %v1839 = vmax.f32 %v1791, %v1813
        %v1840 = vmax.f32 %v1792, %v1812
        %v1841 = vmax.f32 %v1793, %v1811
        %v1842 = vmax.f32 %v1794, %v1826
        %1843 = vst [vmem:[#allocation3] sm:$0xff] %v1827
        %1844 = vst [vmem:[#allocation3 + $0x8] sm:$0xff] %v1828
        %1845 = vst [vmem:[#allocation3 + $0x10] sm:$0xff] %v1829
        %1846 = vst [vmem:[#allocation3 + $0x18] sm:$0xff] %v1830
        %1847 = vst [vmem:[#allocation3 + $0x20] sm:$0xff] %v1831
        %1848 = vst [vmem:[#allocation3 + $0x28] sm:$0xff] %v1832
        %1849 = vst [vmem:[#allocation3 + $0x30] sm:$0xff] %v1833
        %1850 = vst [vmem:[#allocation3 + $0x38] sm:$0xff] %v1834
        %1851 = vst [vmem:[#allocation3 + $0x40] sm:$0xff] %v1835
        %1852 = vst [vmem:[#allocation3 + $0x48] sm:$0xff] %v1836
        %1853 = vst [vmem:[#allocation3 + $0x50] sm:$0xff] %v1837
        %1854 = vst [vmem:[#allocation3 + $0x58] sm:$0xff] %v1838
        %1855 = vst [vmem:[#allocation3 + $0x60] sm:$0xff] %v1839
        %1856 = vst [vmem:[#allocation3 + $0x68] sm:$0xff] %v1840
        %1857 = vst [vmem:[#allocation3 + $0x70] sm:$0xff] %v1841
        %1858 = vst [vmem:[#allocation3 + $0x78] sm:$0xff] %v1842
        %v1859 = vld [vmem:[#allocation3] ss:$4 sm:$0xff]
        %v1860 = vld [vmem:[%s1168] ss:$4 sm:$0xff]
        %v1861 = vld [vmem:[%s1170] ss:$4 sm:$0xff]
        %v1862 = vld [vmem:[%s1172] ss:$4 sm:$0xff]
        %s1863 = scalar_lea.vmem [#allocation2], 32
        %1864 = vst [vmem:[%s1863] sm:$0xff] %v1859
        %1865 = vst [vmem:[%s1863 + $0x8] sm:$0xff] %v1860
        %1866 = vst [vmem:[%s1863 + $0x10] sm:$0xff] %v1861
        %1867 = vst [vmem:[%s1863 + $0x18] sm:$0xff] %v1862
        %s1868 = scalar_lea.vmem %s347, 256
        %v1869 = vld [vmem:[%s1868] sm:$0xff]
        %v1870 = vld [vmem:[%s1868 + $0x8] sm:$0xff]
        %v1871 = vld [vmem:[%s1868 + $0x10] sm:$0xff]
        %v1872 = vld [vmem:[%s1868 + $0x18] sm:$0xff]
        %v1873 = vld [vmem:[%s1868 + $0x20] sm:$0xff]
        %v1874 = vld [vmem:[%s1868 + $0x28] sm:$0xff]
        %v1875 = vld [vmem:[%s1868 + $0x30] sm:$0xff]
        %v1876 = vld [vmem:[%s1868 + $0x38] sm:$0xff]
        %v1877 = vld [vmem:[%s1868 + $0x40] sm:$0xff]
        %v1878 = vld [vmem:[%s1868 + $0x48] sm:$0xff]
        %v1879 = vld [vmem:[%s1868 + $0x50] sm:$0xff]
        %v1880 = vld [vmem:[%s1868 + $0x58] sm:$0xff]
        %v1881 = vld [vmem:[%s1868 + $0x60] sm:$0xff]
        %v1882 = vld [vmem:[%s1868 + $0x68] sm:$0xff]
        %v1883 = vld [vmem:[%s1868 + $0x70] sm:$0xff]
        %v1884 = vld [vmem:[%s1868 + $0x78] sm:$0xff]
        %v1886 = vsel %vm432, %v1869, 0
        %v1889 = vsel %vm432, %v1870, 0
        %v1892 = vsel %vm432, %v1871, 0
        %v1895 = vsel %vm432, %v1872, 0
        %v1898 = vsel %vm432, %v1873, 0
        %v1901 = vsel %vm432, %v1874, 0
        %v1904 = vsel %vm432, %v1875, 0
        %v1907 = vsel %vm432, %v1876, 0
        %v1910 = vsel %vm432, %v1877, 0
        %v1913 = vsel %vm432, %v1878, 0
        %v1916 = vsel %vm432, %v1879, 0
        %v1919 = vsel %vm432, %v1880, 0
        %v1922 = vsel %vm432, %v1881, 0
        %v1925 = vsel %vm432, %v1882, 0
        %v1928 = vsel %vm432, %v1883, 0
        %v1931 = vsel %vm432, %v1884, 0
        %1933 = vmatpush.msra.mxu0 0.0
        %1934 = vmatpush.msra.mxu0 0.0
        %1935 = vmatpush.msra.mxu0 0.0
        %1936 = vmatpush.msra.mxu0 0.0
        %1937 = vmatpush.msra.mxu0 0.0
        %1938 = vmatpush.msra.mxu0 0.0
        %1939 = vmatpush.msra.mxu0 0.0
        %1940 = vmatpush.msra.mxu0 0.0
        %1941 = vmatpush.msra.mxu0 0.0
        %1942 = vmatpush.msra.mxu0 0.0
        %1943 = vmatpush.msra.mxu0 0.0
        %1944 = vmatpush.msra.mxu0 0.0
        %1945 = vmatpush.msra.mxu0 0.0
        %1946 = vmatpush.msra.mxu0 0.0
        %1947 = vmatpush.msra.mxu0 %v415
        %1948 = vmatpush.msra.mxu0 %v414
        %1949 = vmatmul.f32.gmra.mxu0 %v1886
        %v1950 = vpop.f32.mrf.mxu0
        %v1951 = vadd.f32 0.0, %v1950
        %1952 = vmatmul.f32.gmra.mxu0 %v1889
        %v1953 = vpop.f32.mrf.mxu0
        %v1954 = vadd.f32 0.0, %v1953
        %1955 = vmatmul.f32.gmra.mxu0 %v1892
        %v1956 = vpop.f32.mrf.mxu0
        %v1957 = vadd.f32 0.0, %v1956
        %1958 = vmatmul.f32.gmra.mxu0 %v1895
        %v1959 = vpop.f32.mrf.mxu0
        %v1960 = vadd.f32 0.0, %v1959
        %1961 = vmatmul.f32.gmra.mxu0 %v1898
        %v1962 = vpop.f32.mrf.mxu0
        %v1963 = vadd.f32 0.0, %v1962
        %1964 = vmatmul.f32.gmra.mxu0 %v1901
        %v1965 = vpop.f32.mrf.mxu0
        %v1966 = vadd.f32 0.0, %v1965
        %1967 = vmatmul.f32.gmra.mxu0 %v1904
        %v1968 = vpop.f32.mrf.mxu0
        %v1969 = vadd.f32 0.0, %v1968
        %1970 = vmatmul.f32.gmra.mxu0 %v1907
        %v1971 = vpop.f32.mrf.mxu0
        %v1972 = vadd.f32 0.0, %v1971
        %1973 = vmatmul.f32.gmra.mxu0 %v1910
        %v1974 = vpop.f32.mrf.mxu0
        %v1975 = vadd.f32 0.0, %v1974
        %1976 = vmatmul.f32.gmra.mxu0 %v1913
        %v1977 = vpop.f32.mrf.mxu0
        %v1978 = vadd.f32 0.0, %v1977
        %1979 = vmatmul.f32.gmra.mxu0 %v1916
        %v1980 = vpop.f32.mrf.mxu0
        %v1981 = vadd.f32 0.0, %v1980
        %1982 = vmatmul.f32.gmra.mxu0 %v1919
        %v1983 = vpop.f32.mrf.mxu0
        %v1984 = vadd.f32 0.0, %v1983
        %1985 = vmatmul.f32.gmra.mxu0 %v1922
        %v1986 = vpop.f32.mrf.mxu0
        %v1987 = vadd.f32 0.0, %v1986
        %1988 = vmatmul.f32.gmra.mxu0 %v1925
        %v1989 = vpop.f32.mrf.mxu0
        %v1990 = vadd.f32 0.0, %v1989
        %1991 = vmatmul.f32.gmra.mxu0 %v1928
        %v1992 = vpop.f32.mrf.mxu0
        %v1993 = vadd.f32 0.0, %v1992
        %1994 = vmatmul.f32.gmra.mxu0 %v1931
        %v1995 = vpop.f32.mrf.mxu0
        %v1996 = vadd.f32 0.0, %v1995
        %1997 = vdwg.mxu0
        %v1998 = vrot.slane %v1951, 7
        %v1999 = vrot.slane %v1954, 7
        %v2000 = vrot.slane %v1957, 7
        %v2001 = vrot.slane %v1960, 7
        %v2002 = vrot.slane %v1963, 7
        %v2003 = vrot.slane %v1966, 7
        %v2004 = vrot.slane %v1969, 7
        %v2005 = vrot.slane %v1972, 7
        %v2006 = vrot.slane %v1975, 7
        %v2007 = vrot.slane %v1978, 7
        %v2008 = vrot.slane %v1981, 7
        %v2009 = vrot.slane %v1984, 7
        %v2010 = vrot.slane %v1987, 7
        %v2011 = vrot.slane %v1990, 7
        %v2012 = vrot.slane %v1993, 7
        %v2013 = vrot.slane %v1996, 7
        %v2014 = vsel %vm562, %v2012, %v2013
        %v2015 = vsel %vm562, %v2011, %v2012
        %v2016 = vsel %vm562, %v2010, %v2011
        %v2017 = vsel %vm562, %v2009, %v2010
        %v2018 = vsel %vm562, %v2008, %v2009
        %v2019 = vsel %vm562, %v2007, %v2008
        %v2020 = vsel %vm562, %v2006, %v2007
        %v2021 = vsel %vm562, %v2005, %v2006
        %v2022 = vsel %vm562, %v2004, %v2005
        %v2023 = vsel %vm562, %v2003, %v2004
        %v2024 = vsel %vm562, %v2002, %v2003
        %v2025 = vsel %vm562, %v2001, %v2002
        %v2026 = vsel %vm562, %v2000, %v2001
        %v2027 = vsel %vm562, %v1999, %v2000
        %v2028 = vsel %vm562, %v1998, %v1999
        %v2029 = vsel %vm562, %v2013, %v1998
        %v2030 = vsel %vm595, 0.0, %v2029
        %v2031 = vsel %vm596, 0.0, %v2028
        %v2032 = vsel %vm597, 0.0, %v2027
        %v2033 = vsel %vm598, 0.0, %v2026
        %v2034 = vsel %vm599, 0.0, %v2025
        %v2035 = vsel %vm600, 0.0, %v2024
        %v2036 = vsel %vm601, 0.0, %v2023
        %v2037 = vsel %vm602, 0.0, %v2022
        %v2038 = vsel %vm603, 0.0, %v2021
        %v2039 = vsel %vm604, 0.0, %v2020
        %v2040 = vsel %vm605, 0.0, %v2019
        %v2041 = vsel %vm606, 0.0, %v2018
        %v2042 = vsel %vm607, 0.0, %v2017
        %v2043 = vsel %vm608, 0.0, %v2016
        %v2044 = vsel %vm609, 0.0, %v2015
        %v2045 = vsel %vm610, 0.0, %v2014
        %v2046 = vrot.slane %v1951, 1
        %v2047 = vrot.slane %v1954, 1
        %v2048 = vrot.slane %v1957, 1
        %v2049 = vrot.slane %v1960, 1
        %v2050 = vrot.slane %v1963, 1
        %v2051 = vrot.slane %v1966, 1
        %v2052 = vrot.slane %v1969, 1
        %v2053 = vrot.slane %v1972, 1
        %v2054 = vrot.slane %v1975, 1
        %v2055 = vrot.slane %v1978, 1
        %v2056 = vrot.slane %v1981, 1
        %v2057 = vrot.slane %v1984, 1
        %v2058 = vrot.slane %v1987, 1
        %v2059 = vrot.slane %v1990, 1
        %v2060 = vrot.slane %v1993, 1
        %v2061 = vrot.slane %v1996, 1
        %v2062 = vsel %vm643, %v2060, %v2061
        %v2063 = vsel %vm643, %v2059, %v2060
        %v2064 = vsel %vm643, %v2058, %v2059
        %v2065 = vsel %vm643, %v2057, %v2058
        %v2066 = vsel %vm643, %v2056, %v2057
        %v2067 = vsel %vm643, %v2055, %v2056
        %v2068 = vsel %vm643, %v2054, %v2055
        %v2069 = vsel %vm643, %v2053, %v2054
        %v2070 = vsel %vm643, %v2052, %v2053
        %v2071 = vsel %vm643, %v2051, %v2052
        %v2072 = vsel %vm643, %v2050, %v2051
        %v2073 = vsel %vm643, %v2049, %v2050
        %v2074 = vsel %vm643, %v2048, %v2049
        %v2075 = vsel %vm643, %v2047, %v2048
        %v2076 = vsel %vm643, %v2046, %v2047
        %v2077 = vsel %vm643, %v2061, %v2046
        %v2078 = vsel %vm676, 0.0, %v2076
        %v2079 = vsel %vm677, 0.0, %v2075
        %v2080 = vsel %vm678, 0.0, %v2074
        %v2081 = vsel %vm679, 0.0, %v2073
        %v2082 = vsel %vm680, 0.0, %v2072
        %v2083 = vsel %vm681, 0.0, %v2071
        %v2084 = vsel %vm682, 0.0, %v2070
        %v2085 = vsel %vm683, 0.0, %v2069
        %v2086 = vsel %vm684, 0.0, %v2068
        %v2087 = vsel %vm685, 0.0, %v2067
        %v2088 = vsel %vm686, 0.0, %v2066
        %v2089 = vsel %vm687, 0.0, %v2065
        %v2090 = vsel %vm688, 0.0, %v2064
        %v2091 = vsel %vm689, 0.0, %v2063
        %v2092 = vsel %vm690, 0.0, %v2062
        %v2093 = vsel %vm691, 0.0, %v2077
        %v2094 = vld [vmem:[#allocation5] sm:$0xff]
        %v2095 = vld [vmem:[#allocation5 + $0x8] sm:$0xff]
        %v2096 = vld [vmem:[#allocation5 + $0x10] sm:$0xff]
        %v2097 = vld [vmem:[#allocation5 + $0x18] sm:$0xff]
        %v2098 = vld [vmem:[#allocation5 + $0x20] sm:$0xff]
        %v2099 = vld [vmem:[#allocation5 + $0x28] sm:$0xff]
        %v2100 = vld [vmem:[#allocation5 + $0x30] sm:$0xff]
        %v2101 = vld [vmem:[#allocation5 + $0x38] sm:$0xff]
        %v2102 = vld [vmem:[#allocation5 + $0x40] sm:$0xff]
        %v2103 = vld [vmem:[#allocation5 + $0x48] sm:$0xff]
        %v2104 = vld [vmem:[#allocation5 + $0x50] sm:$0xff]
        %v2105 = vld [vmem:[#allocation5 + $0x58] sm:$0xff]
        %v2106 = vld [vmem:[#allocation5 + $0x60] sm:$0xff]
        %v2107 = vld [vmem:[#allocation5 + $0x68] sm:$0xff]
        %v2108 = vld [vmem:[#allocation5 + $0x70] sm:$0xff]
        %v2109 = vld [vmem:[#allocation5 + $0x78] sm:$0xff]
        %v2110 = vld [vmem:[%s724] sm:$0xff]
        %v2111 = vld [vmem:[%s724 + $0x8] sm:$0xff]
        %v2112 = vld [vmem:[%s724 + $0x10] sm:$0xff]
        %v2113 = vld [vmem:[%s724 + $0x18] sm:$0xff]
        %v2114 = vld [vmem:[%s724 + $0x20] sm:$0xff]
        %v2115 = vld [vmem:[%s724 + $0x28] sm:$0xff]
        %v2116 = vld [vmem:[%s724 + $0x30] sm:$0xff]
        %v2117 = vld [vmem:[%s724 + $0x38] sm:$0xff]
        %v2118 = vld [vmem:[%s724 + $0x40] sm:$0xff]
        %v2119 = vld [vmem:[%s724 + $0x48] sm:$0xff]
        %v2120 = vld [vmem:[%s724 + $0x50] sm:$0xff]
        %v2121 = vld [vmem:[%s724 + $0x58] sm:$0xff]
        %v2122 = vld [vmem:[%s724 + $0x60] sm:$0xff]
        %v2123 = vld [vmem:[%s724 + $0x68] sm:$0xff]
        %v2124 = vld [vmem:[%s724 + $0x70] sm:$0xff]
        %v2125 = vld [vmem:[%s724 + $0x78] sm:$0xff]
        %2126 = vmatpush.msra.mxu0 %v2125
        %2127 = vmatpush.msra.mxu0 %v2124
        %2128 = vmatpush.msra.mxu0 %v2123
        %2129 = vmatpush.msra.mxu0 %v2122
        %2130 = vmatpush.msra.mxu0 %v2121
        %2131 = vmatpush.msra.mxu0 %v2120
        %2132 = vmatpush.msra.mxu0 %v2119
        %2133 = vmatpush.msra.mxu0 %v2118
        %2134 = vmatpush.msra.mxu0 %v2117
        %2135 = vmatpush.msra.mxu0 %v2116
        %2136 = vmatpush.msra.mxu0 %v2115
        %2137 = vmatpush.msra.mxu0 %v2114
        %2138 = vmatpush.msra.mxu0 %v2113
        %2139 = vmatpush.msra.mxu0 %v2112
        %2140 = vmatpush.msra.mxu0 %v2111
        %2141 = vmatpush.msra.mxu0 %v2110
        %2142 = vmatmul.f32.gmra.mxu0 %v1951
        %v2143 = vpop.f32.mrf.mxu0
        %v2144 = vadd.f32 0.0, %v2143
        %2145 = vmatmul.f32.gmra.mxu0 %v1954
        %v2146 = vpop.f32.mrf.mxu0
        %v2147 = vadd.f32 0.0, %v2146
        %2148 = vmatmul.f32.gmra.mxu0 %v1957
        %v2149 = vpop.f32.mrf.mxu0
        %v2150 = vadd.f32 0.0, %v2149
        %2151 = vmatmul.f32.gmra.mxu0 %v1960
        %v2152 = vpop.f32.mrf.mxu0
        %v2153 = vadd.f32 0.0, %v2152
        %2154 = vmatmul.f32.gmra.mxu0 %v1963
        %v2155 = vpop.f32.mrf.mxu0
        %v2156 = vadd.f32 0.0, %v2155
        %2157 = vmatmul.f32.gmra.mxu0 %v1966
        %v2158 = vpop.f32.mrf.mxu0
        %v2159 = vadd.f32 0.0, %v2158
        %2160 = vmatmul.f32.gmra.mxu0 %v1969
        %v2161 = vpop.f32.mrf.mxu0
        %v2162 = vadd.f32 0.0, %v2161
        %2163 = vmatmul.f32.gmra.mxu0 %v1972
        %v2164 = vpop.f32.mrf.mxu0
        %v2165 = vadd.f32 0.0, %v2164
        %2166 = vmatmul.f32.gmra.mxu0 %v1975
        %v2167 = vpop.f32.mrf.mxu0
        %v2168 = vadd.f32 0.0, %v2167
        %2169 = vmatmul.f32.gmra.mxu0 %v1978
        %v2170 = vpop.f32.mrf.mxu0
        %v2171 = vadd.f32 0.0, %v2170
        %2172 = vmatmul.f32.gmra.mxu0 %v1981
        %v2173 = vpop.f32.mrf.mxu0
        %v2174 = vadd.f32 0.0, %v2173
        %2175 = vmatmul.f32.gmra.mxu0 %v1984
        %v2176 = vpop.f32.mrf.mxu0
        %v2177 = vadd.f32 0.0, %v2176
        %2178 = vmatmul.f32.gmra.mxu0 %v1987
        %v2179 = vpop.f32.mrf.mxu0
        %v2180 = vadd.f32 0.0, %v2179
        %2181 = vmatmul.f32.gmra.mxu0 %v1990
        %v2182 = vpop.f32.mrf.mxu0
        %v2183 = vadd.f32 0.0, %v2182
        %2184 = vmatmul.f32.gmra.mxu0 %v1993
        %v2185 = vpop.f32.mrf.mxu0
        %v2186 = vadd.f32 0.0, %v2185
        %2187 = vmatmul.f32.gmra.mxu0 %v1996
        %v2188 = vpop.f32.mrf.mxu0
        %v2189 = vadd.f32 0.0, %v2188
        %2190 = vdwg.mxu0
        %2191 = vmatpush.msra.mxu0 %v2109
        %2192 = vmatpush.msra.mxu0 %v2108
        %2193 = vmatpush.msra.mxu0 %v2107
        %2194 = vmatpush.msra.mxu0 %v2106
        %2195 = vmatpush.msra.mxu0 %v2105
        %2196 = vmatpush.msra.mxu0 %v2104
        %2197 = vmatpush.msra.mxu0 %v2103
        %2198 = vmatpush.msra.mxu0 %v2102
        %2199 = vmatpush.msra.mxu0 %v2101
        %2200 = vmatpush.msra.mxu0 %v2100
        %2201 = vmatpush.msra.mxu0 %v2099
        %2202 = vmatpush.msra.mxu0 %v2098
        %2203 = vmatpush.msra.mxu0 %v2097
        %2204 = vmatpush.msra.mxu0 %v2096
        %2205 = vmatpush.msra.mxu0 %v2095
        %2206 = vmatpush.msra.mxu0 %v2094
        %2207 = vmatmul.f32.gmra.mxu0 %v2030
        %v2208 = vpop.f32.mrf.mxu0
        %v2209 = vadd.f32 %v2144, %v2208
        %2210 = vmatmul.f32.gmra.mxu0 %v2031
        %v2211 = vpop.f32.mrf.mxu0
        %v2212 = vadd.f32 %v2147, %v2211
        %2213 = vmatmul.f32.gmra.mxu0 %v2032
        %v2214 = vpop.f32.mrf.mxu0
        %v2215 = vadd.f32 %v2150, %v2214
        %2216 = vmatmul.f32.gmra.mxu0 %v2033
        %v2217 = vpop.f32.mrf.mxu0
        %v2218 = vadd.f32 %v2153, %v2217
        %2219 = vmatmul.f32.gmra.mxu0 %v2034
        %v2220 = vpop.f32.mrf.mxu0
        %v2221 = vadd.f32 %v2156, %v2220
        %2222 = vmatmul.f32.gmra.mxu0 %v2035
        %v2223 = vpop.f32.mrf.mxu0
        %v2224 = vadd.f32 %v2159, %v2223
        %2225 = vmatmul.f32.gmra.mxu0 %v2036
        %v2226 = vpop.f32.mrf.mxu0
        %v2227 = vadd.f32 %v2162, %v2226
        %2228 = vmatmul.f32.gmra.mxu0 %v2037
        %v2229 = vpop.f32.mrf.mxu0
        %v2230 = vadd.f32 %v2165, %v2229
        %2231 = vmatmul.f32.gmra.mxu0 %v2038
        %v2232 = vpop.f32.mrf.mxu0
        %v2233 = vadd.f32 %v2168, %v2232
        %2234 = vmatmul.f32.gmra.mxu0 %v2039
        %v2235 = vpop.f32.mrf.mxu0
        %v2236 = vadd.f32 %v2171, %v2235
        %2237 = vmatmul.f32.gmra.mxu0 %v2040
        %v2238 = vpop.f32.mrf.mxu0
        %v2239 = vadd.f32 %v2174, %v2238
        %2240 = vmatmul.f32.gmra.mxu0 %v2041
        %v2241 = vpop.f32.mrf.mxu0
        %v2242 = vadd.f32 %v2177, %v2241
        %2243 = vmatmul.f32.gmra.mxu0 %v2042
        %v2244 = vpop.f32.mrf.mxu0
        %v2245 = vadd.f32 %v2180, %v2244
        %2246 = vmatmul.f32.gmra.mxu0 %v2043
        %v2247 = vpop.f32.mrf.mxu0
        %v2248 = vadd.f32 %v2183, %v2247
        %2249 = vmatmul.f32.gmra.mxu0 %v2044
        %v2250 = vpop.f32.mrf.mxu0
        %v2251 = vadd.f32 %v2186, %v2250
        %2252 = vmatmul.f32.gmra.mxu0 %v2045
        %v2253 = vpop.f32.mrf.mxu0
        %v2254 = vadd.f32 %v2189, %v2253
        %2255 = vdwg.mxu0
        %v2256 = vld [vmem:[%s871] sm:$0xff]
        %v2257 = vld [vmem:[%s871 + $0x8] sm:$0xff]
        %v2258 = vld [vmem:[%s871 + $0x10] sm:$0xff]
        %v2259 = vld [vmem:[%s871 + $0x18] sm:$0xff]
        %v2260 = vld [vmem:[%s871 + $0x20] sm:$0xff]
        %v2261 = vld [vmem:[%s871 + $0x28] sm:$0xff]
        %v2262 = vld [vmem:[%s871 + $0x30] sm:$0xff]
        %v2263 = vld [vmem:[%s871 + $0x38] sm:$0xff]
        %v2264 = vld [vmem:[%s871 + $0x40] sm:$0xff]
        %v2265 = vld [vmem:[%s871 + $0x48] sm:$0xff]
        %v2266 = vld [vmem:[%s871 + $0x50] sm:$0xff]
        %v2267 = vld [vmem:[%s871 + $0x58] sm:$0xff]
        %v2268 = vld [vmem:[%s871 + $0x60] sm:$0xff]
        %v2269 = vld [vmem:[%s871 + $0x68] sm:$0xff]
        %v2270 = vld [vmem:[%s871 + $0x70] sm:$0xff]
        %v2271 = vld [vmem:[%s871 + $0x78] sm:$0xff]
        %2272 = vmatpush.msra.mxu0 %v2271
        %2273 = vmatpush.msra.mxu0 %v2270
        %2274 = vmatpush.msra.mxu0 %v2269
        %2275 = vmatpush.msra.mxu0 %v2268
        %2276 = vmatpush.msra.mxu0 %v2267
        %2277 = vmatpush.msra.mxu0 %v2266
        %2278 = vmatpush.msra.mxu0 %v2265
        %2279 = vmatpush.msra.mxu0 %v2264
        %2280 = vmatpush.msra.mxu0 %v2263
        %2281 = vmatpush.msra.mxu0 %v2262
        %2282 = vmatpush.msra.mxu0 %v2261
        %2283 = vmatpush.msra.mxu0 %v2260
        %2284 = vmatpush.msra.mxu0 %v2259
        %2285 = vmatpush.msra.mxu0 %v2258
        %2286 = vmatpush.msra.mxu0 %v2257
        %2287 = vmatpush.msra.mxu0 %v2256
        %2288 = vmatmul.f32.gmra.mxu0 %v2078
        %v2289 = vpop.f32.mrf.mxu0
        %v2290 = vadd.f32 0.0, %v2289
        %2291 = vmatmul.f32.gmra.mxu0 %v2079
        %v2292 = vpop.f32.mrf.mxu0
        %v2293 = vadd.f32 0.0, %v2292
        %2294 = vmatmul.f32.gmra.mxu0 %v2080
        %v2295 = vpop.f32.mrf.mxu0
        %v2296 = vadd.f32 0.0, %v2295
        %2297 = vmatmul.f32.gmra.mxu0 %v2081
        %v2298 = vpop.f32.mrf.mxu0
        %v2299 = vadd.f32 0.0, %v2298
        %2300 = vmatmul.f32.gmra.mxu0 %v2082
        %v2301 = vpop.f32.mrf.mxu0
        %v2302 = vadd.f32 0.0, %v2301
        %2303 = vmatmul.f32.gmra.mxu0 %v2083
        %v2304 = vpop.f32.mrf.mxu0
        %v2305 = vadd.f32 0.0, %v2304
        %2306 = vmatmul.f32.gmra.mxu0 %v2084
        %v2307 = vpop.f32.mrf.mxu0
        %v2308 = vadd.f32 0.0, %v2307
        %2309 = vmatmul.f32.gmra.mxu0 %v2085
        %v2310 = vpop.f32.mrf.mxu0
        %v2311 = vadd.f32 0.0, %v2310
        %2312 = vmatmul.f32.gmra.mxu0 %v2086
        %v2313 = vpop.f32.mrf.mxu0
        %v2314 = vadd.f32 0.0, %v2313
        %2315 = vmatmul.f32.gmra.mxu0 %v2087
        %v2316 = vpop.f32.mrf.mxu0
        %v2317 = vadd.f32 0.0, %v2316
        %2318 = vmatmul.f32.gmra.mxu0 %v2088
        %v2319 = vpop.f32.mrf.mxu0
        %v2320 = vadd.f32 0.0, %v2319
        %2321 = vmatmul.f32.gmra.mxu0 %v2089
        %v2322 = vpop.f32.mrf.mxu0
        %v2323 = vadd.f32 0.0, %v2322
        %2324 = vmatmul.f32.gmra.mxu0 %v2090
        %v2325 = vpop.f32.mrf.mxu0
        %v2326 = vadd.f32 0.0, %v2325
        %2327 = vmatmul.f32.gmra.mxu0 %v2091
        %v2328 = vpop.f32.mrf.mxu0
        %v2329 = vadd.f32 0.0, %v2328
        %2330 = vmatmul.f32.gmra.mxu0 %v2092
        %v2331 = vpop.f32.mrf.mxu0
        %v2332 = vadd.f32 0.0, %v2331
        %2333 = vmatmul.f32.gmra.mxu0 %v2093
        %v2334 = vpop.f32.mrf.mxu0
        %v2335 = vadd.f32 0.0, %v2334
        %2336 = vdwg.mxu0
        %v2337 = vadd.f32 %v2209, %v2290
        %v2338 = vadd.f32 %v2212, %v2293
        %v2339 = vadd.f32 %v2215, %v2296
        %v2340 = vadd.f32 %v2218, %v2299
        %v2341 = vadd.f32 %v2221, %v2302
        %v2342 = vadd.f32 %v2224, %v2305
        %v2343 = vadd.f32 %v2227, %v2308
        %v2344 = vadd.f32 %v2230, %v2311
        %v2345 = vadd.f32 %v2233, %v2314
        %v2346 = vadd.f32 %v2236, %v2317
        %v2347 = vadd.f32 %v2239, %v2320
        %v2348 = vadd.f32 %v2242, %v2323
        %v2349 = vadd.f32 %v2245, %v2326
        %v2350 = vadd.f32 %v2248, %v2329
        %v2351 = vadd.f32 %v2251, %v2332
        %v2352 = vadd.f32 %v2254, %v2335
        %v2353 = vld [vmem:[%s3] sm:$0x1]
        %v2355 = vperm.slane %v2353, 0
        %v2357 = vadd.f32 %v2337, %v2355
        %v2358 = vadd.f32 %v2338, %v2355
        %v2359 = vadd.f32 %v2339, %v2355
        %v2360 = vadd.f32 %v2340, %v2355
        %v2361 = vadd.f32 %v2341, %v2355
        %v2362 = vadd.f32 %v2342, %v2355
        %v2363 = vadd.f32 %v2343, %v2355
        %v2364 = vadd.f32 %v2344, %v2355
        %v2365 = vadd.f32 %v2345, %v2355
        %v2366 = vadd.f32 %v2346, %v2355
        %v2367 = vadd.f32 %v2347, %v2355
        %v2368 = vadd.f32 %v2348, %v2355
        %v2369 = vadd.f32 %v2349, %v2355
        %v2370 = vadd.f32 %v2350, %v2355
        %v2371 = vadd.f32 %v2351, %v2355
        %v2372 = vadd.f32 %v2352, %v2355
        %v2373 = vmax.f32 %v2357, 0.0
        %v2374 = vmax.f32 %v2358, 0.0
        %v2375 = vmax.f32 %v2359, 0.0
        %v2376 = vmax.f32 %v2360, 0.0
        %v2377 = vmax.f32 %v2361, 0.0
        %v2378 = vmax.f32 %v2362, 0.0
        %v2379 = vmax.f32 %v2363, 0.0
        %v2380 = vmax.f32 %v2364, 0.0
        %v2381 = vmax.f32 %v2365, 0.0
        %v2382 = vmax.f32 %v2366, 0.0
        %v2383 = vmax.f32 %v2367, 0.0
        %v2384 = vmax.f32 %v2368, 0.0
        %v2385 = vmax.f32 %v2369, 0.0
        %v2386 = vmax.f32 %v2370, 0.0
        %v2387 = vmax.f32 %v2371, 0.0
        %v2388 = vmax.f32 %v2372, 0.0
        %v2389 = vrot.slane %v2373, 1
        %v2390 = vrot.slane %v2374, 1
        %v2391 = vrot.slane %v2375, 1
        %v2392 = vrot.slane %v2376, 1
        %v2393 = vrot.slane %v2377, 1
        %v2394 = vrot.slane %v2378, 1
        %v2395 = vrot.slane %v2379, 1
        %v2396 = vrot.slane %v2380, 1
        %v2397 = vrot.slane %v2381, 1
        %v2398 = vrot.slane %v2382, 1
        %v2399 = vrot.slane %v2383, 1
        %v2400 = vrot.slane %v2384, 1
        %v2401 = vrot.slane %v2385, 1
        %v2402 = vrot.slane %v2386, 1
        %v2403 = vrot.slane %v2387, 1
        %v2404 = vrot.slane %v2388, 1
        %v2405 = vsel %vm643, %v2403, %v2404
        %v2406 = vsel %vm643, %v2402, %v2403
        %v2407 = vsel %vm643, %v2401, %v2402
        %v2408 = vsel %vm643, %v2400, %v2401
        %v2409 = vsel %vm643, %v2399, %v2400
        %v2410 = vsel %vm643, %v2398, %v2399
        %v2411 = vsel %vm643, %v2397, %v2398
        %v2412 = vsel %vm643, %v2396, %v2397
        %v2413 = vsel %vm643, %v2395, %v2396
        %v2414 = vsel %vm643, %v2394, %v2395
        %v2415 = vsel %vm643, %v2393, %v2394
        %v2416 = vsel %vm643, %v2392, %v2393
        %v2417 = vsel %vm643, %v2391, %v2392
        %v2418 = vsel %vm643, %v2390, %v2391
        %v2419 = vsel %vm643, %v2389, %v2390
        %v2420 = vsel %vm643, %v2404, %v2389
        %v2421 = vmax.f32 %v2373, %v2419
        %v2422 = vmax.f32 %v2374, %v2418
        %v2423 = vmax.f32 %v2375, %v2417
        %v2424 = vmax.f32 %v2376, %v2416
        %v2425 = vmax.f32 %v2377, %v2415
        %v2426 = vmax.f32 %v2378, %v2414
        %v2427 = vmax.f32 %v2379, %v2413
        %v2428 = vmax.f32 %v2380, %v2412
        %v2429 = vmax.f32 %v2381, %v2411
        %v2430 = vmax.f32 %v2382, %v2410
        %v2431 = vmax.f32 %v2383, %v2409
        %v2432 = vmax.f32 %v2384, %v2408
        %v2433 = vmax.f32 %v2385, %v2407
        %v2434 = vmax.f32 %v2386, %v2406
        %v2435 = vmax.f32 %v2387, %v2405
        %v2436 = vmax.f32 %v2388, %v2420
        %v2437 = vrot.slane %v2373, 2
        %v2438 = vrot.slane %v2374, 2
        %v2439 = vrot.slane %v2375, 2
        %v2440 = vrot.slane %v2376, 2
        %v2441 = vrot.slane %v2377, 2
        %v2442 = vrot.slane %v2378, 2
        %v2443 = vrot.slane %v2379, 2
        %v2444 = vrot.slane %v2380, 2
        %v2445 = vrot.slane %v2381, 2
        %v2446 = vrot.slane %v2382, 2
        %v2447 = vrot.slane %v2383, 2
        %v2448 = vrot.slane %v2384, 2
        %v2449 = vrot.slane %v2385, 2
        %v2450 = vrot.slane %v2386, 2
        %v2451 = vrot.slane %v2387, 2
        %v2452 = vrot.slane %v2388, 2
        %v2453 = vsel %vm1069, %v2451, %v2452
        %v2454 = vsel %vm1069, %v2450, %v2451
        %v2455 = vsel %vm1069, %v2449, %v2450
        %v2456 = vsel %vm1069, %v2448, %v2449
        %v2457 = vsel %vm1069, %v2447, %v2448
        %v2458 = vsel %vm1069, %v2446, %v2447
        %v2459 = vsel %vm1069, %v2445, %v2446
        %v2460 = vsel %vm1069, %v2444, %v2445
        %v2461 = vsel %vm1069, %v2443, %v2444
        %v2462 = vsel %vm1069, %v2442, %v2443
        %v2463 = vsel %vm1069, %v2441, %v2442
        %v2464 = vsel %vm1069, %v2440, %v2441
        %v2465 = vsel %vm1069, %v2439, %v2440
        %v2466 = vsel %vm1069, %v2438, %v2439
        %v2467 = vsel %vm1069, %v2437, %v2438
        %v2468 = vsel %vm1069, %v2452, %v2437
        %v2469 = vmax.f32 %v2421, %v2467
        %v2470 = vmax.f32 %v2422, %v2466
        %v2471 = vmax.f32 %v2423, %v2465
        %v2472 = vmax.f32 %v2424, %v2464
        %v2473 = vmax.f32 %v2425, %v2463
        %v2474 = vmax.f32 %v2426, %v2462
        %v2475 = vmax.f32 %v2427, %v2461
        %v2476 = vmax.f32 %v2428, %v2460
        %v2477 = vmax.f32 %v2429, %v2459
        %v2478 = vmax.f32 %v2430, %v2458
        %v2479 = vmax.f32 %v2431, %v2457
        %v2480 = vmax.f32 %v2432, %v2456
        %v2481 = vmax.f32 %v2433, %v2455
        %v2482 = vmax.f32 %v2434, %v2454
        %v2483 = vmax.f32 %v2435, %v2453
        %v2484 = vmax.f32 %v2436, %v2468
        %v2485 = vrot.slane %v2373, 3
        %v2486 = vrot.slane %v2374, 3
        %v2487 = vrot.slane %v2375, 3
        %v2488 = vrot.slane %v2376, 3
        %v2489 = vrot.slane %v2377, 3
        %v2490 = vrot.slane %v2378, 3
        %v2491 = vrot.slane %v2379, 3
        %v2492 = vrot.slane %v2380, 3
        %v2493 = vrot.slane %v2381, 3
        %v2494 = vrot.slane %v2382, 3
        %v2495 = vrot.slane %v2383, 3
        %v2496 = vrot.slane %v2384, 3
        %v2497 = vrot.slane %v2385, 3
        %v2498 = vrot.slane %v2386, 3
        %v2499 = vrot.slane %v2387, 3
        %v2500 = vrot.slane %v2388, 3
        %v2501 = vsel %vm1118, %v2499, %v2500
        %v2502 = vsel %vm1118, %v2498, %v2499
        %v2503 = vsel %vm1118, %v2497, %v2498
        %v2504 = vsel %vm1118, %v2496, %v2497
        %v2505 = vsel %vm1118, %v2495, %v2496
        %v2506 = vsel %vm1118, %v2494, %v2495
        %v2507 = vsel %vm1118, %v2493, %v2494
        %v2508 = vsel %vm1118, %v2492, %v2493
        %v2509 = vsel %vm1118, %v2491, %v2492
        %v2510 = vsel %vm1118, %v2490, %v2491
        %v2511 = vsel %vm1118, %v2489, %v2490
        %v2512 = vsel %vm1118, %v2488, %v2489
        %v2513 = vsel %vm1118, %v2487, %v2488
        %v2514 = vsel %vm1118, %v2486, %v2487
        %v2515 = vsel %vm1118, %v2485, %v2486
        %v2516 = vsel %vm1118, %v2500, %v2485
        %v2517 = vmax.f32 %v2469, %v2515
        %v2518 = vmax.f32 %v2470, %v2514
        %v2519 = vmax.f32 %v2471, %v2513
        %v2520 = vmax.f32 %v2472, %v2512
        %v2521 = vmax.f32 %v2473, %v2511
        %v2522 = vmax.f32 %v2474, %v2510
        %v2523 = vmax.f32 %v2475, %v2509
        %v2524 = vmax.f32 %v2476, %v2508
        %v2525 = vmax.f32 %v2477, %v2507
        %v2526 = vmax.f32 %v2478, %v2506
        %v2527 = vmax.f32 %v2479, %v2505
        %v2528 = vmax.f32 %v2480, %v2504
        %v2529 = vmax.f32 %v2481, %v2503
        %v2530 = vmax.f32 %v2482, %v2502
        %v2531 = vmax.f32 %v2483, %v2501
        %v2532 = vmax.f32 %v2484, %v2516
        %2533 = vst [vmem:[#allocation3] sm:$0xff] %v2517
        %2534 = vst [vmem:[#allocation3 + $0x8] sm:$0xff] %v2518
        %2535 = vst [vmem:[#allocation3 + $0x10] sm:$0xff] %v2519
        %2536 = vst [vmem:[#allocation3 + $0x18] sm:$0xff] %v2520
        %2537 = vst [vmem:[#allocation3 + $0x20] sm:$0xff] %v2521
        %2538 = vst [vmem:[#allocation3 + $0x28] sm:$0xff] %v2522
        %2539 = vst [vmem:[#allocation3 + $0x30] sm:$0xff] %v2523
        %2540 = vst [vmem:[#allocation3 + $0x38] sm:$0xff] %v2524
        %2541 = vst [vmem:[#allocation3 + $0x40] sm:$0xff] %v2525
        %2542 = vst [vmem:[#allocation3 + $0x48] sm:$0xff] %v2526
        %2543 = vst [vmem:[#allocation3 + $0x50] sm:$0xff] %v2527
        %2544 = vst [vmem:[#allocation3 + $0x58] sm:$0xff] %v2528
        %2545 = vst [vmem:[#allocation3 + $0x60] sm:$0xff] %v2529
        %2546 = vst [vmem:[#allocation3 + $0x68] sm:$0xff] %v2530
        %2547 = vst [vmem:[#allocation3 + $0x70] sm:$0xff] %v2531
        %2548 = vst [vmem:[#allocation3 + $0x78] sm:$0xff] %v2532
        %v2549 = vld [vmem:[#allocation3] ss:$4 sm:$0xff]
        %v2550 = vld [vmem:[%s1168] ss:$4 sm:$0xff]
        %v2551 = vld [vmem:[%s1170] ss:$4 sm:$0xff]
        %v2552 = vld [vmem:[%s1172] ss:$4 sm:$0xff]
        %s2553 = scalar_lea.vmem [#allocation2], 64
        %2554 = vst [vmem:[%s2553] sm:$0xff] %v2549
        %2555 = vst [vmem:[%s2553 + $0x8] sm:$0xff] %v2550
        %2556 = vst [vmem:[%s2553 + $0x10] sm:$0xff] %v2551
        %2557 = vst [vmem:[%s2553 + $0x18] sm:$0xff] %v2552
        %s2558 = scalar_lea.vmem %s347, 384
        %v2559 = vld [vmem:[%s2558] sm:$0xff]
        %v2560 = vld [vmem:[%s2558 + $0x8] sm:$0xff]
        %v2561 = vld [vmem:[%s2558 + $0x10] sm:$0xff]
        %v2562 = vld [vmem:[%s2558 + $0x18] sm:$0xff]
        %v2563 = vld [vmem:[%s2558 + $0x20] sm:$0xff]
        %v2564 = vld [vmem:[%s2558 + $0x28] sm:$0xff]
        %v2565 = vld [vmem:[%s2558 + $0x30] sm:$0xff]
        %v2566 = vld [vmem:[%s2558 + $0x38] sm:$0xff]
        %v2567 = vld [vmem:[%s2558 + $0x40] sm:$0xff]
        %v2568 = vld [vmem:[%s2558 + $0x48] sm:$0xff]
        %v2569 = vld [vmem:[%s2558 + $0x50] sm:$0xff]
        %v2570 = vld [vmem:[%s2558 + $0x58] sm:$0xff]
        %v2571 = vld [vmem:[%s2558 + $0x60] sm:$0xff]
        %v2572 = vld [vmem:[%s2558 + $0x68] sm:$0xff]
        %v2573 = vld [vmem:[%s2558 + $0x70] sm:$0xff]
        %v2574 = vld [vmem:[%s2558 + $0x78] sm:$0xff]
        %v2576 = vsel %vm432, %v2559, 0
        %v2579 = vsel %vm432, %v2560, 0
        %v2582 = vsel %vm432, %v2561, 0
        %v2585 = vsel %vm432, %v2562, 0
        %v2588 = vsel %vm432, %v2563, 0
        %v2591 = vsel %vm432, %v2564, 0
        %v2594 = vsel %vm432, %v2565, 0
        %v2597 = vsel %vm432, %v2566, 0
        %v2600 = vsel %vm432, %v2567, 0
        %v2603 = vsel %vm432, %v2568, 0
        %v2606 = vsel %vm432, %v2569, 0
        %v2609 = vsel %vm432, %v2570, 0
        %v2612 = vsel %vm432, %v2571, 0
        %v2615 = vsel %vm432, %v2572, 0
        %v2618 = vsel %vm432, %v2573, 0
        %v2621 = vsel %vm432, %v2574, 0
        %2623 = vmatpush.msra.mxu0 0.0
        %2624 = vmatpush.msra.mxu0 0.0
        %2625 = vmatpush.msra.mxu0 0.0
        %2626 = vmatpush.msra.mxu0 0.0
        %2627 = vmatpush.msra.mxu0 0.0
        %2628 = vmatpush.msra.mxu0 0.0
        %2629 = vmatpush.msra.mxu0 0.0
        %2630 = vmatpush.msra.mxu0 0.0
        %2631 = vmatpush.msra.mxu0 0.0
        %2632 = vmatpush.msra.mxu0 0.0
        %2633 = vmatpush.msra.mxu0 0.0
        %2634 = vmatpush.msra.mxu0 0.0
        %2635 = vmatpush.msra.mxu0 0.0
        %2636 = vmatpush.msra.mxu0 0.0
        %2637 = vmatpush.msra.mxu0 %v415
        %2638 = vmatpush.msra.mxu0 %v414
        %2639 = vmatmul.f32.gmra.mxu0 %v2576
        %v2640 = vpop.f32.mrf.mxu0
        %v2641 = vadd.f32 0.0, %v2640
        %2642 = vmatmul.f32.gmra.mxu0 %v2579
        %v2643 = vpop.f32.mrf.mxu0
        %v2644 = vadd.f32 0.0, %v2643
        %2645 = vmatmul.f32.gmra.mxu0 %v2582
        %v2646 = vpop.f32.mrf.mxu0
        %v2647 = vadd.f32 0.0, %v2646
        %2648 = vmatmul.f32.gmra.mxu0 %v2585
        %v2649 = vpop.f32.mrf.mxu0
        %v2650 = vadd.f32 0.0, %v2649
        %2651 = vmatmul.f32.gmra.mxu0 %v2588
        %v2652 = vpop.f32.mrf.mxu0
        %v2653 = vadd.f32 0.0, %v2652
        %2654 = vmatmul.f32.gmra.mxu0 %v2591
        %v2655 = vpop.f32.mrf.mxu0
        %v2656 = vadd.f32 0.0, %v2655
        %2657 = vmatmul.f32.gmra.mxu0 %v2594
        %v2658 = vpop.f32.mrf.mxu0
        %v2659 = vadd.f32 0.0, %v2658
        %2660 = vmatmul.f32.gmra.mxu0 %v2597
        %v2661 = vpop.f32.mrf.mxu0
        %v2662 = vadd.f32 0.0, %v2661
        %2663 = vmatmul.f32.gmra.mxu0 %v2600
        %v2664 = vpop.f32.mrf.mxu0
        %v2665 = vadd.f32 0.0, %v2664
        %2666 = vmatmul.f32.gmra.mxu0 %v2603
        %v2667 = vpop.f32.mrf.mxu0
        %v2668 = vadd.f32 0.0, %v2667
        %2669 = vmatmul.f32.gmra.mxu0 %v2606
        %v2670 = vpop.f32.mrf.mxu0
        %v2671 = vadd.f32 0.0, %v2670
        %2672 = vmatmul.f32.gmra.mxu0 %v2609
        %v2673 = vpop.f32.mrf.mxu0
        %v2674 = vadd.f32 0.0, %v2673
        %2675 = vmatmul.f32.gmra.mxu0 %v2612
        %v2676 = vpop.f32.mrf.mxu0
        %v2677 = vadd.f32 0.0, %v2676
        %2678 = vmatmul.f32.gmra.mxu0 %v2615
        %v2679 = vpop.f32.mrf.mxu0
        %v2680 = vadd.f32 0.0, %v2679
        %2681 = vmatmul.f32.gmra.mxu0 %v2618
        %v2682 = vpop.f32.mrf.mxu0
        %v2683 = vadd.f32 0.0, %v2682
        %2684 = vmatmul.f32.gmra.mxu0 %v2621
        %v2685 = vpop.f32.mrf.mxu0
        %v2686 = vadd.f32 0.0, %v2685
        %2687 = vdwg.mxu0
        %v2688 = vrot.slane %v2641, 7
        %v2689 = vrot.slane %v2644, 7
        %v2690 = vrot.slane %v2647, 7
        %v2691 = vrot.slane %v2650, 7
        %v2692 = vrot.slane %v2653, 7
        %v2693 = vrot.slane %v2656, 7
        %v2694 = vrot.slane %v2659, 7
        %v2695 = vrot.slane %v2662, 7
        %v2696 = vrot.slane %v2665, 7
        %v2697 = vrot.slane %v2668, 7
        %v2698 = vrot.slane %v2671, 7
        %v2699 = vrot.slane %v2674, 7
        %v2700 = vrot.slane %v2677, 7
        %v2701 = vrot.slane %v2680, 7
        %v2702 = vrot.slane %v2683, 7
        %v2703 = vrot.slane %v2686, 7
        %v2704 = vsel %vm562, %v2702, %v2703
        %v2705 = vsel %vm562, %v2701, %v2702
        %v2706 = vsel %vm562, %v2700, %v2701
        %v2707 = vsel %vm562, %v2699, %v2700
        %v2708 = vsel %vm562, %v2698, %v2699
        %v2709 = vsel %vm562, %v2697, %v2698
        %v2710 = vsel %vm562, %v2696, %v2697
        %v2711 = vsel %vm562, %v2695, %v2696
        %v2712 = vsel %vm562, %v2694, %v2695
        %v2713 = vsel %vm562, %v2693, %v2694
        %v2714 = vsel %vm562, %v2692, %v2693
        %v2715 = vsel %vm562, %v2691, %v2692
        %v2716 = vsel %vm562, %v2690, %v2691
        %v2717 = vsel %vm562, %v2689, %v2690
        %v2718 = vsel %vm562, %v2688, %v2689
        %v2719 = vsel %vm562, %v2703, %v2688
        %v2720 = vsel %vm595, 0.0, %v2719
        %v2721 = vsel %vm596, 0.0, %v2718
        %v2722 = vsel %vm597, 0.0, %v2717
        %v2723 = vsel %vm598, 0.0, %v2716
        %v2724 = vsel %vm599, 0.0, %v2715
        %v2725 = vsel %vm600, 0.0, %v2714
        %v2726 = vsel %vm601, 0.0, %v2713
        %v2727 = vsel %vm602, 0.0, %v2712
        %v2728 = vsel %vm603, 0.0, %v2711
        %v2729 = vsel %vm604, 0.0, %v2710
        %v2730 = vsel %vm605, 0.0, %v2709
        %v2731 = vsel %vm606, 0.0, %v2708
        %v2732 = vsel %vm607, 0.0, %v2707
        %v2733 = vsel %vm608, 0.0, %v2706
        %v2734 = vsel %vm609, 0.0, %v2705
        %v2735 = vsel %vm610, 0.0, %v2704
        %v2736 = vrot.slane %v2641, 1
        %v2737 = vrot.slane %v2644, 1
        %v2738 = vrot.slane %v2647, 1
        %v2739 = vrot.slane %v2650, 1
        %v2740 = vrot.slane %v2653, 1
        %v2741 = vrot.slane %v2656, 1
        %v2742 = vrot.slane %v2659, 1
        %v2743 = vrot.slane %v2662, 1
        %v2744 = vrot.slane %v2665, 1
        %v2745 = vrot.slane %v2668, 1
        %v2746 = vrot.slane %v2671, 1
        %v2747 = vrot.slane %v2674, 1
        %v2748 = vrot.slane %v2677, 1
        %v2749 = vrot.slane %v2680, 1
        %v2750 = vrot.slane %v2683, 1
        %v2751 = vrot.slane %v2686, 1
        %v2752 = vsel %vm643, %v2750, %v2751
        %v2753 = vsel %vm643, %v2749, %v2750
        %v2754 = vsel %vm643, %v2748, %v2749
        %v2755 = vsel %vm643, %v2747, %v2748
        %v2756 = vsel %vm643, %v2746, %v2747
        %v2757 = vsel %vm643, %v2745, %v2746
        %v2758 = vsel %vm643, %v2744, %v2745
        %v2759 = vsel %vm643, %v2743, %v2744
        %v2760 = vsel %vm643, %v2742, %v2743
        %v2761 = vsel %vm643, %v2741, %v2742
        %v2762 = vsel %vm643, %v2740, %v2741
        %v2763 = vsel %vm643, %v2739, %v2740
        %v2764 = vsel %vm643, %v2738, %v2739
        %v2765 = vsel %vm643, %v2737, %v2738
        %v2766 = vsel %vm643, %v2736, %v2737
        %v2767 = vsel %vm643, %v2751, %v2736
        %v2768 = vsel %vm676, 0.0, %v2766
        %v2769 = vsel %vm677, 0.0, %v2765
        %v2770 = vsel %vm678, 0.0, %v2764
        %v2771 = vsel %vm679, 0.0, %v2763
        %v2772 = vsel %vm680, 0.0, %v2762
        %v2773 = vsel %vm681, 0.0, %v2761
        %v2774 = vsel %vm682, 0.0, %v2760
        %v2775 = vsel %vm683, 0.0, %v2759
        %v2776 = vsel %vm684, 0.0, %v2758
        %v2777 = vsel %vm685, 0.0, %v2757
        %v2778 = vsel %vm686, 0.0, %v2756
        %v2779 = vsel %vm687, 0.0, %v2755
        %v2780 = vsel %vm688, 0.0, %v2754
        %v2781 = vsel %vm689, 0.0, %v2753
        %v2782 = vsel %vm690, 0.0, %v2752
        %v2783 = vsel %vm691, 0.0, %v2767
        %v2784 = vld [vmem:[#allocation5] sm:$0xff]
        %v2785 = vld [vmem:[#allocation5 + $0x8] sm:$0xff]
        %v2786 = vld [vmem:[#allocation5 + $0x10] sm:$0xff]
        %v2787 = vld [vmem:[#allocation5 + $0x18] sm:$0xff]
        %v2788 = vld [vmem:[#allocation5 + $0x20] sm:$0xff]
        %v2789 = vld [vmem:[#allocation5 + $0x28] sm:$0xff]
        %v2790 = vld [vmem:[#allocation5 + $0x30] sm:$0xff]
        %v2791 = vld [vmem:[#allocation5 + $0x38] sm:$0xff]
        %v2792 = vld [vmem:[#allocation5 + $0x40] sm:$0xff]
        %v2793 = vld [vmem:[#allocation5 + $0x48] sm:$0xff]
        %v2794 = vld [vmem:[#allocation5 + $0x50] sm:$0xff]
        %v2795 = vld [vmem:[#allocation5 + $0x58] sm:$0xff]
        %v2796 = vld [vmem:[#allocation5 + $0x60] sm:$0xff]
        %v2797 = vld [vmem:[#allocation5 + $0x68] sm:$0xff]
        %v2798 = vld [vmem:[#allocation5 + $0x70] sm:$0xff]
        %v2799 = vld [vmem:[#allocation5 + $0x78] sm:$0xff]
        %v2800 = vld [vmem:[%s724] sm:$0xff]
        %v2801 = vld [vmem:[%s724 + $0x8] sm:$0xff]
        %v2802 = vld [vmem:[%s724 + $0x10] sm:$0xff]
        %v2803 = vld [vmem:[%s724 + $0x18] sm:$0xff]
        %v2804 = vld [vmem:[%s724 + $0x20] sm:$0xff]
        %v2805 = vld [vmem:[%s724 + $0x28] sm:$0xff]
        %v2806 = vld [vmem:[%s724 + $0x30] sm:$0xff]
        %v2807 = vld [vmem:[%s724 + $0x38] sm:$0xff]
        %v2808 = vld [vmem:[%s724 + $0x40] sm:$0xff]
        %v2809 = vld [vmem:[%s724 + $0x48] sm:$0xff]
        %v2810 = vld [vmem:[%s724 + $0x50] sm:$0xff]
        %v2811 = vld [vmem:[%s724 + $0x58] sm:$0xff]
        %v2812 = vld [vmem:[%s724 + $0x60] sm:$0xff]
        %v2813 = vld [vmem:[%s724 + $0x68] sm:$0xff]
        %v2814 = vld [vmem:[%s724 + $0x70] sm:$0xff]
        %v2815 = vld [vmem:[%s724 + $0x78] sm:$0xff]
        %2816 = vmatpush.msra.mxu0 %v2815
        %2817 = vmatpush.msra.mxu0 %v2814
        %2818 = vmatpush.msra.mxu0 %v2813
        %2819 = vmatpush.msra.mxu0 %v2812
        %2820 = vmatpush.msra.mxu0 %v2811
        %2821 = vmatpush.msra.mxu0 %v2810
        %2822 = vmatpush.msra.mxu0 %v2809
        %2823 = vmatpush.msra.mxu0 %v2808
        %2824 = vmatpush.msra.mxu0 %v2807
        %2825 = vmatpush.msra.mxu0 %v2806
        %2826 = vmatpush.msra.mxu0 %v2805
        %2827 = vmatpush.msra.mxu0 %v2804
        %2828 = vmatpush.msra.mxu0 %v2803
        %2829 = vmatpush.msra.mxu0 %v2802
        %2830 = vmatpush.msra.mxu0 %v2801
        %2831 = vmatpush.msra.mxu0 %v2800
        %2832 = vmatmul.f32.gmra.mxu0 %v2641
        %v2833 = vpop.f32.mrf.mxu0
        %v2834 = vadd.f32 0.0, %v2833
        %2835 = vmatmul.f32.gmra.mxu0 %v2644
        %v2836 = vpop.f32.mrf.mxu0
        %v2837 = vadd.f32 0.0, %v2836
        %2838 = vmatmul.f32.gmra.mxu0 %v2647
        %v2839 = vpop.f32.mrf.mxu0
        %v2840 = vadd.f32 0.0, %v2839
        %2841 = vmatmul.f32.gmra.mxu0 %v2650
        %v2842 = vpop.f32.mrf.mxu0
        %v2843 = vadd.f32 0.0, %v2842
        %2844 = vmatmul.f32.gmra.mxu0 %v2653
        %v2845 = vpop.f32.mrf.mxu0
        %v2846 = vadd.f32 0.0, %v2845
        %2847 = vmatmul.f32.gmra.mxu0 %v2656
        %v2848 = vpop.f32.mrf.mxu0
        %v2849 = vadd.f32 0.0, %v2848
        %2850 = vmatmul.f32.gmra.mxu0 %v2659
        %v2851 = vpop.f32.mrf.mxu0
        %v2852 = vadd.f32 0.0, %v2851
        %2853 = vmatmul.f32.gmra.mxu0 %v2662
        %v2854 = vpop.f32.mrf.mxu0
        %v2855 = vadd.f32 0.0, %v2854
        %2856 = vmatmul.f32.gmra.mxu0 %v2665
        %v2857 = vpop.f32.mrf.mxu0
        %v2858 = vadd.f32 0.0, %v2857
        %2859 = vmatmul.f32.gmra.mxu0 %v2668
        %v2860 = vpop.f32.mrf.mxu0
        %v2861 = vadd.f32 0.0, %v2860
        %2862 = vmatmul.f32.gmra.mxu0 %v2671
        %v2863 = vpop.f32.mrf.mxu0
        %v2864 = vadd.f32 0.0, %v2863
        %2865 = vmatmul.f32.gmra.mxu0 %v2674
        %v2866 = vpop.f32.mrf.mxu0
        %v2867 = vadd.f32 0.0, %v2866
        %2868 = vmatmul.f32.gmra.mxu0 %v2677
        %v2869 = vpop.f32.mrf.mxu0
        %v2870 = vadd.f32 0.0, %v2869
        %2871 = vmatmul.f32.gmra.mxu0 %v2680
        %v2872 = vpop.f32.mrf.mxu0
        %v2873 = vadd.f32 0.0, %v2872
        %2874 = vmatmul.f32.gmra.mxu0 %v2683
        %v2875 = vpop.f32.mrf.mxu0
        %v2876 = vadd.f32 0.0, %v2875
        %2877 = vmatmul.f32.gmra.mxu0 %v2686
        %v2878 = vpop.f32.mrf.mxu0
        %v2879 = vadd.f32 0.0, %v2878
        %2880 = vdwg.mxu0
        %2881 = vmatpush.msra.mxu0 %v2799
        %2882 = vmatpush.msra.mxu0 %v2798
        %2883 = vmatpush.msra.mxu0 %v2797
        %2884 = vmatpush.msra.mxu0 %v2796
        %2885 = vmatpush.msra.mxu0 %v2795
        %2886 = vmatpush.msra.mxu0 %v2794
        %2887 = vmatpush.msra.mxu0 %v2793
        %2888 = vmatpush.msra.mxu0 %v2792
        %2889 = vmatpush.msra.mxu0 %v2791
        %2890 = vmatpush.msra.mxu0 %v2790
        %2891 = vmatpush.msra.mxu0 %v2789
        %2892 = vmatpush.msra.mxu0 %v2788
        %2893 = vmatpush.msra.mxu0 %v2787
        %2894 = vmatpush.msra.mxu0 %v2786
        %2895 = vmatpush.msra.mxu0 %v2785
        %2896 = vmatpush.msra.mxu0 %v2784
        %2897 = vmatmul.f32.gmra.mxu0 %v2720
        %v2898 = vpop.f32.mrf.mxu0
        %v2899 = vadd.f32 %v2834, %v2898
        %2900 = vmatmul.f32.gmra.mxu0 %v2721
        %v2901 = vpop.f32.mrf.mxu0
        %v2902 = vadd.f32 %v2837, %v2901
        %2903 = vmatmul.f32.gmra.mxu0 %v2722
        %v2904 = vpop.f32.mrf.mxu0
        %v2905 = vadd.f32 %v2840, %v2904
        %2906 = vmatmul.f32.gmra.mxu0 %v2723
        %v2907 = vpop.f32.mrf.mxu0
        %v2908 = vadd.f32 %v2843, %v2907
        %2909 = vmatmul.f32.gmra.mxu0 %v2724
        %v2910 = vpop.f32.mrf.mxu0
        %v2911 = vadd.f32 %v2846, %v2910
        %2912 = vmatmul.f32.gmra.mxu0 %v2725
        %v2913 = vpop.f32.mrf.mxu0
        %v2914 = vadd.f32 %v2849, %v2913
        %2915 = vmatmul.f32.gmra.mxu0 %v2726
        %v2916 = vpop.f32.mrf.mxu0
        %v2917 = vadd.f32 %v2852, %v2916
        %2918 = vmatmul.f32.gmra.mxu0 %v2727
        %v2919 = vpop.f32.mrf.mxu0
        %v2920 = vadd.f32 %v2855, %v2919
        %2921 = vmatmul.f32.gmra.mxu0 %v2728
        %v2922 = vpop.f32.mrf.mxu0
        %v2923 = vadd.f32 %v2858, %v2922
        %2924 = vmatmul.f32.gmra.mxu0 %v2729
        %v2925 = vpop.f32.mrf.mxu0
        %v2926 = vadd.f32 %v2861, %v2925
        %2927 = vmatmul.f32.gmra.mxu0 %v2730
        %v2928 = vpop.f32.mrf.mxu0
        %v2929 = vadd.f32 %v2864, %v2928
        %2930 = vmatmul.f32.gmra.mxu0 %v2731
        %v2931 = vpop.f32.mrf.mxu0
        %v2932 = vadd.f32 %v2867, %v2931
        %2933 = vmatmul.f32.gmra.mxu0 %v2732
        %v2934 = vpop.f32.mrf.mxu0
        %v2935 = vadd.f32 %v2870, %v2934
        %2936 = vmatmul.f32.gmra.mxu0 %v2733
        %v2937 = vpop.f32.mrf.mxu0
        %v2938 = vadd.f32 %v2873, %v2937
        %2939 = vmatmul.f32.gmra.mxu0 %v2734
        %v2940 = vpop.f32.mrf.mxu0
        %v2941 = vadd.f32 %v2876, %v2940
        %2942 = vmatmul.f32.gmra.mxu0 %v2735
        %v2943 = vpop.f32.mrf.mxu0
        %v2944 = vadd.f32 %v2879, %v2943
        %2945 = vdwg.mxu0
        %v2946 = vld [vmem:[%s871] sm:$0xff]
        %v2947 = vld [vmem:[%s871 + $0x8] sm:$0xff]
        %v2948 = vld [vmem:[%s871 + $0x10] sm:$0xff]
        %v2949 = vld [vmem:[%s871 + $0x18] sm:$0xff]
        %v2950 = vld [vmem:[%s871 + $0x20] sm:$0xff]
        %v2951 = vld [vmem:[%s871 + $0x28] sm:$0xff]
        %v2952 = vld [vmem:[%s871 + $0x30] sm:$0xff]
        %v2953 = vld [vmem:[%s871 + $0x38] sm:$0xff]
        %v2954 = vld [vmem:[%s871 + $0x40] sm:$0xff]
        %v2955 = vld [vmem:[%s871 + $0x48] sm:$0xff]
        %v2956 = vld [vmem:[%s871 + $0x50] sm:$0xff]
        %v2957 = vld [vmem:[%s871 + $0x58] sm:$0xff]
        %v2958 = vld [vmem:[%s871 + $0x60] sm:$0xff]
        %v2959 = vld [vmem:[%s871 + $0x68] sm:$0xff]
        %v2960 = vld [vmem:[%s871 + $0x70] sm:$0xff]
        %v2961 = vld [vmem:[%s871 + $0x78] sm:$0xff]
        %2962 = vmatpush.msra.mxu0 %v2961
        %2963 = vmatpush.msra.mxu0 %v2960
        %2964 = vmatpush.msra.mxu0 %v2959
        %2965 = vmatpush.msra.mxu0 %v2958
        %2966 = vmatpush.msra.mxu0 %v2957
        %2967 = vmatpush.msra.mxu0 %v2956
        %2968 = vmatpush.msra.mxu0 %v2955
        %2969 = vmatpush.msra.mxu0 %v2954
        %2970 = vmatpush.msra.mxu0 %v2953
        %2971 = vmatpush.msra.mxu0 %v2952
        %2972 = vmatpush.msra.mxu0 %v2951
        %2973 = vmatpush.msra.mxu0 %v2950
        %2974 = vmatpush.msra.mxu0 %v2949
        %2975 = vmatpush.msra.mxu0 %v2948
        %2976 = vmatpush.msra.mxu0 %v2947
        %2977 = vmatpush.msra.mxu0 %v2946
        %2978 = vmatmul.f32.gmra.mxu0 %v2768
        %v2979 = vpop.f32.mrf.mxu0
        %v2980 = vadd.f32 0.0, %v2979
        %2981 = vmatmul.f32.gmra.mxu0 %v2769
        %v2982 = vpop.f32.mrf.mxu0
        %v2983 = vadd.f32 0.0, %v2982
        %2984 = vmatmul.f32.gmra.mxu0 %v2770
        %v2985 = vpop.f32.mrf.mxu0
        %v2986 = vadd.f32 0.0, %v2985
        %2987 = vmatmul.f32.gmra.mxu0 %v2771
        %v2988 = vpop.f32.mrf.mxu0
        %v2989 = vadd.f32 0.0, %v2988
        %2990 = vmatmul.f32.gmra.mxu0 %v2772
        %v2991 = vpop.f32.mrf.mxu0
        %v2992 = vadd.f32 0.0, %v2991
        %2993 = vmatmul.f32.gmra.mxu0 %v2773
        %v2994 = vpop.f32.mrf.mxu0
        %v2995 = vadd.f32 0.0, %v2994
        %2996 = vmatmul.f32.gmra.mxu0 %v2774
        %v2997 = vpop.f32.mrf.mxu0
        %v2998 = vadd.f32 0.0, %v2997
        %2999 = vmatmul.f32.gmra.mxu0 %v2775
        %v3000 = vpop.f32.mrf.mxu0
        %v3001 = vadd.f32 0.0, %v3000
        %3002 = vmatmul.f32.gmra.mxu0 %v2776
        %v3003 = vpop.f32.mrf.mxu0
        %v3004 = vadd.f32 0.0, %v3003
        %3005 = vmatmul.f32.gmra.mxu0 %v2777
        %v3006 = vpop.f32.mrf.mxu0
        %v3007 = vadd.f32 0.0, %v3006
        %3008 = vmatmul.f32.gmra.mxu0 %v2778
        %v3009 = vpop.f32.mrf.mxu0
        %v3010 = vadd.f32 0.0, %v3009
        %3011 = vmatmul.f32.gmra.mxu0 %v2779
        %v3012 = vpop.f32.mrf.mxu0
        %v3013 = vadd.f32 0.0, %v3012
        %3014 = vmatmul.f32.gmra.mxu0 %v2780
        %v3015 = vpop.f32.mrf.mxu0
        %v3016 = vadd.f32 0.0, %v3015
        %3017 = vmatmul.f32.gmra.mxu0 %v2781
        %v3018 = vpop.f32.mrf.mxu0
        %v3019 = vadd.f32 0.0, %v3018
        %3020 = vmatmul.f32.gmra.mxu0 %v2782
        %v3021 = vpop.f32.mrf.mxu0
        %v3022 = vadd.f32 0.0, %v3021
        %3023 = vmatmul.f32.gmra.mxu0 %v2783
        %v3024 = vpop.f32.mrf.mxu0
        %v3025 = vadd.f32 0.0, %v3024
        %3026 = vdwg.mxu0
        %v3027 = vadd.f32 %v2899, %v2980
        %v3028 = vadd.f32 %v2902, %v2983
        %v3029 = vadd.f32 %v2905, %v2986
        %v3030 = vadd.f32 %v2908, %v2989
        %v3031 = vadd.f32 %v2911, %v2992
        %v3032 = vadd.f32 %v2914, %v2995
        %v3033 = vadd.f32 %v2917, %v2998
        %v3034 = vadd.f32 %v2920, %v3001
        %v3035 = vadd.f32 %v2923, %v3004
        %v3036 = vadd.f32 %v2926, %v3007
        %v3037 = vadd.f32 %v2929, %v3010
        %v3038 = vadd.f32 %v2932, %v3013
        %v3039 = vadd.f32 %v2935, %v3016
        %v3040 = vadd.f32 %v2938, %v3019
        %v3041 = vadd.f32 %v2941, %v3022
        %v3042 = vadd.f32 %v2944, %v3025
        %v3043 = vld [vmem:[%s3] sm:$0x1]
        %v3045 = vperm.slane %v3043, 0
        %v3047 = vadd.f32 %v3027, %v3045
        %v3048 = vadd.f32 %v3028, %v3045
        %v3049 = vadd.f32 %v3029, %v3045
        %v3050 = vadd.f32 %v3030, %v3045
        %v3051 = vadd.f32 %v3031, %v3045
        %v3052 = vadd.f32 %v3032, %v3045
        %v3053 = vadd.f32 %v3033, %v3045
        %v3054 = vadd.f32 %v3034, %v3045
        %v3055 = vadd.f32 %v3035, %v3045
        %v3056 = vadd.f32 %v3036, %v3045
        %v3057 = vadd.f32 %v3037, %v3045
        %v3058 = vadd.f32 %v3038, %v3045
        %v3059 = vadd.f32 %v3039, %v3045
        %v3060 = vadd.f32 %v3040, %v3045
        %v3061 = vadd.f32 %v3041, %v3045
        %v3062 = vadd.f32 %v3042, %v3045
        %v3063 = vmax.f32 %v3047, 0.0
        %v3064 = vmax.f32 %v3048, 0.0
        %v3065 = vmax.f32 %v3049, 0.0
        %v3066 = vmax.f32 %v3050, 0.0
        %v3067 = vmax.f32 %v3051, 0.0
        %v3068 = vmax.f32 %v3052, 0.0
        %v3069 = vmax.f32 %v3053, 0.0
        %v3070 = vmax.f32 %v3054, 0.0
        %v3071 = vmax.f32 %v3055, 0.0
        %v3072 = vmax.f32 %v3056, 0.0
        %v3073 = vmax.f32 %v3057, 0.0
        %v3074 = vmax.f32 %v3058, 0.0
        %v3075 = vmax.f32 %v3059, 0.0
        %v3076 = vmax.f32 %v3060, 0.0
        %v3077 = vmax.f32 %v3061, 0.0
        %v3078 = vmax.f32 %v3062, 0.0
        %v3079 = vrot.slane %v3063, 1
        %v3080 = vrot.slane %v3064, 1
        %v3081 = vrot.slane %v3065, 1
        %v3082 = vrot.slane %v3066, 1
        %v3083 = vrot.slane %v3067, 1
        %v3084 = vrot.slane %v3068, 1
        %v3085 = vrot.slane %v3069, 1
        %v3086 = vrot.slane %v3070, 1
        %v3087 = vrot.slane %v3071, 1
        %v3088 = vrot.slane %v3072, 1
        %v3089 = vrot.slane %v3073, 1
        %v3090 = vrot.slane %v3074, 1
        %v3091 = vrot.slane %v3075, 1
        %v3092 = vrot.slane %v3076, 1
        %v3093 = vrot.slane %v3077, 1
        %v3094 = vrot.slane %v3078, 1
        %v3095 = vsel %vm643, %v3093, %v3094
        %v3096 = vsel %vm643, %v3092, %v3093
        %v3097 = vsel %vm643, %v3091, %v3092
        %v3098 = vsel %vm643, %v3090, %v3091
        %v3099 = vsel %vm643, %v3089, %v3090
        %v3100 = vsel %vm643, %v3088, %v3089
        %v3101 = vsel %vm643, %v3087, %v3088
        %v3102 = vsel %vm643, %v3086, %v3087
        %v3103 = vsel %vm643, %v3085, %v3086
        %v3104 = vsel %vm643, %v3084, %v3085
        %v3105 = vsel %vm643, %v3083, %v3084
        %v3106 = vsel %vm643, %v3082, %v3083
        %v3107 = vsel %vm643, %v3081, %v3082
        %v3108 = vsel %vm643, %v3080, %v3081
        %v3109 = vsel %vm643, %v3079, %v3080
        %v3110 = vsel %vm643, %v3094, %v3079
        %v3111 = vmax.f32 %v3063, %v3109
        %v3112 = vmax.f32 %v3064, %v3108
        %v3113 = vmax.f32 %v3065, %v3107
        %v3114 = vmax.f32 %v3066, %v3106
        %v3115 = vmax.f32 %v3067, %v3105
        %v3116 = vmax.f32 %v3068, %v3104
        %v3117 = vmax.f32 %v3069, %v3103
        %v3118 = vmax.f32 %v3070, %v3102
        %v3119 = vmax.f32 %v3071, %v3101
        %v3120 = vmax.f32 %v3072, %v3100
        %v3121 = vmax.f32 %v3073, %v3099
        %v3122 = vmax.f32 %v3074, %v3098
        %v3123 = vmax.f32 %v3075, %v3097
        %v3124 = vmax.f32 %v3076, %v3096
        %v3125 = vmax.f32 %v3077, %v3095
        %v3126 = vmax.f32 %v3078, %v3110
        %v3127 = vrot.slane %v3063, 2
        %v3128 = vrot.slane %v3064, 2
        %v3129 = vrot.slane %v3065, 2
        %v3130 = vrot.slane %v3066, 2
        %v3131 = vrot.slane %v3067, 2
        %v3132 = vrot.slane %v3068, 2
        %v3133 = vrot.slane %v3069, 2
        %v3134 = vrot.slane %v3070, 2
        %v3135 = vrot.slane %v3071, 2
        %v3136 = vrot.slane %v3072, 2
        %v3137 = vrot.slane %v3073, 2
        %v3138 = vrot.slane %v3074, 2
        %v3139 = vrot.slane %v3075, 2
        %v3140 = vrot.slane %v3076, 2
        %v3141 = vrot.slane %v3077, 2
        %v3142 = vrot.slane %v3078, 2
        %v3143 = vsel %vm1069, %v3141, %v3142
        %v3144 = vsel %vm1069, %v3140, %v3141
        %v3145 = vsel %vm1069, %v3139, %v3140
        %v3146 = vsel %vm1069, %v3138, %v3139
        %v3147 = vsel %vm1069, %v3137, %v3138
        %v3148 = vsel %vm1069, %v3136, %v3137
        %v3149 = vsel %vm1069, %v3135, %v3136
        %v3150 = vsel %vm1069, %v3134, %v3135
        %v3151 = vsel %vm1069, %v3133, %v3134
        %v3152 = vsel %vm1069, %v3132, %v3133
        %v3153 = vsel %vm1069, %v3131, %v3132
        %v3154 = vsel %vm1069, %v3130, %v3131
        %v3155 = vsel %vm1069, %v3129, %v3130
        %v3156 = vsel %vm1069, %v3128, %v3129
        %v3157 = vsel %vm1069, %v3127, %v3128
        %v3158 = vsel %vm1069, %v3142, %v3127
        %v3159 = vmax.f32 %v3111, %v3157
        %v3160 = vmax.f32 %v3112, %v3156
        %v3161 = vmax.f32 %v3113, %v3155
        %v3162 = vmax.f32 %v3114, %v3154
        %v3163 = vmax.f32 %v3115, %v3153
        %v3164 = vmax.f32 %v3116, %v3152
        %v3165 = vmax.f32 %v3117, %v3151
        %v3166 = vmax.f32 %v3118, %v3150
        %v3167 = vmax.f32 %v3119, %v3149
        %v3168 = vmax.f32 %v3120, %v3148
        %v3169 = vmax.f32 %v3121, %v3147
        %v3170 = vmax.f32 %v3122, %v3146
        %v3171 = vmax.f32 %v3123, %v3145
        %v3172 = vmax.f32 %v3124, %v3144
        %v3173 = vmax.f32 %v3125, %v3143
        %v3174 = vmax.f32 %v3126, %v3158
        %v3175 = vrot.slane %v3063, 3
        %v3176 = vrot.slane %v3064, 3
        %v3177 = vrot.slane %v3065, 3
        %v3178 = vrot.slane %v3066, 3
        %v3179 = vrot.slane %v3067, 3
        %v3180 = vrot.slane %v3068, 3
        %v3181 = vrot.slane %v3069, 3
        %v3182 = vrot.slane %v3070, 3
        %v3183 = vrot.slane %v3071, 3
        %v3184 = vrot.slane %v3072, 3
        %v3185 = vrot.slane %v3073, 3
        %v3186 = vrot.slane %v3074, 3
        %v3187 = vrot.slane %v3075, 3
        %v3188 = vrot.slane %v3076, 3
        %v3189 = vrot.slane %v3077, 3
        %v3190 = vrot.slane %v3078, 3
        %v3191 = vsel %vm1118, %v3189, %v3190
        %v3192 = vsel %vm1118, %v3188, %v3189
        %v3193 = vsel %vm1118, %v3187, %v3188
        %v3194 = vsel %vm1118, %v3186, %v3187
        %v3195 = vsel %vm1118, %v3185, %v3186
        %v3196 = vsel %vm1118, %v3184, %v3185
        %v3197 = vsel %vm1118, %v3183, %v3184
        %v3198 = vsel %vm1118, %v3182, %v3183
        %v3199 = vsel %vm1118, %v3181, %v3182
        %v3200 = vsel %vm1118, %v3180, %v3181
        %v3201 = vsel %vm1118, %v3179, %v3180
        %v3202 = vsel %vm1118, %v3178, %v3179
        %v3203 = vsel %vm1118, %v3177, %v3178
        %v3204 = vsel %vm1118, %v3176, %v3177
        %v3205 = vsel %vm1118, %v3175, %v3176
        %v3206 = vsel %vm1118, %v3190, %v3175
        %v3207 = vmax.f32 %v3159, %v3205
        %v3208 = vmax.f32 %v3160, %v3204
        %v3209 = vmax.f32 %v3161, %v3203
        %v3210 = vmax.f32 %v3162, %v3202
        %v3211 = vmax.f32 %v3163, %v3201
        %v3212 = vmax.f32 %v3164, %v3200
        %v3213 = vmax.f32 %v3165, %v3199
        %v3214 = vmax.f32 %v3166, %v3198
        %v3215 = vmax.f32 %v3167, %v3197
        %v3216 = vmax.f32 %v3168, %v3196
        %v3217 = vmax.f32 %v3169, %v3195
        %v3218 = vmax.f32 %v3170, %v3194
        %v3219 = vmax.f32 %v3171, %v3193
        %v3220 = vmax.f32 %v3172, %v3192
        %v3221 = vmax.f32 %v3173, %v3191
        %v3222 = vmax.f32 %v3174, %v3206
        %3223 = vst [vmem:[#allocation3] sm:$0xff] %v3207
        %3224 = vst [vmem:[#allocation3 + $0x8] sm:$0xff] %v3208
        %3225 = vst [vmem:[#allocation3 + $0x10] sm:$0xff] %v3209
        %3226 = vst [vmem:[#allocation3 + $0x18] sm:$0xff] %v3210
        %3227 = vst [vmem:[#allocation3 + $0x20] sm:$0xff] %v3211
        %3228 = vst [vmem:[#allocation3 + $0x28] sm:$0xff] %v3212
        %3229 = vst [vmem:[#allocation3 + $0x30] sm:$0xff] %v3213
        %3230 = vst [vmem:[#allocation3 + $0x38] sm:$0xff] %v3214
        %3231 = vst [vmem:[#allocation3 + $0x40] sm:$0xff] %v3215
        %3232 = vst [vmem:[#allocation3 + $0x48] sm:$0xff] %v3216
        %3233 = vst [vmem:[#allocation3 + $0x50] sm:$0xff] %v3217
        %3234 = vst [vmem:[#allocation3 + $0x58] sm:$0xff] %v3218
        %3235 = vst [vmem:[#allocation3 + $0x60] sm:$0xff] %v3219
        %3236 = vst [vmem:[#allocation3 + $0x68] sm:$0xff] %v3220
        %3237 = vst [vmem:[#allocation3 + $0x70] sm:$0xff] %v3221
        %3238 = vst [vmem:[#allocation3 + $0x78] sm:$0xff] %v3222
        %v3239 = vld [vmem:[#allocation3] ss:$4 sm:$0xff]
        %v3240 = vld [vmem:[%s1168] ss:$4 sm:$0xff]
        %v3241 = vld [vmem:[%s1170] ss:$4 sm:$0xff]
        %v3242 = vld [vmem:[%s1172] ss:$4 sm:$0xff]
        %s3243 = scalar_lea.vmem [#allocation2], 96
        %3244 = vst [vmem:[%s3243] sm:$0xff] %v3239
        %3245 = vst [vmem:[%s3243 + $0x8] sm:$0xff] %v3240
        %3246 = vst [vmem:[%s3243 + $0x10] sm:$0xff] %v3241
        %3247 = vst [vmem:[%s3243 + $0x18] sm:$0xff] %v3242
        %v3248 = vand.u32 %v350, 7
        %v3249 = vand.u32 %v351, 7
        %v3250 = vand.u32 %v352, 7
        %v3251 = vand.u32 %v353, 7
        %v3252 = vand.u32 %v354, 7
        %v3253 = vand.u32 %v355, 7
        %v3254 = vand.u32 %v356, 7
        %v3255 = vand.u32 %v357, 7
        %v3256 = vand.u32 %v358, 7
        %v3257 = vand.u32 %v359, 7
        %v3258 = vand.u32 %v360, 7
        %v3259 = vand.u32 %v361, 7
        %v3260 = vand.u32 %v362, 7
        %v3261 = vand.u32 %v363, 7
        %v3262 = vand.u32 %v364, 7
        %v3263 = vand.u32 %v365, 7
        %vm3264 = vcmp.eq.s32.totalorder %v3248, 0
        %vm3265 = vcmp.eq.s32.totalorder %v3249, 0
        %vm3266 = vcmp.eq.s32.totalorder %v3250, 0
        %vm3267 = vcmp.eq.s32.totalorder %v3251, 0
        %vm3268 = vcmp.eq.s32.totalorder %v3252, 0
        %vm3269 = vcmp.eq.s32.totalorder %v3253, 0
        %vm3270 = vcmp.eq.s32.totalorder %v3254, 0
        %vm3271 = vcmp.eq.s32.totalorder %v3255, 0
        %vm3272 = vcmp.eq.s32.totalorder %v3256, 0
        %vm3273 = vcmp.eq.s32.totalorder %v3257, 0
        %vm3274 = vcmp.eq.s32.totalorder %v3258, 0
        %vm3275 = vcmp.eq.s32.totalorder %v3259, 0
        %vm3276 = vcmp.eq.s32.totalorder %v3260, 0
        %vm3277 = vcmp.eq.s32.totalorder %v3261, 0
        %vm3278 = vcmp.eq.s32.totalorder %v3262, 0
        %vm3279 = vcmp.eq.s32.totalorder %v3263, 0
        %vm3280 = vcmp.eq.s32.totalorder %v3248, 7
        %vm3281 = vcmp.eq.s32.totalorder %v3249, 7
        %vm3282 = vcmp.eq.s32.totalorder %v3250, 7
        %vm3283 = vcmp.eq.s32.totalorder %v3251, 7
        %vm3284 = vcmp.eq.s32.totalorder %v3252, 7
        %vm3285 = vcmp.eq.s32.totalorder %v3253, 7
        %vm3286 = vcmp.eq.s32.totalorder %v3254, 7
        %vm3287 = vcmp.eq.s32.totalorder %v3255, 7
        %vm3288 = vcmp.eq.s32.totalorder %v3256, 7
        %vm3289 = vcmp.eq.s32.totalorder %v3257, 7
        %vm3290 = vcmp.eq.s32.totalorder %v3258, 7
        %vm3291 = vcmp.eq.s32.totalorder %v3259, 7
        %vm3292 = vcmp.eq.s32.totalorder %v3260, 7
        %vm3293 = vcmp.eq.s32.totalorder %v3261, 7
        %vm3294 = vcmp.eq.s32.totalorder %v3262, 7
        %vm3295 = vcmp.eq.s32.totalorder %v3263, 7
        %v3296 = vld [vmem:[#allocation2] sm:$0xff]
        %v3297 = vld [vmem:[#allocation2 + $0x8] sm:$0xff]
        %v3298 = vld [vmem:[#allocation2 + $0x10] sm:$0xff]
        %v3299 = vld [vmem:[#allocation2 + $0x18] sm:$0xff]
        %v3300 = vld [vmem:[#allocation2 + $0x20] sm:$0xff]
        %v3301 = vld [vmem:[#allocation2 + $0x28] sm:$0xff]
        %v3302 = vld [vmem:[#allocation2 + $0x30] sm:$0xff]
        %v3303 = vld [vmem:[#allocation2 + $0x38] sm:$0xff]
        %v3304 = vld [vmem:[#allocation2 + $0x40] sm:$0xff]
        %v3305 = vld [vmem:[#allocation2 + $0x48] sm:$0xff]
        %v3306 = vld [vmem:[#allocation2 + $0x50] sm:$0xff]
        %v3307 = vld [vmem:[#allocation2 + $0x58] sm:$0xff]
        %v3308 = vld [vmem:[#allocation2 + $0x60] sm:$0xff]
        %v3309 = vld [vmem:[#allocation2 + $0x68] sm:$0xff]
        %v3310 = vld [vmem:[#allocation2 + $0x70] sm:$0xff]
        %v3311 = vld [vmem:[#allocation2 + $0x78] sm:$0xff]
        %v3312 = vrot.slane %v3296, 7
        %v3313 = vrot.slane %v3297, 7
        %v3314 = vrot.slane %v3298, 7
        %v3315 = vrot.slane %v3299, 7
        %v3316 = vrot.slane %v3300, 7
        %v3317 = vrot.slane %v3301, 7
        %v3318 = vrot.slane %v3302, 7
        %v3319 = vrot.slane %v3303, 7
        %v3320 = vrot.slane %v3304, 7
        %v3321 = vrot.slane %v3305, 7
        %v3322 = vrot.slane %v3306, 7
        %v3323 = vrot.slane %v3307, 7
        %v3324 = vrot.slane %v3308, 7
        %v3325 = vrot.slane %v3309, 7
        %v3326 = vrot.slane %v3310, 7
        %v3327 = vrot.slane %v3311, 7
        %v3328 = vsel %vm562, %v3326, %v3327
        %v3329 = vsel %vm562, %v3325, %v3326
        %v3330 = vsel %vm562, %v3324, %v3325
        %v3331 = vsel %vm562, %v3323, %v3324
        %v3332 = vsel %vm562, %v3322, %v3323
        %v3333 = vsel %vm562, %v3321, %v3322
        %v3334 = vsel %vm562, %v3320, %v3321
        %v3335 = vsel %vm562, %v3319, %v3320
        %v3336 = vsel %vm562, %v3318, %v3319
        %v3337 = vsel %vm562, %v3317, %v3318
        %v3338 = vsel %vm562, %v3316, %v3317
        %v3339 = vsel %vm562, %v3315, %v3316
        %v3340 = vsel %vm562, %v3314, %v3315
        %v3341 = vsel %vm562, %v3313, %v3314
        %v3342 = vsel %vm562, %v3312, %v3313
        %v3343 = vsel %vm562, %v3327, %v3312
        %v3344 = vsel %vm3264, 1, 0
        %v3345 = vsel %vm3265, 1, 0
        %v3346 = vsel %vm3266, 1, 0
        %v3347 = vsel %vm3267, 1, 0
        %v3348 = vsel %vm3268, 1, 0
        %v3349 = vsel %vm3269, 1, 0
        %v3350 = vsel %vm3270, 1, 0
        %v3351 = vsel %vm3271, 1, 0
        %v3352 = vsel %vm3272, 1, 0
        %v3353 = vsel %vm3273, 1, 0
        %v3354 = vsel %vm3274, 1, 0
        %v3355 = vsel %vm3275, 1, 0
        %v3356 = vsel %vm3276, 1, 0
        %v3357 = vsel %vm3277, 1, 0
        %v3358 = vsel %vm3278, 1, 0
        %v3359 = vsel %vm3279, 1, 0
        %vm3360 = vcmp.eq.s32.totalorder %v3344, 1
        %vm3361 = vcmp.eq.s32.totalorder %v3345, 1
        %vm3362 = vcmp.eq.s32.totalorder %v3346, 1
        %vm3363 = vcmp.eq.s32.totalorder %v3347, 1
        %vm3364 = vcmp.eq.s32.totalorder %v3348, 1
        %vm3365 = vcmp.eq.s32.totalorder %v3349, 1
        %vm3366 = vcmp.eq.s32.totalorder %v3350, 1
        %vm3367 = vcmp.eq.s32.totalorder %v3351, 1
        %vm3368 = vcmp.eq.s32.totalorder %v3352, 1
        %vm3369 = vcmp.eq.s32.totalorder %v3353, 1
        %vm3370 = vcmp.eq.s32.totalorder %v3354, 1
        %vm3371 = vcmp.eq.s32.totalorder %v3355, 1
        %vm3372 = vcmp.eq.s32.totalorder %v3356, 1
        %vm3373 = vcmp.eq.s32.totalorder %v3357, 1
        %vm3374 = vcmp.eq.s32.totalorder %v3358, 1
        %vm3375 = vcmp.eq.s32.totalorder %v3359, 1
        %v3376 = vsel %vm3360, 0.0, %v3343
        %v3377 = vsel %vm3361, 0.0, %v3342
        %v3378 = vsel %vm3362, 0.0, %v3341
        %v3379 = vsel %vm3363, 0.0, %v3340
        %v3380 = vsel %vm3364, 0.0, %v3339
        %v3381 = vsel %vm3365, 0.0, %v3338
        %v3382 = vsel %vm3366, 0.0, %v3337
        %v3383 = vsel %vm3367, 0.0, %v3336
        %v3384 = vsel %vm3368, 0.0, %v3335
        %v3385 = vsel %vm3369, 0.0, %v3334
        %v3386 = vsel %vm3370, 0.0, %v3333
        %v3387 = vsel %vm3371, 0.0, %v3332
        %v3388 = vsel %vm3372, 0.0, %v3331
        %v3389 = vsel %vm3373, 0.0, %v3330
        %v3390 = vsel %vm3374, 0.0, %v3329
        %v3391 = vsel %vm3375, 0.0, %v3328
        %v3392 = vrot.slane %v3296, 1
        %v3393 = vrot.slane %v3297, 1
        %v3394 = vrot.slane %v3298, 1
        %v3395 = vrot.slane %v3299, 1
        %v3396 = vrot.slane %v3300, 1
        %v3397 = vrot.slane %v3301, 1
        %v3398 = vrot.slane %v3302, 1
        %v3399 = vrot.slane %v3303, 1
        %v3400 = vrot.slane %v3304, 1
        %v3401 = vrot.slane %v3305, 1
        %v3402 = vrot.slane %v3306, 1
        %v3403 = vrot.slane %v3307, 1
        %v3404 = vrot.slane %v3308, 1
        %v3405 = vrot.slane %v3309, 1
        %v3406 = vrot.slane %v3310, 1
        %v3407 = vrot.slane %v3311, 1
        %v3408 = vsel %vm643, %v3406, %v3407
        %v3409 = vsel %vm643, %v3405, %v3406
        %v3410 = vsel %vm643, %v3404, %v3405
        %v3411 = vsel %vm643, %v3403, %v3404
        %v3412 = vsel %vm643, %v3402, %v3403
        %v3413 = vsel %vm643, %v3401, %v3402
        %v3414 = vsel %vm643, %v3400, %v3401
        %v3415 = vsel %vm643, %v3399, %v3400
        %v3416 = vsel %vm643, %v3398, %v3399
        %v3417 = vsel %vm643, %v3397, %v3398
        %v3418 = vsel %vm643, %v3396, %v3397
        %v3419 = vsel %vm643, %v3395, %v3396
        %v3420 = vsel %vm643, %v3394, %v3395
        %v3421 = vsel %vm643, %v3393, %v3394
        %v3422 = vsel %vm643, %v3392, %v3393
        %v3423 = vsel %vm643, %v3407, %v3392
        %v3424 = vsel %vm3280, 1, 0
        %v3425 = vsel %vm3281, 1, 0
        %v3426 = vsel %vm3282, 1, 0
        %v3427 = vsel %vm3283, 1, 0
        %v3428 = vsel %vm3284, 1, 0
        %v3429 = vsel %vm3285, 1, 0
        %v3430 = vsel %vm3286, 1, 0
        %v3431 = vsel %vm3287, 1, 0
        %v3432 = vsel %vm3288, 1, 0
        %v3433 = vsel %vm3289, 1, 0
        %v3434 = vsel %vm3290, 1, 0
        %v3435 = vsel %vm3291, 1, 0
        %v3436 = vsel %vm3292, 1, 0
        %v3437 = vsel %vm3293, 1, 0
        %v3438 = vsel %vm3294, 1, 0
        %v3439 = vsel %vm3295, 1, 0
        %vm3440 = vcmp.eq.s32.totalorder %v3424, 1
        %vm3441 = vcmp.eq.s32.totalorder %v3425, 1
        %vm3442 = vcmp.eq.s32.totalorder %v3426, 1
        %vm3443 = vcmp.eq.s32.totalorder %v3427, 1
        %vm3444 = vcmp.eq.s32.totalorder %v3428, 1
        %vm3445 = vcmp.eq.s32.totalorder %v3429, 1
        %vm3446 = vcmp.eq.s32.totalorder %v3430, 1
        %vm3447 = vcmp.eq.s32.totalorder %v3431, 1
        %vm3448 = vcmp.eq.s32.totalorder %v3432, 1
        %vm3449 = vcmp.eq.s32.totalorder %v3433, 1
        %vm3450 = vcmp.eq.s32.totalorder %v3434, 1
        %vm3451 = vcmp.eq.s32.totalorder %v3435, 1
        %vm3452 = vcmp.eq.s32.totalorder %v3436, 1
        %vm3453 = vcmp.eq.s32.totalorder %v3437, 1
        %vm3454 = vcmp.eq.s32.totalorder %v3438, 1
        %vm3455 = vcmp.eq.s32.totalorder %v3439, 1
        %v3456 = vsel %vm3440, 0.0, %v3422
        %v3457 = vsel %vm3441, 0.0, %v3421
        %v3458 = vsel %vm3442, 0.0, %v3420
        %v3459 = vsel %vm3443, 0.0, %v3419
        %v3460 = vsel %vm3444, 0.0, %v3418
        %v3461 = vsel %vm3445, 0.0, %v3417
        %v3462 = vsel %vm3446, 0.0, %v3416
        %v3463 = vsel %vm3447, 0.0, %v3415
        %v3464 = vsel %vm3448, 0.0, %v3414
        %v3465 = vsel %vm3449, 0.0, %v3413
        %v3466 = vsel %vm3450, 0.0, %v3412
        %v3467 = vsel %vm3451, 0.0, %v3411
        %v3468 = vsel %vm3452, 0.0, %v3410
        %v3469 = vsel %vm3453, 0.0, %v3409
        %v3470 = vsel %vm3454, 0.0, %v3408
        %v3471 = vsel %vm3455, 0.0, %v3423
        %s3472 = scalar_lea.vmem [#allocation5], 384
        %v3473 = vld [vmem:[%s3472] sm:$0xff]
        %v3474 = vld [vmem:[%s3472 + $0x8] sm:$0xff]
        %v3475 = vld [vmem:[%s3472 + $0x10] sm:$0xff]
        %v3476 = vld [vmem:[%s3472 + $0x18] sm:$0xff]
        %v3477 = vld [vmem:[%s3472 + $0x20] sm:$0xff]
        %v3478 = vld [vmem:[%s3472 + $0x28] sm:$0xff]
        %v3479 = vld [vmem:[%s3472 + $0x30] sm:$0xff]
        %v3480 = vld [vmem:[%s3472 + $0x38] sm:$0xff]
        %v3481 = vld [vmem:[%s3472 + $0x40] sm:$0xff]
        %v3482 = vld [vmem:[%s3472 + $0x48] sm:$0xff]
        %v3483 = vld [vmem:[%s3472 + $0x50] sm:$0xff]
        %v3484 = vld [vmem:[%s3472 + $0x58] sm:$0xff]
        %v3485 = vld [vmem:[%s3472 + $0x60] sm:$0xff]
        %v3486 = vld [vmem:[%s3472 + $0x68] sm:$0xff]
        %v3487 = vld [vmem:[%s3472 + $0x70] sm:$0xff]
        %v3488 = vld [vmem:[%s3472 + $0x78] sm:$0xff]
        %s3489 = scalar_lea.vmem [#allocation5], 512
        %v3490 = vld [vmem:[%s3489] sm:$0xff]
        %v3491 = vld [vmem:[%s3489 + $0x8] sm:$0xff]
        %v3492 = vld [vmem:[%s3489 + $0x10] sm:$0xff]
        %v3493 = vld [vmem:[%s3489 + $0x18] sm:$0xff]
        %v3494 = vld [vmem:[%s3489 + $0x20] sm:$0xff]
        %v3495 = vld [vmem:[%s3489 + $0x28] sm:$0xff]
        %v3496 = vld [vmem:[%s3489 + $0x30] sm:$0xff]
        %v3497 = vld [vmem:[%s3489 + $0x38] sm:$0xff]
        %v3498 = vld [vmem:[%s3489 + $0x40] sm:$0xff]
        %v3499 = vld [vmem:[%s3489 + $0x48] sm:$0xff]
        %v3500 = vld [vmem:[%s3489 + $0x50] sm:$0xff]
        %v3501 = vld [vmem:[%s3489 + $0x58] sm:$0xff]
        %v3502 = vld [vmem:[%s3489 + $0x60] sm:$0xff]
        %v3503 = vld [vmem:[%s3489 + $0x68] sm:$0xff]
        %v3504 = vld [vmem:[%s3489 + $0x70] sm:$0xff]
        %v3505 = vld [vmem:[%s3489 + $0x78] sm:$0xff]
        %3506 = vmatpush.msra.mxu0 %v3505
        %3507 = vmatpush.msra.mxu0 %v3504
        %3508 = vmatpush.msra.mxu0 %v3503
        %3509 = vmatpush.msra.mxu0 %v3502
        %3510 = vmatpush.msra.mxu0 %v3501
        %3511 = vmatpush.msra.mxu0 %v3500
        %3512 = vmatpush.msra.mxu0 %v3499
        %3513 = vmatpush.msra.mxu0 %v3498
        %3514 = vmatpush.msra.mxu0 %v3497
        %3515 = vmatpush.msra.mxu0 %v3496
        %3516 = vmatpush.msra.mxu0 %v3495
        %3517 = vmatpush.msra.mxu0 %v3494
        %3518 = vmatpush.msra.mxu0 %v3493
        %3519 = vmatpush.msra.mxu0 %v3492
        %3520 = vmatpush.msra.mxu0 %v3491
        %3521 = vmatpush.msra.mxu0 %v3490
        %3522 = vmatmul.f32.gmra.mxu0 %v3296
        %v3523 = vpop.f32.mrf.mxu0
        %v3524 = vadd.f32 0.0, %v3523
        %3525 = vmatmul.f32.gmra.mxu0 %v3297
        %v3526 = vpop.f32.mrf.mxu0
        %v3527 = vadd.f32 0.0, %v3526
        %3528 = vmatmul.f32.gmra.mxu0 %v3298
        %v3529 = vpop.f32.mrf.mxu0
        %v3530 = vadd.f32 0.0, %v3529
        %3531 = vmatmul.f32.gmra.mxu0 %v3299
        %v3532 = vpop.f32.mrf.mxu0
        %v3533 = vadd.f32 0.0, %v3532
        %3534 = vmatmul.f32.gmra.mxu0 %v3300
        %v3535 = vpop.f32.mrf.mxu0
        %v3536 = vadd.f32 0.0, %v3535
        %3537 = vmatmul.f32.gmra.mxu0 %v3301
        %v3538 = vpop.f32.mrf.mxu0
        %v3539 = vadd.f32 0.0, %v3538
        %3540 = vmatmul.f32.gmra.mxu0 %v3302
        %v3541 = vpop.f32.mrf.mxu0
        %v3542 = vadd.f32 0.0, %v3541
        %3543 = vmatmul.f32.gmra.mxu0 %v3303
        %v3544 = vpop.f32.mrf.mxu0
        %v3545 = vadd.f32 0.0, %v3544
        %3546 = vmatmul.f32.gmra.mxu0 %v3304
        %v3547 = vpop.f32.mrf.mxu0
        %v3548 = vadd.f32 0.0, %v3547
        %3549 = vmatmul.f32.gmra.mxu0 %v3305
        %v3550 = vpop.f32.mrf.mxu0
        %v3551 = vadd.f32 0.0, %v3550
        %3552 = vmatmul.f32.gmra.mxu0 %v3306
        %v3553 = vpop.f32.mrf.mxu0
        %v3554 = vadd.f32 0.0, %v3553
        %3555 = vmatmul.f32.gmra.mxu0 %v3307
        %v3556 = vpop.f32.mrf.mxu0
        %v3557 = vadd.f32 0.0, %v3556
        %3558 = vmatmul.f32.gmra.mxu0 %v3308
        %v3559 = vpop.f32.mrf.mxu0
        %v3560 = vadd.f32 0.0, %v3559
        %3561 = vmatmul.f32.gmra.mxu0 %v3309
        %v3562 = vpop.f32.mrf.mxu0
        %v3563 = vadd.f32 0.0, %v3562
        %3564 = vmatmul.f32.gmra.mxu0 %v3310
        %v3565 = vpop.f32.mrf.mxu0
        %v3566 = vadd.f32 0.0, %v3565
        %3567 = vmatmul.f32.gmra.mxu0 %v3311
        %v3568 = vpop.f32.mrf.mxu0
        %v3569 = vadd.f32 0.0, %v3568
        %3570 = vdwg.mxu0
        %3571 = vmatpush.msra.mxu0 %v3488
        %3572 = vmatpush.msra.mxu0 %v3487
        %3573 = vmatpush.msra.mxu0 %v3486
        %3574 = vmatpush.msra.mxu0 %v3485
        %3575 = vmatpush.msra.mxu0 %v3484
        %3576 = vmatpush.msra.mxu0 %v3483
        %3577 = vmatpush.msra.mxu0 %v3482
        %3578 = vmatpush.msra.mxu0 %v3481
        %3579 = vmatpush.msra.mxu0 %v3480
        %3580 = vmatpush.msra.mxu0 %v3479
        %3581 = vmatpush.msra.mxu0 %v3478
        %3582 = vmatpush.msra.mxu0 %v3477
        %3583 = vmatpush.msra.mxu0 %v3476
        %3584 = vmatpush.msra.mxu0 %v3475
        %3585 = vmatpush.msra.mxu0 %v3474
        %3586 = vmatpush.msra.mxu0 %v3473
        %3587 = vmatmul.f32.gmra.mxu0 %v3376
        %v3588 = vpop.f32.mrf.mxu0
        %v3589 = vadd.f32 %v3524, %v3588
        %3590 = vmatmul.f32.gmra.mxu0 %v3377
        %v3591 = vpop.f32.mrf.mxu0
        %v3592 = vadd.f32 %v3527, %v3591
        %3593 = vmatmul.f32.gmra.mxu0 %v3378
        %v3594 = vpop.f32.mrf.mxu0
        %v3595 = vadd.f32 %v3530, %v3594
        %3596 = vmatmul.f32.gmra.mxu0 %v3379
        %v3597 = vpop.f32.mrf.mxu0
        %v3598 = vadd.f32 %v3533, %v3597
        %3599 = vmatmul.f32.gmra.mxu0 %v3380
        %v3600 = vpop.f32.mrf.mxu0
        %v3601 = vadd.f32 %v3536, %v3600
        %3602 = vmatmul.f32.gmra.mxu0 %v3381
        %v3603 = vpop.f32.mrf.mxu0
        %v3604 = vadd.f32 %v3539, %v3603
        %3605 = vmatmul.f32.gmra.mxu0 %v3382
        %v3606 = vpop.f32.mrf.mxu0
        %v3607 = vadd.f32 %v3542, %v3606
        %3608 = vmatmul.f32.gmra.mxu0 %v3383
        %v3609 = vpop.f32.mrf.mxu0
        %v3610 = vadd.f32 %v3545, %v3609
        %3611 = vmatmul.f32.gmra.mxu0 %v3384
        %v3612 = vpop.f32.mrf.mxu0
        %v3613 = vadd.f32 %v3548, %v3612
        %3614 = vmatmul.f32.gmra.mxu0 %v3385
        %v3615 = vpop.f32.mrf.mxu0
        %v3616 = vadd.f32 %v3551, %v3615
        %3617 = vmatmul.f32.gmra.mxu0 %v3386
        %v3618 = vpop.f32.mrf.mxu0
        %v3619 = vadd.f32 %v3554, %v3618
        %3620 = vmatmul.f32.gmra.mxu0 %v3387
        %v3621 = vpop.f32.mrf.mxu0
        %v3622 = vadd.f32 %v3557, %v3621
        %3623 = vmatmul.f32.gmra.mxu0 %v3388
        %v3624 = vpop.f32.mrf.mxu0
        %v3625 = vadd.f32 %v3560, %v3624
        %3626 = vmatmul.f32.gmra.mxu0 %v3389
        %v3627 = vpop.f32.mrf.mxu0
        %v3628 = vadd.f32 %v3563, %v3627
        %3629 = vmatmul.f32.gmra.mxu0 %v3390
        %v3630 = vpop.f32.mrf.mxu0
        %v3631 = vadd.f32 %v3566, %v3630
        %3632 = vmatmul.f32.gmra.mxu0 %v3391
        %v3633 = vpop.f32.mrf.mxu0
        %v3634 = vadd.f32 %v3569, %v3633
        %3635 = vdwg.mxu0
        %s3636 = scalar_lea.vmem [#allocation5], 640
        %v3637 = vld [vmem:[%s3636] sm:$0xff]
        %v3638 = vld [vmem:[%s3636 + $0x8] sm:$0xff]
        %v3639 = vld [vmem:[%s3636 + $0x10] sm:$0xff]
        %v3640 = vld [vmem:[%s3636 + $0x18] sm:$0xff]
        %v3641 = vld [vmem:[%s3636 + $0x20] sm:$0xff]
        %v3642 = vld [vmem:[%s3636 + $0x28] sm:$0xff]
        %v3643 = vld [vmem:[%s3636 + $0x30] sm:$0xff]
        %v3644 = vld [vmem:[%s3636 + $0x38] sm:$0xff]
        %v3645 = vld [vmem:[%s3636 + $0x40] sm:$0xff]
        %v3646 = vld [vmem:[%s3636 + $0x48] sm:$0xff]
        %v3647 = vld [vmem:[%s3636 + $0x50] sm:$0xff]
        %v3648 = vld [vmem:[%s3636 + $0x58] sm:$0xff]
        %v3649 = vld [vmem:[%s3636 + $0x60] sm:$0xff]
        %v3650 = vld [vmem:[%s3636 + $0x68] sm:$0xff]
        %v3651 = vld [vmem:[%s3636 + $0x70] sm:$0xff]
        %v3652 = vld [vmem:[%s3636 + $0x78] sm:$0xff]
        %3653 = vmatpush.msra.mxu0 %v3652
        %3654 = vmatpush.msra.mxu0 %v3651
        %3655 = vmatpush.msra.mxu0 %v3650
        %3656 = vmatpush.msra.mxu0 %v3649
        %3657 = vmatpush.msra.mxu0 %v3648
        %3658 = vmatpush.msra.mxu0 %v3647
        %3659 = vmatpush.msra.mxu0 %v3646
        %3660 = vmatpush.msra.mxu0 %v3645
        %3661 = vmatpush.msra.mxu0 %v3644
        %3662 = vmatpush.msra.mxu0 %v3643
        %3663 = vmatpush.msra.mxu0 %v3642
        %3664 = vmatpush.msra.mxu0 %v3641
        %3665 = vmatpush.msra.mxu0 %v3640
        %3666 = vmatpush.msra.mxu0 %v3639
        %3667 = vmatpush.msra.mxu0 %v3638
        %3668 = vmatpush.msra.mxu0 %v3637
        %3669 = vmatmul.f32.gmra.mxu0 %v3456
        %v3670 = vpop.f32.mrf.mxu0
        %v3671 = vadd.f32 0.0, %v3670
        %3672 = vmatmul.f32.gmra.mxu0 %v3457
        %v3673 = vpop.f32.mrf.mxu0
        %v3674 = vadd.f32 0.0, %v3673
        %3675 = vmatmul.f32.gmra.mxu0 %v3458
        %v3676 = vpop.f32.mrf.mxu0
        %v3677 = vadd.f32 0.0, %v3676
        %3678 = vmatmul.f32.gmra.mxu0 %v3459
        %v3679 = vpop.f32.mrf.mxu0
        %v3680 = vadd.f32 0.0, %v3679
        %3681 = vmatmul.f32.gmra.mxu0 %v3460
        %v3682 = vpop.f32.mrf.mxu0
        %v3683 = vadd.f32 0.0, %v3682
        %3684 = vmatmul.f32.gmra.mxu0 %v3461
        %v3685 = vpop.f32.mrf.mxu0
        %v3686 = vadd.f32 0.0, %v3685
        %3687 = vmatmul.f32.gmra.mxu0 %v3462
        %v3688 = vpop.f32.mrf.mxu0
        %v3689 = vadd.f32 0.0, %v3688
        %3690 = vmatmul.f32.gmra.mxu0 %v3463
        %v3691 = vpop.f32.mrf.mxu0
        %v3692 = vadd.f32 0.0, %v3691
        %3693 = vmatmul.f32.gmra.mxu0 %v3464
        %v3694 = vpop.f32.mrf.mxu0
        %v3695 = vadd.f32 0.0, %v3694
        %3696 = vmatmul.f32.gmra.mxu0 %v3465
        %v3697 = vpop.f32.mrf.mxu0
        %v3698 = vadd.f32 0.0, %v3697
        %3699 = vmatmul.f32.gmra.mxu0 %v3466
        %v3700 = vpop.f32.mrf.mxu0
        %v3701 = vadd.f32 0.0, %v3700
        %3702 = vmatmul.f32.gmra.mxu0 %v3467
        %v3703 = vpop.f32.mrf.mxu0
        %v3704 = vadd.f32 0.0, %v3703
        %3705 = vmatmul.f32.gmra.mxu0 %v3468
        %v3706 = vpop.f32.mrf.mxu0
        %v3707 = vadd.f32 0.0, %v3706
        %3708 = vmatmul.f32.gmra.mxu0 %v3469
        %v3709 = vpop.f32.mrf.mxu0
        %v3710 = vadd.f32 0.0, %v3709
        %3711 = vmatmul.f32.gmra.mxu0 %v3470
        %v3712 = vpop.f32.mrf.mxu0
        %v3713 = vadd.f32 0.0, %v3712
        %3714 = vmatmul.f32.gmra.mxu0 %v3471
        %v3715 = vpop.f32.mrf.mxu0
        %v3716 = vadd.f32 0.0, %v3715
        %3717 = vdwg.mxu0
        %v3718 = vadd.f32 %v3589, %v3671
        %v3719 = vadd.f32 %v3592, %v3674
        %v3720 = vadd.f32 %v3595, %v3677
        %v3721 = vadd.f32 %v3598, %v3680
        %v3722 = vadd.f32 %v3601, %v3683
        %v3723 = vadd.f32 %v3604, %v3686
        %v3724 = vadd.f32 %v3607, %v3689
        %v3725 = vadd.f32 %v3610, %v3692
        %v3726 = vadd.f32 %v3613, %v3695
        %v3727 = vadd.f32 %v3616, %v3698
        %v3728 = vadd.f32 %v3619, %v3701
        %v3729 = vadd.f32 %v3622, %v3704
        %v3730 = vadd.f32 %v3625, %v3707
        %v3731 = vadd.f32 %v3628, %v3710
        %v3732 = vadd.f32 %v3631, %v3713
        %v3733 = vadd.f32 %v3634, %v3716
        %s3734 = scalar_lea.vmem %s3, 1
        %v3735 = vld [vmem:[%s3734] sm:$0x1]
        %v3737 = vperm.slane %v3735, 0
        %v3739 = vadd.f32 %v3718, %v3737
        %v3740 = vadd.f32 %v3719, %v3737
        %v3741 = vadd.f32 %v3720, %v3737
        %v3742 = vadd.f32 %v3721, %v3737
        %v3743 = vadd.f32 %v3722, %v3737
        %v3744 = vadd.f32 %v3723, %v3737
        %v3745 = vadd.f32 %v3724, %v3737
        %v3746 = vadd.f32 %v3725, %v3737
        %v3747 = vadd.f32 %v3726, %v3737
        %v3748 = vadd.f32 %v3727, %v3737
        %v3749 = vadd.f32 %v3728, %v3737
        %v3750 = vadd.f32 %v3729, %v3737
        %v3751 = vadd.f32 %v3730, %v3737
        %v3752 = vadd.f32 %v3731, %v3737
        %v3753 = vadd.f32 %v3732, %v3737
        %v3754 = vadd.f32 %v3733, %v3737
        %v3755 = vrot.slane %v3739, 7
        %v3756 = vrot.slane %v3740, 7
        %v3757 = vrot.slane %v3741, 7
        %v3758 = vrot.slane %v3742, 7
        %v3759 = vrot.slane %v3743, 7
        %v3760 = vrot.slane %v3744, 7
        %v3761 = vrot.slane %v3745, 7
        %v3762 = vrot.slane %v3746, 7
        %v3763 = vrot.slane %v3747, 7
        %v3764 = vrot.slane %v3748, 7
        %v3765 = vrot.slane %v3749, 7
        %v3766 = vrot.slane %v3750, 7
        %v3767 = vrot.slane %v3751, 7
        %v3768 = vrot.slane %v3752, 7
        %v3769 = vrot.slane %v3753, 7
        %v3770 = vrot.slane %v3754, 7
        %v3771 = vsel %vm562, %v3769, %v3770
        %v3772 = vsel %vm562, %v3768, %v3769
        %v3773 = vsel %vm562, %v3767, %v3768
        %v3774 = vsel %vm562, %v3766, %v3767
        %v3775 = vsel %vm562, %v3765, %v3766
        %v3776 = vsel %vm562, %v3764, %v3765
        %v3777 = vsel %vm562, %v3763, %v3764
        %v3778 = vsel %vm562, %v3762, %v3763
        %v3779 = vsel %vm562, %v3761, %v3762
        %v3780 = vsel %vm562, %v3760, %v3761
        %v3781 = vsel %vm562, %v3759, %v3760
        %v3782 = vsel %vm562, %v3758, %v3759
        %v3783 = vsel %vm562, %v3757, %v3758
        %v3784 = vsel %vm562, %v3756, %v3757
        %v3785 = vsel %vm562, %v3755, %v3756
        %v3786 = vsel %vm562, %v3770, %v3755
        %v3787 = vsel %vm3360, 0.0, %v3786
        %v3788 = vsel %vm3361, 0.0, %v3785
        %v3789 = vsel %vm3362, 0.0, %v3784
        %v3790 = vsel %vm3363, 0.0, %v3783
        %v3791 = vsel %vm3364, 0.0, %v3782
        %v3792 = vsel %vm3365, 0.0, %v3781
        %v3793 = vsel %vm3366, 0.0, %v3780
        %v3794 = vsel %vm3367, 0.0, %v3779
        %v3795 = vsel %vm3368, 0.0, %v3778
        %v3796 = vsel %vm3369, 0.0, %v3777
        %v3797 = vsel %vm3370, 0.0, %v3776
        %v3798 = vsel %vm3371, 0.0, %v3775
        %v3799 = vsel %vm3372, 0.0, %v3774
        %v3800 = vsel %vm3373, 0.0, %v3773
        %v3801 = vsel %vm3374, 0.0, %v3772
        %v3802 = vsel %vm3375, 0.0, %v3771
        %v3803 = vrot.slane %v3739, 1
        %v3804 = vrot.slane %v3740, 1
        %v3805 = vrot.slane %v3741, 1
        %v3806 = vrot.slane %v3742, 1
        %v3807 = vrot.slane %v3743, 1
        %v3808 = vrot.slane %v3744, 1
        %v3809 = vrot.slane %v3745, 1
        %v3810 = vrot.slane %v3746, 1
        %v3811 = vrot.slane %v3747, 1
        %v3812 = vrot.slane %v3748, 1
        %v3813 = vrot.slane %v3749, 1
        %v3814 = vrot.slane %v3750, 1
        %v3815 = vrot.slane %v3751, 1
        %v3816 = vrot.slane %v3752, 1
        %v3817 = vrot.slane %v3753, 1
        %v3818 = vrot.slane %v3754, 1
        %v3819 = vsel %vm643, %v3817, %v3818
        %v3820 = vsel %vm643, %v3816, %v3817
        %v3821 = vsel %vm643, %v3815, %v3816
        %v3822 = vsel %vm643, %v3814, %v3815
        %v3823 = vsel %vm643, %v3813, %v3814
        %v3824 = vsel %vm643, %v3812, %v3813
        %v3825 = vsel %vm643, %v3811, %v3812
        %v3826 = vsel %vm643, %v3810, %v3811
        %v3827 = vsel %vm643, %v3809, %v3810
        %v3828 = vsel %vm643, %v3808, %v3809
        %v3829 = vsel %vm643, %v3807, %v3808
        %v3830 = vsel %vm643, %v3806, %v3807
        %v3831 = vsel %vm643, %v3805, %v3806
        %v3832 = vsel %vm643, %v3804, %v3805
        %v3833 = vsel %vm643, %v3803, %v3804
        %v3834 = vsel %vm643, %v3818, %v3803
        %v3835 = vsel %vm3440, 0.0, %v3833
        %v3836 = vsel %vm3441, 0.0, %v3832
        %v3837 = vsel %vm3442, 0.0, %v3831
        %v3838 = vsel %vm3443, 0.0, %v3830
        %v3839 = vsel %vm3444, 0.0, %v3829
        %v3840 = vsel %vm3445, 0.0, %v3828
        %v3841 = vsel %vm3446, 0.0, %v3827
        %v3842 = vsel %vm3447, 0.0, %v3826
        %v3843 = vsel %vm3448, 0.0, %v3825
        %v3844 = vsel %vm3449, 0.0, %v3824
        %v3845 = vsel %vm3450, 0.0, %v3823
        %v3846 = vsel %vm3451, 0.0, %v3822
        %v3847 = vsel %vm3452, 0.0, %v3821
        %v3848 = vsel %vm3453, 0.0, %v3820
        %v3849 = vsel %vm3454, 0.0, %v3819
        %v3850 = vsel %vm3455, 0.0, %v3834
        %s3851 = scalar_lea.vmem [#allocation5], 768
        %v3852 = vld [vmem:[%s3851] sm:$0xff]
        %v3853 = vld [vmem:[%s3851 + $0x8] sm:$0xff]
        %v3854 = vld [vmem:[%s3851 + $0x10] sm:$0xff]
        %v3855 = vld [vmem:[%s3851 + $0x18] sm:$0xff]
        %v3856 = vld [vmem:[%s3851 + $0x20] sm:$0xff]
        %v3857 = vld [vmem:[%s3851 + $0x28] sm:$0xff]
        %v3858 = vld [vmem:[%s3851 + $0x30] sm:$0xff]
        %v3859 = vld [vmem:[%s3851 + $0x38] sm:$0xff]
        %v3860 = vld [vmem:[%s3851 + $0x40] sm:$0xff]
        %v3861 = vld [vmem:[%s3851 + $0x48] sm:$0xff]
        %v3862 = vld [vmem:[%s3851 + $0x50] sm:$0xff]
        %v3863 = vld [vmem:[%s3851 + $0x58] sm:$0xff]
        %v3864 = vld [vmem:[%s3851 + $0x60] sm:$0xff]
        %v3865 = vld [vmem:[%s3851 + $0x68] sm:$0xff]
        %v3866 = vld [vmem:[%s3851 + $0x70] sm:$0xff]
        %v3867 = vld [vmem:[%s3851 + $0x78] sm:$0xff]
        %s3868 = scalar_lea.vmem [#allocation5], 896
        %v3869 = vld [vmem:[%s3868] sm:$0xff]
        %v3870 = vld [vmem:[%s3868 + $0x8] sm:$0xff]
        %v3871 = vld [vmem:[%s3868 + $0x10] sm:$0xff]
        %v3872 = vld [vmem:[%s3868 + $0x18] sm:$0xff]
        %v3873 = vld [vmem:[%s3868 + $0x20] sm:$0xff]
        %v3874 = vld [vmem:[%s3868 + $0x28] sm:$0xff]
        %v3875 = vld [vmem:[%s3868 + $0x30] sm:$0xff]
        %v3876 = vld [vmem:[%s3868 + $0x38] sm:$0xff]
        %v3877 = vld [vmem:[%s3868 + $0x40] sm:$0xff]
        %v3878 = vld [vmem:[%s3868 + $0x48] sm:$0xff]
        %v3879 = vld [vmem:[%s3868 + $0x50] sm:$0xff]
        %v3880 = vld [vmem:[%s3868 + $0x58] sm:$0xff]
        %v3881 = vld [vmem:[%s3868 + $0x60] sm:$0xff]
        %v3882 = vld [vmem:[%s3868 + $0x68] sm:$0xff]
        %v3883 = vld [vmem:[%s3868 + $0x70] sm:$0xff]
        %v3884 = vld [vmem:[%s3868 + $0x78] sm:$0xff]
        %3885 = vmatpush.msra.mxu0 %v3884
        %3886 = vmatpush.msra.mxu0 %v3883
        %3887 = vmatpush.msra.mxu0 %v3882
        %3888 = vmatpush.msra.mxu0 %v3881
        %3889 = vmatpush.msra.mxu0 %v3880
        %3890 = vmatpush.msra.mxu0 %v3879
        %3891 = vmatpush.msra.mxu0 %v3878
        %3892 = vmatpush.msra.mxu0 %v3877
        %3893 = vmatpush.msra.mxu0 %v3876
        %3894 = vmatpush.msra.mxu0 %v3875
        %3895 = vmatpush.msra.mxu0 %v3874
        %3896 = vmatpush.msra.mxu0 %v3873
        %3897 = vmatpush.msra.mxu0 %v3872
        %3898 = vmatpush.msra.mxu0 %v3871
        %3899 = vmatpush.msra.mxu0 %v3870
        %3900 = vmatpush.msra.mxu0 %v3869
        %3901 = vmatmul.f32.gmra.mxu0 %v3739
        %v3902 = vpop.f32.mrf.mxu0
        %v3903 = vadd.f32 0.0, %v3902
        %3904 = vmatmul.f32.gmra.mxu0 %v3740
        %v3905 = vpop.f32.mrf.mxu0
        %v3906 = vadd.f32 0.0, %v3905
        %3907 = vmatmul.f32.gmra.mxu0 %v3741
        %v3908 = vpop.f32.mrf.mxu0
        %v3909 = vadd.f32 0.0, %v3908
        %3910 = vmatmul.f32.gmra.mxu0 %v3742
        %v3911 = vpop.f32.mrf.mxu0
        %v3912 = vadd.f32 0.0, %v3911
        %3913 = vmatmul.f32.gmra.mxu0 %v3743
        %v3914 = vpop.f32.mrf.mxu0
        %v3915 = vadd.f32 0.0, %v3914
        %3916 = vmatmul.f32.gmra.mxu0 %v3744
        %v3917 = vpop.f32.mrf.mxu0
        %v3918 = vadd.f32 0.0, %v3917
        %3919 = vmatmul.f32.gmra.mxu0 %v3745
        %v3920 = vpop.f32.mrf.mxu0
        %v3921 = vadd.f32 0.0, %v3920
        %3922 = vmatmul.f32.gmra.mxu0 %v3746
        %v3923 = vpop.f32.mrf.mxu0
        %v3924 = vadd.f32 0.0, %v3923
        %3925 = vmatmul.f32.gmra.mxu0 %v3747
        %v3926 = vpop.f32.mrf.mxu0
        %v3927 = vadd.f32 0.0, %v3926
        %3928 = vmatmul.f32.gmra.mxu0 %v3748
        %v3929 = vpop.f32.mrf.mxu0
        %v3930 = vadd.f32 0.0, %v3929
        %3931 = vmatmul.f32.gmra.mxu0 %v3749
        %v3932 = vpop.f32.mrf.mxu0
        %v3933 = vadd.f32 0.0, %v3932
        %3934 = vmatmul.f32.gmra.mxu0 %v3750
        %v3935 = vpop.f32.mrf.mxu0
        %v3936 = vadd.f32 0.0, %v3935
        %3937 = vmatmul.f32.gmra.mxu0 %v3751
        %v3938 = vpop.f32.mrf.mxu0
        %v3939 = vadd.f32 0.0, %v3938
        %3940 = vmatmul.f32.gmra.mxu0 %v3752
        %v3941 = vpop.f32.mrf.mxu0
        %v3942 = vadd.f32 0.0, %v3941
        %3943 = vmatmul.f32.gmra.mxu0 %v3753
        %v3944 = vpop.f32.mrf.mxu0
        %v3945 = vadd.f32 0.0, %v3944
        %3946 = vmatmul.f32.gmra.mxu0 %v3754
        %v3947 = vpop.f32.mrf.mxu0
        %v3948 = vadd.f32 0.0, %v3947
        %3949 = vdwg.mxu0
        %3950 = vmatpush.msra.mxu0 %v3867
        %3951 = vmatpush.msra.mxu0 %v3866
        %3952 = vmatpush.msra.mxu0 %v3865
        %3953 = vmatpush.msra.mxu0 %v3864
        %3954 = vmatpush.msra.mxu0 %v3863
        %3955 = vmatpush.msra.mxu0 %v3862
        %3956 = vmatpush.msra.mxu0 %v3861
        %3957 = vmatpush.msra.mxu0 %v3860
        %3958 = vmatpush.msra.mxu0 %v3859
        %3959 = vmatpush.msra.mxu0 %v3858
        %3960 = vmatpush.msra.mxu0 %v3857
        %3961 = vmatpush.msra.mxu0 %v3856
        %3962 = vmatpush.msra.mxu0 %v3855
        %3963 = vmatpush.msra.mxu0 %v3854
        %3964 = vmatpush.msra.mxu0 %v3853
        %3965 = vmatpush.msra.mxu0 %v3852
        %3966 = vmatmul.f32.gmra.mxu0 %v3787
        %v3967 = vpop.f32.mrf.mxu0
        %v3968 = vadd.f32 %v3903, %v3967
        %3969 = vmatmul.f32.gmra.mxu0 %v3788
        %v3970 = vpop.f32.mrf.mxu0
        %v3971 = vadd.f32 %v3906, %v3970
        %3972 = vmatmul.f32.gmra.mxu0 %v3789
        %v3973 = vpop.f32.mrf.mxu0
        %v3974 = vadd.f32 %v3909, %v3973
        %3975 = vmatmul.f32.gmra.mxu0 %v3790
        %v3976 = vpop.f32.mrf.mxu0
        %v3977 = vadd.f32 %v3912, %v3976
        %3978 = vmatmul.f32.gmra.mxu0 %v3791
        %v3979 = vpop.f32.mrf.mxu0
        %v3980 = vadd.f32 %v3915, %v3979
        %3981 = vmatmul.f32.gmra.mxu0 %v3792
        %v3982 = vpop.f32.mrf.mxu0
        %v3983 = vadd.f32 %v3918, %v3982
        %3984 = vmatmul.f32.gmra.mxu0 %v3793
        %v3985 = vpop.f32.mrf.mxu0
        %v3986 = vadd.f32 %v3921, %v3985
        %3987 = vmatmul.f32.gmra.mxu0 %v3794
        %v3988 = vpop.f32.mrf.mxu0
        %v3989 = vadd.f32 %v3924, %v3988
        %3990 = vmatmul.f32.gmra.mxu0 %v3795
        %v3991 = vpop.f32.mrf.mxu0
        %v3992 = vadd.f32 %v3927, %v3991
        %3993 = vmatmul.f32.gmra.mxu0 %v3796
        %v3994 = vpop.f32.mrf.mxu0
        %v3995 = vadd.f32 %v3930, %v3994
        %3996 = vmatmul.f32.gmra.mxu0 %v3797
        %v3997 = vpop.f32.mrf.mxu0
        %v3998 = vadd.f32 %v3933, %v3997
        %3999 = vmatmul.f32.gmra.mxu0 %v3798
        %v4000 = vpop.f32.mrf.mxu0
        %v4001 = vadd.f32 %v3936, %v4000
        %4002 = vmatmul.f32.gmra.mxu0 %v3799
        %v4003 = vpop.f32.mrf.mxu0
        %v4004 = vadd.f32 %v3939, %v4003
        %4005 = vmatmul.f32.gmra.mxu0 %v3800
        %v4006 = vpop.f32.mrf.mxu0
        %v4007 = vadd.f32 %v3942, %v4006
        %4008 = vmatmul.f32.gmra.mxu0 %v3801
        %v4009 = vpop.f32.mrf.mxu0
        %v4010 = vadd.f32 %v3945, %v4009
        %4011 = vmatmul.f32.gmra.mxu0 %v3802
        %v4012 = vpop.f32.mrf.mxu0
        %v4013 = vadd.f32 %v3948, %v4012
        %4014 = vdwg.mxu0
        %s4015 = scalar_lea.vmem [#allocation5], 1024
        %v4016 = vld [vmem:[%s4015] sm:$0xff]
        %v4017 = vld [vmem:[%s4015 + $0x8] sm:$0xff]
        %v4018 = vld [vmem:[%s4015 + $0x10] sm:$0xff]
        %v4019 = vld [vmem:[%s4015 + $0x18] sm:$0xff]
        %v4020 = vld [vmem:[%s4015 + $0x20] sm:$0xff]
        %v4021 = vld [vmem:[%s4015 + $0x28] sm:$0xff]
        %v4022 = vld [vmem:[%s4015 + $0x30] sm:$0xff]
        %v4023 = vld [vmem:[%s4015 + $0x38] sm:$0xff]
        %v4024 = vld [vmem:[%s4015 + $0x40] sm:$0xff]
        %v4025 = vld [vmem:[%s4015 + $0x48] sm:$0xff]
        %v4026 = vld [vmem:[%s4015 + $0x50] sm:$0xff]
        %v4027 = vld [vmem:[%s4015 + $0x58] sm:$0xff]
        %v4028 = vld [vmem:[%s4015 + $0x60] sm:$0xff]
        %v4029 = vld [vmem:[%s4015 + $0x68] sm:$0xff]
        %v4030 = vld [vmem:[%s4015 + $0x70] sm:$0xff]
        %v4031 = vld [vmem:[%s4015 + $0x78] sm:$0xff]
        %4032 = vmatpush.msra.mxu0 %v4031
        %4033 = vmatpush.msra.mxu0 %v4030
        %4034 = vmatpush.msra.mxu0 %v4029
        %4035 = vmatpush.msra.mxu0 %v4028
        %4036 = vmatpush.msra.mxu0 %v4027
        %4037 = vmatpush.msra.mxu0 %v4026
        %4038 = vmatpush.msra.mxu0 %v4025
        %4039 = vmatpush.msra.mxu0 %v4024
        %4040 = vmatpush.msra.mxu0 %v4023
        %4041 = vmatpush.msra.mxu0 %v4022
        %4042 = vmatpush.msra.mxu0 %v4021
        %4043 = vmatpush.msra.mxu0 %v4020
        %4044 = vmatpush.msra.mxu0 %v4019
        %4045 = vmatpush.msra.mxu0 %v4018
        %4046 = vmatpush.msra.mxu0 %v4017
        %4047 = vmatpush.msra.mxu0 %v4016
        %4048 = vmatmul.f32.gmra.mxu0 %v3835
        %v4049 = vpop.f32.mrf.mxu0
        %v4050 = vadd.f32 0.0, %v4049
        %4051 = vmatmul.f32.gmra.mxu0 %v3836
        %v4052 = vpop.f32.mrf.mxu0
        %v4053 = vadd.f32 0.0, %v4052
        %4054 = vmatmul.f32.gmra.mxu0 %v3837
        %v4055 = vpop.f32.mrf.mxu0
        %v4056 = vadd.f32 0.0, %v4055
        %4057 = vmatmul.f32.gmra.mxu0 %v3838
        %v4058 = vpop.f32.mrf.mxu0
        %v4059 = vadd.f32 0.0, %v4058
        %4060 = vmatmul.f32.gmra.mxu0 %v3839
        %v4061 = vpop.f32.mrf.mxu0
        %v4062 = vadd.f32 0.0, %v4061
        %4063 = vmatmul.f32.gmra.mxu0 %v3840
        %v4064 = vpop.f32.mrf.mxu0
        %v4065 = vadd.f32 0.0, %v4064
        %4066 = vmatmul.f32.gmra.mxu0 %v3841
        %v4067 = vpop.f32.mrf.mxu0
        %v4068 = vadd.f32 0.0, %v4067
        %4069 = vmatmul.f32.gmra.mxu0 %v3842
        %v4070 = vpop.f32.mrf.mxu0
        %v4071 = vadd.f32 0.0, %v4070
        %4072 = vmatmul.f32.gmra.mxu0 %v3843
        %v4073 = vpop.f32.mrf.mxu0
        %v4074 = vadd.f32 0.0, %v4073
        %4075 = vmatmul.f32.gmra.mxu0 %v3844
        %v4076 = vpop.f32.mrf.mxu0
        %v4077 = vadd.f32 0.0, %v4076
        %4078 = vmatmul.f32.gmra.mxu0 %v3845
        %v4079 = vpop.f32.mrf.mxu0
        %v4080 = vadd.f32 0.0, %v4079
        %4081 = vmatmul.f32.gmra.mxu0 %v3846
        %v4082 = vpop.f32.mrf.mxu0
        %v4083 = vadd.f32 0.0, %v4082
        %4084 = vmatmul.f32.gmra.mxu0 %v3847
        %v4085 = vpop.f32.mrf.mxu0
        %v4086 = vadd.f32 0.0, %v4085
        %4087 = vmatmul.f32.gmra.mxu0 %v3848
        %v4088 = vpop.f32.mrf.mxu0
        %v4089 = vadd.f32 0.0, %v4088
        %4090 = vmatmul.f32.gmra.mxu0 %v3849
        %v4091 = vpop.f32.mrf.mxu0
        %v4092 = vadd.f32 0.0, %v4091
        %4093 = vmatmul.f32.gmra.mxu0 %v3850
        %v4094 = vpop.f32.mrf.mxu0
        %v4095 = vadd.f32 0.0, %v4094
        %4096 = vdwg.mxu0
        %v4097 = vadd.f32 %v3968, %v4050
        %v4098 = vadd.f32 %v3971, %v4053
        %v4099 = vadd.f32 %v3974, %v4056
        %v4100 = vadd.f32 %v3977, %v4059
        %v4101 = vadd.f32 %v3980, %v4062
        %v4102 = vadd.f32 %v3983, %v4065
        %v4103 = vadd.f32 %v3986, %v4068
        %v4104 = vadd.f32 %v3989, %v4071
        %v4105 = vadd.f32 %v3992, %v4074
        %v4106 = vadd.f32 %v3995, %v4077
        %v4107 = vadd.f32 %v3998, %v4080
        %v4108 = vadd.f32 %v4001, %v4083
        %v4109 = vadd.f32 %v4004, %v4086
        %v4110 = vadd.f32 %v4007, %v4089
        %v4111 = vadd.f32 %v4010, %v4092
        %v4112 = vadd.f32 %v4013, %v4095
        %s4113 = scalar_lea.vmem %s3, 2
        %v4114 = vld [vmem:[%s4113] sm:$0x1]
        %v4116 = vperm.slane %v4114, 0
        %v4118 = vadd.f32 %v4097, %v4116
        %v4119 = vadd.f32 %v4098, %v4116
        %v4120 = vadd.f32 %v4099, %v4116
        %v4121 = vadd.f32 %v4100, %v4116
        %v4122 = vadd.f32 %v4101, %v4116
        %v4123 = vadd.f32 %v4102, %v4116
        %v4124 = vadd.f32 %v4103, %v4116
        %v4125 = vadd.f32 %v4104, %v4116
        %v4126 = vadd.f32 %v4105, %v4116
        %v4127 = vadd.f32 %v4106, %v4116
        %v4128 = vadd.f32 %v4107, %v4116
        %v4129 = vadd.f32 %v4108, %v4116
        %v4130 = vadd.f32 %v4109, %v4116
        %v4131 = vadd.f32 %v4110, %v4116
        %v4132 = vadd.f32 %v4111, %v4116
        %v4133 = vadd.f32 %v4112, %v4116
        %v4134 = vmax.f32 %v4118, 0.0
        %v4135 = vmax.f32 %v4119, 0.0
        %v4136 = vmax.f32 %v4120, 0.0
        %v4137 = vmax.f32 %v4121, 0.0
        %v4138 = vmax.f32 %v4122, 0.0
        %v4139 = vmax.f32 %v4123, 0.0
        %v4140 = vmax.f32 %v4124, 0.0
        %v4141 = vmax.f32 %v4125, 0.0
        %v4142 = vmax.f32 %v4126, 0.0
        %v4143 = vmax.f32 %v4127, 0.0
        %v4144 = vmax.f32 %v4128, 0.0
        %v4145 = vmax.f32 %v4129, 0.0
        %v4146 = vmax.f32 %v4130, 0.0
        %v4147 = vmax.f32 %v4131, 0.0
        %v4148 = vmax.f32 %v4132, 0.0
        %v4149 = vmax.f32 %v4133, 0.0
        %v4150 = vrot.slane %v4134, 1
        %v4151 = vrot.slane %v4135, 1
        %v4152 = vrot.slane %v4136, 1
        %v4153 = vrot.slane %v4137, 1
        %v4154 = vrot.slane %v4138, 1
        %v4155 = vrot.slane %v4139, 1
        %v4156 = vrot.slane %v4140, 1
        %v4157 = vrot.slane %v4141, 1
        %v4158 = vrot.slane %v4142, 1
        %v4159 = vrot.slane %v4143, 1
        %v4160 = vrot.slane %v4144, 1
        %v4161 = vrot.slane %v4145, 1
        %v4162 = vrot.slane %v4146, 1
        %v4163 = vrot.slane %v4147, 1
        %v4164 = vrot.slane %v4148, 1
        %v4165 = vrot.slane %v4149, 1
        %v4166 = vsel %vm643, %v4164, %v4165
        %v4167 = vsel %vm643, %v4163, %v4164
        %v4168 = vsel %vm643, %v4162, %v4163
        %v4169 = vsel %vm643, %v4161, %v4162
        %v4170 = vsel %vm643, %v4160, %v4161
        %v4171 = vsel %vm643, %v4159, %v4160
        %v4172 = vsel %vm643, %v4158, %v4159
        %v4173 = vsel %vm643, %v4157, %v4158
        %v4174 = vsel %vm643, %v4156, %v4157
        %v4175 = vsel %vm643, %v4155, %v4156
        %v4176 = vsel %vm643, %v4154, %v4155
        %v4177 = vsel %vm643, %v4153, %v4154
        %v4178 = vsel %vm643, %v4152, %v4153
        %v4179 = vsel %vm643, %v4151, %v4152
        %v4180 = vsel %vm643, %v4150, %v4151
        %v4181 = vsel %vm643, %v4165, %v4150
        %v4182 = vmax.f32 %v4134, %v4180
        %v4183 = vmax.f32 %v4135, %v4179
        %v4184 = vmax.f32 %v4136, %v4178
        %v4185 = vmax.f32 %v4137, %v4177
        %v4186 = vmax.f32 %v4138, %v4176
        %v4187 = vmax.f32 %v4139, %v4175
        %v4188 = vmax.f32 %v4140, %v4174
        %v4189 = vmax.f32 %v4141, %v4173
        %v4190 = vmax.f32 %v4142, %v4172
        %v4191 = vmax.f32 %v4143, %v4171
        %v4192 = vmax.f32 %v4144, %v4170
        %v4193 = vmax.f32 %v4145, %v4169
        %v4194 = vmax.f32 %v4146, %v4168
        %v4195 = vmax.f32 %v4147, %v4167
        %v4196 = vmax.f32 %v4148, %v4166
        %v4197 = vmax.f32 %v4149, %v4181
        %v4198 = vrot.slane %v4134, 2
        %v4199 = vrot.slane %v4135, 2
        %v4200 = vrot.slane %v4136, 2
        %v4201 = vrot.slane %v4137, 2
        %v4202 = vrot.slane %v4138, 2
        %v4203 = vrot.slane %v4139, 2
        %v4204 = vrot.slane %v4140, 2
        %v4205 = vrot.slane %v4141, 2
        %v4206 = vrot.slane %v4142, 2
        %v4207 = vrot.slane %v4143, 2
        %v4208 = vrot.slane %v4144, 2
        %v4209 = vrot.slane %v4145, 2
        %v4210 = vrot.slane %v4146, 2
        %v4211 = vrot.slane %v4147, 2
        %v4212 = vrot.slane %v4148, 2
        %v4213 = vrot.slane %v4149, 2
        %v4214 = vsel %vm1069, %v4212, %v4213
        %v4215 = vsel %vm1069, %v4211, %v4212
        %v4216 = vsel %vm1069, %v4210, %v4211
        %v4217 = vsel %vm1069, %v4209, %v4210
        %v4218 = vsel %vm1069, %v4208, %v4209
        %v4219 = vsel %vm1069, %v4207, %v4208
        %v4220 = vsel %vm1069, %v4206, %v4207
        %v4221 = vsel %vm1069, %v4205, %v4206
        %v4222 = vsel %vm1069, %v4204, %v4205
        %v4223 = vsel %vm1069, %v4203, %v4204
        %v4224 = vsel %vm1069, %v4202, %v4203
        %v4225 = vsel %vm1069, %v4201, %v4202
        %v4226 = vsel %vm1069, %v4200, %v4201
        %v4227 = vsel %vm1069, %v4199, %v4200
        %v4228 = vsel %vm1069, %v4198, %v4199
        %v4229 = vsel %vm1069, %v4213, %v4198
        %v4230 = vmax.f32 %v4182, %v4228
        %v4231 = vmax.f32 %v4183, %v4227
        %v4232 = vmax.f32 %v4184, %v4226
        %v4233 = vmax.f32 %v4185, %v4225
        %v4234 = vmax.f32 %v4186, %v4224
        %v4235 = vmax.f32 %v4187, %v4223
        %v4236 = vmax.f32 %v4188, %v4222
        %v4237 = vmax.f32 %v4189, %v4221
        %v4238 = vmax.f32 %v4190, %v4220
        %v4239 = vmax.f32 %v4191, %v4219
        %v4240 = vmax.f32 %v4192, %v4218
        %v4241 = vmax.f32 %v4193, %v4217
        %v4242 = vmax.f32 %v4194, %v4216
        %v4243 = vmax.f32 %v4195, %v4215
        %v4244 = vmax.f32 %v4196, %v4214
        %v4245 = vmax.f32 %v4197, %v4229
        %v4246 = vrot.slane %v4134, 3
        %v4247 = vrot.slane %v4135, 3
        %v4248 = vrot.slane %v4136, 3
        %v4249 = vrot.slane %v4137, 3
        %v4250 = vrot.slane %v4138, 3
        %v4251 = vrot.slane %v4139, 3
        %v4252 = vrot.slane %v4140, 3
        %v4253 = vrot.slane %v4141, 3
        %v4254 = vrot.slane %v4142, 3
        %v4255 = vrot.slane %v4143, 3
        %v4256 = vrot.slane %v4144, 3
        %v4257 = vrot.slane %v4145, 3
        %v4258 = vrot.slane %v4146, 3
        %v4259 = vrot.slane %v4147, 3
        %v4260 = vrot.slane %v4148, 3
        %v4261 = vrot.slane %v4149, 3
        %v4262 = vsel %vm1118, %v4260, %v4261
        %v4263 = vsel %vm1118, %v4259, %v4260
        %v4264 = vsel %vm1118, %v4258, %v4259
        %v4265 = vsel %vm1118, %v4257, %v4258
        %v4266 = vsel %vm1118, %v4256, %v4257
        %v4267 = vsel %vm1118, %v4255, %v4256
        %v4268 = vsel %vm1118, %v4254, %v4255
        %v4269 = vsel %vm1118, %v4253, %v4254
        %v4270 = vsel %vm1118, %v4252, %v4253
        %v4271 = vsel %vm1118, %v4251, %v4252
        %v4272 = vsel %vm1118, %v4250, %v4251
        %v4273 = vsel %vm1118, %v4249, %v4250
        %v4274 = vsel %vm1118, %v4248, %v4249
        %v4275 = vsel %vm1118, %v4247, %v4248
        %v4276 = vsel %vm1118, %v4246, %v4247
        %v4277 = vsel %vm1118, %v4261, %v4246
        %v4278 = vmax.f32 %v4230, %v4276
        %v4279 = vmax.f32 %v4231, %v4275
        %v4280 = vmax.f32 %v4232, %v4274
        %v4281 = vmax.f32 %v4233, %v4273
        %v4282 = vmax.f32 %v4234, %v4272
        %v4283 = vmax.f32 %v4235, %v4271
        %v4284 = vmax.f32 %v4236, %v4270
        %v4285 = vmax.f32 %v4237, %v4269
        %v4286 = vmax.f32 %v4238, %v4268
        %v4287 = vmax.f32 %v4239, %v4267
        %v4288 = vmax.f32 %v4240, %v4266
        %v4289 = vmax.f32 %v4241, %v4265
        %v4290 = vmax.f32 %v4242, %v4264
        %v4291 = vmax.f32 %v4243, %v4263
        %v4292 = vmax.f32 %v4244, %v4262
        %v4293 = vmax.f32 %v4245, %v4277
        %4294 = vst [vmem:[#allocation3] sm:$0xff] %v4278
        %4295 = vst [vmem:[#allocation3 + $0x8] sm:$0xff] %v4279
        %4296 = vst [vmem:[#allocation3 + $0x10] sm:$0xff] %v4280
        %4297 = vst [vmem:[#allocation3 + $0x18] sm:$0xff] %v4281
        %4298 = vst [vmem:[#allocation3 + $0x20] sm:$0xff] %v4282
        %4299 = vst [vmem:[#allocation3 + $0x28] sm:$0xff] %v4283
        %4300 = vst [vmem:[#allocation3 + $0x30] sm:$0xff] %v4284
        %4301 = vst [vmem:[#allocation3 + $0x38] sm:$0xff] %v4285
        %4302 = vst [vmem:[#allocation3 + $0x40] sm:$0xff] %v4286
        %4303 = vst [vmem:[#allocation3 + $0x48] sm:$0xff] %v4287
        %4304 = vst [vmem:[#allocation3 + $0x50] sm:$0xff] %v4288
        %4305 = vst [vmem:[#allocation3 + $0x58] sm:$0xff] %v4289
        %4306 = vst [vmem:[#allocation3 + $0x60] sm:$0xff] %v4290
        %4307 = vst [vmem:[#allocation3 + $0x68] sm:$0xff] %v4291
        %4308 = vst [vmem:[#allocation3 + $0x70] sm:$0xff] %v4292
        %4309 = vst [vmem:[#allocation3 + $0x78] sm:$0xff] %v4293
        %v4310 = vld [vmem:[#allocation3] ss:$4 sm:$0xff]
        %v4311 = vld [vmem:[%s1168] ss:$4 sm:$0xff]
        %v4312 = vld [vmem:[%s1170] ss:$4 sm:$0xff]
        %v4313 = vld [vmem:[%s1172] ss:$4 sm:$0xff]
        %v4314 = vand.u32 %v350, 1
        %v4315 = vand.u32 %v351, 1
        %v4316 = vand.u32 %v352, 1
        %v4317 = vand.u32 %v353, 1
        %vm4318 = vcmp.eq.s32.totalorder %v4314, 0
        %vm4319 = vcmp.eq.s32.totalorder %v4315, 0
        %vm4320 = vcmp.eq.s32.totalorder %v4316, 0
        %vm4321 = vcmp.eq.s32.totalorder %v4317, 0
        %vm4322 = vcmp.eq.s32.totalorder %v4314, 1
        %vm4323 = vcmp.eq.s32.totalorder %v4315, 1
        %vm4324 = vcmp.eq.s32.totalorder %v4316, 1
        %vm4325 = vcmp.eq.s32.totalorder %v4317, 1
        %v4326 = vrot.slane %v4310, 7
        %v4327 = vrot.slane %v4311, 7
        %v4328 = vrot.slane %v4312, 7
        %v4329 = vrot.slane %v4313, 7
        %v4330 = vsel %vm562, %v4328, %v4329
        %v4331 = vsel %vm562, %v4327, %v4328
        %v4332 = vsel %vm562, %v4326, %v4327
        %v4333 = vsel %vm562, %v4329, %v4326
        %v4334 = vsel %vm4318, 1, 0
        %v4335 = vsel %vm4319, 1, 0
        %v4336 = vsel %vm4320, 1, 0
        %v4337 = vsel %vm4321, 1, 0
        %vm4338 = vcmp.eq.s32.totalorder %v4334, 1
        %vm4339 = vcmp.eq.s32.totalorder %v4335, 1
        %vm4340 = vcmp.eq.s32.totalorder %v4336, 1
        %vm4341 = vcmp.eq.s32.totalorder %v4337, 1
        %v4342 = vsel %vm4338, 0.0, %v4333
        %v4343 = vsel %vm4339, 0.0, %v4332
        %v4344 = vsel %vm4340, 0.0, %v4331
        %v4345 = vsel %vm4341, 0.0, %v4330
        %v4346 = vrot.slane %v4310, 1
        %v4347 = vrot.slane %v4311, 1
        %v4348 = vrot.slane %v4312, 1
        %v4349 = vrot.slane %v4313, 1
        %v4350 = vsel %vm643, %v4348, %v4349
        %v4351 = vsel %vm643, %v4347, %v4348
        %v4352 = vsel %vm643, %v4346, %v4347
        %v4353 = vsel %vm643, %v4349, %v4346
        %v4354 = vsel %vm4322, 1, 0
        %v4355 = vsel %vm4323, 1, 0
        %v4356 = vsel %vm4324, 1, 0
        %v4357 = vsel %vm4325, 1, 0
        %vm4358 = vcmp.eq.s32.totalorder %v4354, 1
        %vm4359 = vcmp.eq.s32.totalorder %v4355, 1
        %vm4360 = vcmp.eq.s32.totalorder %v4356, 1
        %vm4361 = vcmp.eq.s32.totalorder %v4357, 1
        %v4362 = vsel %vm4358, 0.0, %v4352
        %v4363 = vsel %vm4359, 0.0, %v4351
        %v4364 = vsel %vm4360, 0.0, %v4350
        %v4365 = vsel %vm4361, 0.0, %v4353
        %s4366 = scalar_lea.vmem [#allocation5], 1152
        %v4367 = vld [vmem:[%s4366] sm:$0xff]
        %v4368 = vld [vmem:[%s4366 + $0x8] sm:$0xff]
        %v4369 = vld [vmem:[%s4366 + $0x10] sm:$0xff]
        %v4370 = vld [vmem:[%s4366 + $0x18] sm:$0xff]
        %v4371 = vld [vmem:[%s4366 + $0x20] sm:$0xff]
        %v4372 = vld [vmem:[%s4366 + $0x28] sm:$0xff]
        %v4373 = vld [vmem:[%s4366 + $0x30] sm:$0xff]
        %v4374 = vld [vmem:[%s4366 + $0x38] sm:$0xff]
        %v4375 = vld [vmem:[%s4366 + $0x40] sm:$0xff]
        %v4376 = vld [vmem:[%s4366 + $0x48] sm:$0xff]
        %v4377 = vld [vmem:[%s4366 + $0x50] sm:$0xff]
        %v4378 = vld [vmem:[%s4366 + $0x58] sm:$0xff]
        %v4379 = vld [vmem:[%s4366 + $0x60] sm:$0xff]
        %v4380 = vld [vmem:[%s4366 + $0x68] sm:$0xff]
        %v4381 = vld [vmem:[%s4366 + $0x70] sm:$0xff]
        %v4382 = vld [vmem:[%s4366 + $0x78] sm:$0xff]
        %s4383 = scalar_lea.vmem [#allocation5], 1280
        %v4384 = vld [vmem:[%s4383] sm:$0xff]
        %v4385 = vld [vmem:[%s4383 + $0x8] sm:$0xff]
        %v4386 = vld [vmem:[%s4383 + $0x10] sm:$0xff]
        %v4387 = vld [vmem:[%s4383 + $0x18] sm:$0xff]
        %v4388 = vld [vmem:[%s4383 + $0x20] sm:$0xff]
        %v4389 = vld [vmem:[%s4383 + $0x28] sm:$0xff]
        %v4390 = vld [vmem:[%s4383 + $0x30] sm:$0xff]
        %v4391 = vld [vmem:[%s4383 + $0x38] sm:$0xff]
        %v4392 = vld [vmem:[%s4383 + $0x40] sm:$0xff]
        %v4393 = vld [vmem:[%s4383 + $0x48] sm:$0xff]
        %v4394 = vld [vmem:[%s4383 + $0x50] sm:$0xff]
        %v4395 = vld [vmem:[%s4383 + $0x58] sm:$0xff]
        %v4396 = vld [vmem:[%s4383 + $0x60] sm:$0xff]
        %v4397 = vld [vmem:[%s4383 + $0x68] sm:$0xff]
        %v4398 = vld [vmem:[%s4383 + $0x70] sm:$0xff]
        %v4399 = vld [vmem:[%s4383 + $0x78] sm:$0xff]
        %4400 = vmatpush.msra.mxu0 %v4399
        %4401 = vmatpush.msra.mxu0 %v4398
        %4402 = vmatpush.msra.mxu0 %v4397
        %4403 = vmatpush.msra.mxu0 %v4396
        %4404 = vmatpush.msra.mxu0 %v4395
        %4405 = vmatpush.msra.mxu0 %v4394
        %4406 = vmatpush.msra.mxu0 %v4393
        %4407 = vmatpush.msra.mxu0 %v4392
        %4408 = vmatpush.msra.mxu0 %v4391
        %4409 = vmatpush.msra.mxu0 %v4390
        %4410 = vmatpush.msra.mxu0 %v4389
        %4411 = vmatpush.msra.mxu0 %v4388
        %4412 = vmatpush.msra.mxu0 %v4387
        %4413 = vmatpush.msra.mxu0 %v4386
        %4414 = vmatpush.msra.mxu0 %v4385
        %4415 = vmatpush.msra.mxu0 %v4384
        %4416 = vmatmul.f32.gmra.mxu0 %v4310
        %v4417 = vpop.f32.mrf.mxu0
        %v4418 = vadd.f32 0.0, %v4417
        %4419 = vmatmul.f32.gmra.mxu0 %v4311
        %v4420 = vpop.f32.mrf.mxu0
        %v4421 = vadd.f32 0.0, %v4420
        %4422 = vmatmul.f32.gmra.mxu0 %v4312
        %v4423 = vpop.f32.mrf.mxu0
        %v4424 = vadd.f32 0.0, %v4423
        %4425 = vmatmul.f32.gmra.mxu0 %v4313
        %v4426 = vpop.f32.mrf.mxu0
        %v4427 = vadd.f32 0.0, %v4426
        %4428 = vdwg.mxu0
        %4429 = vmatpush.msra.mxu0 %v4382
        %4430 = vmatpush.msra.mxu0 %v4381
        %4431 = vmatpush.msra.mxu0 %v4380
        %4432 = vmatpush.msra.mxu0 %v4379
        %4433 = vmatpush.msra.mxu0 %v4378
        %4434 = vmatpush.msra.mxu0 %v4377
        %4435 = vmatpush.msra.mxu0 %v4376
        %4436 = vmatpush.msra.mxu0 %v4375
        %4437 = vmatpush.msra.mxu0 %v4374
        %4438 = vmatpush.msra.mxu0 %v4373
        %4439 = vmatpush.msra.mxu0 %v4372
        %4440 = vmatpush.msra.mxu0 %v4371
        %4441 = vmatpush.msra.mxu0 %v4370
        %4442 = vmatpush.msra.mxu0 %v4369
        %4443 = vmatpush.msra.mxu0 %v4368
        %4444 = vmatpush.msra.mxu0 %v4367
        %4445 = vmatmul.f32.gmra.mxu0 %v4342
        %v4446 = vpop.f32.mrf.mxu0
        %v4447 = vadd.f32 %v4418, %v4446
        %4448 = vmatmul.f32.gmra.mxu0 %v4343
        %v4449 = vpop.f32.mrf.mxu0
        %v4450 = vadd.f32 %v4421, %v4449
        %4451 = vmatmul.f32.gmra.mxu0 %v4344
        %v4452 = vpop.f32.mrf.mxu0
        %v4453 = vadd.f32 %v4424, %v4452
        %4454 = vmatmul.f32.gmra.mxu0 %v4345
        %v4455 = vpop.f32.mrf.mxu0
        %v4456 = vadd.f32 %v4427, %v4455
        %4457 = vdwg.mxu0
        %s4458 = scalar_lea.vmem [#allocation5], 1408
        %v4459 = vld [vmem:[%s4458] sm:$0xff]
        %v4460 = vld [vmem:[%s4458 + $0x8] sm:$0xff]
        %v4461 = vld [vmem:[%s4458 + $0x10] sm:$0xff]
        %v4462 = vld [vmem:[%s4458 + $0x18] sm:$0xff]
        %v4463 = vld [vmem:[%s4458 + $0x20] sm:$0xff]
        %v4464 = vld [vmem:[%s4458 + $0x28] sm:$0xff]
        %v4465 = vld [vmem:[%s4458 + $0x30] sm:$0xff]
        %v4466 = vld [vmem:[%s4458 + $0x38] sm:$0xff]
        %v4467 = vld [vmem:[%s4458 + $0x40] sm:$0xff]
        %v4468 = vld [vmem:[%s4458 + $0x48] sm:$0xff]
        %v4469 = vld [vmem:[%s4458 + $0x50] sm:$0xff]
        %v4470 = vld [vmem:[%s4458 + $0x58] sm:$0xff]
        %v4471 = vld [vmem:[%s4458 + $0x60] sm:$0xff]
        %v4472 = vld [vmem:[%s4458 + $0x68] sm:$0xff]
        %v4473 = vld [vmem:[%s4458 + $0x70] sm:$0xff]
        %v4474 = vld [vmem:[%s4458 + $0x78] sm:$0xff]
        %4475 = vmatpush.msra.mxu0 %v4474
        %4476 = vmatpush.msra.mxu0 %v4473
        %4477 = vmatpush.msra.mxu0 %v4472
        %4478 = vmatpush.msra.mxu0 %v4471
        %4479 = vmatpush.msra.mxu0 %v4470
        %4480 = vmatpush.msra.mxu0 %v4469
        %4481 = vmatpush.msra.mxu0 %v4468
        %4482 = vmatpush.msra.mxu0 %v4467
        %4483 = vmatpush.msra.mxu0 %v4466
        %4484 = vmatpush.msra.mxu0 %v4465
        %4485 = vmatpush.msra.mxu0 %v4464
        %4486 = vmatpush.msra.mxu0 %v4463
        %4487 = vmatpush.msra.mxu0 %v4462
        %4488 = vmatpush.msra.mxu0 %v4461
        %4489 = vmatpush.msra.mxu0 %v4460
        %4490 = vmatpush.msra.mxu0 %v4459
        %4491 = vmatmul.f32.gmra.mxu0 %v4362
        %v4492 = vpop.f32.mrf.mxu0
        %v4493 = vadd.f32 0.0, %v4492
        %4494 = vmatmul.f32.gmra.mxu0 %v4363
        %v4495 = vpop.f32.mrf.mxu0
        %v4496 = vadd.f32 0.0, %v4495
        %4497 = vmatmul.f32.gmra.mxu0 %v4364
        %v4498 = vpop.f32.mrf.mxu0
        %v4499 = vadd.f32 0.0, %v4498
        %4500 = vmatmul.f32.gmra.mxu0 %v4365
        %v4501 = vpop.f32.mrf.mxu0
        %v4502 = vadd.f32 0.0, %v4501
        %4503 = vdwg.mxu0
        %v4504 = vadd.f32 %v4447, %v4493
        %v4505 = vadd.f32 %v4450, %v4496
        %v4506 = vadd.f32 %v4453, %v4499
        %v4507 = vadd.f32 %v4456, %v4502
        %s4508 = scalar_lea.vmem %s3, 3
        %v4509 = vld [vmem:[%s4508] sm:$0x1]
        %v4511 = vperm.slane %v4509, 0
        %v4513 = vadd.f32 %v4504, %v4511
        %v4514 = vadd.f32 %v4505, %v4511
        %v4515 = vadd.f32 %v4506, %v4511
        %v4516 = vadd.f32 %v4507, %v4511
        %v4517 = vrot.slane %v4513, 7
        %v4518 = vrot.slane %v4514, 7
        %v4519 = vrot.slane %v4515, 7
        %v4520 = vrot.slane %v4516, 7
        %v4521 = vsel %vm562, %v4519, %v4520
        %v4522 = vsel %vm562, %v4518, %v4519
        %v4523 = vsel %vm562, %v4517, %v4518
        %v4524 = vsel %vm562, %v4520, %v4517
        %v4525 = vsel %vm4338, 0.0, %v4524
        %v4526 = vsel %vm4339, 0.0, %v4523
        %v4527 = vsel %vm4340, 0.0, %v4522
        %v4528 = vsel %vm4341, 0.0, %v4521
        %v4529 = vrot.slane %v4513, 1
        %v4530 = vrot.slane %v4514, 1
        %v4531 = vrot.slane %v4515, 1
        %v4532 = vrot.slane %v4516, 1
        %v4533 = vsel %vm643, %v4531, %v4532
        %v4534 = vsel %vm643, %v4530, %v4531
        %v4535 = vsel %vm643, %v4529, %v4530
        %v4536 = vsel %vm643, %v4532, %v4529
        %v4537 = vsel %vm4358, 0.0, %v4535
        %v4538 = vsel %vm4359, 0.0, %v4534
        %v4539 = vsel %vm4360, 0.0, %v4533
        %v4540 = vsel %vm4361, 0.0, %v4536
        %s4541 = scalar_lea.vmem [#allocation5], 1536
        %v4542 = vld [vmem:[%s4541] sm:$0xff]
        %v4543 = vld [vmem:[%s4541 + $0x8] sm:$0xff]
        %v4544 = vld [vmem:[%s4541 + $0x10] sm:$0xff]
        %v4545 = vld [vmem:[%s4541 + $0x18] sm:$0xff]
        %v4546 = vld [vmem:[%s4541 + $0x20] sm:$0xff]
        %v4547 = vld [vmem:[%s4541 + $0x28] sm:$0xff]
        %v4548 = vld [vmem:[%s4541 + $0x30] sm:$0xff]
        %v4549 = vld [vmem:[%s4541 + $0x38] sm:$0xff]
        %v4550 = vld [vmem:[%s4541 + $0x40] sm:$0xff]
        %v4551 = vld [vmem:[%s4541 + $0x48] sm:$0xff]
        %v4552 = vld [vmem:[%s4541 + $0x50] sm:$0xff]
        %v4553 = vld [vmem:[%s4541 + $0x58] sm:$0xff]
        %v4554 = vld [vmem:[%s4541 + $0x60] sm:$0xff]
        %v4555 = vld [vmem:[%s4541 + $0x68] sm:$0xff]
        %v4556 = vld [vmem:[%s4541 + $0x70] sm:$0xff]
        %v4557 = vld [vmem:[%s4541 + $0x78] sm:$0xff]
        %s4558 = scalar_lea.vmem [#allocation5], 1664
        %v4559 = vld [vmem:[%s4558] sm:$0xff]
        %v4560 = vld [vmem:[%s4558 + $0x8] sm:$0xff]
        %v4561 = vld [vmem:[%s4558 + $0x10] sm:$0xff]
        %v4562 = vld [vmem:[%s4558 + $0x18] sm:$0xff]
        %v4563 = vld [vmem:[%s4558 + $0x20] sm:$0xff]
        %v4564 = vld [vmem:[%s4558 + $0x28] sm:$0xff]
        %v4565 = vld [vmem:[%s4558 + $0x30] sm:$0xff]
        %v4566 = vld [vmem:[%s4558 + $0x38] sm:$0xff]
        %v4567 = vld [vmem:[%s4558 + $0x40] sm:$0xff]
        %v4568 = vld [vmem:[%s4558 + $0x48] sm:$0xff]
        %v4569 = vld [vmem:[%s4558 + $0x50] sm:$0xff]
        %v4570 = vld [vmem:[%s4558 + $0x58] sm:$0xff]
        %v4571 = vld [vmem:[%s4558 + $0x60] sm:$0xff]
        %v4572 = vld [vmem:[%s4558 + $0x68] sm:$0xff]
        %v4573 = vld [vmem:[%s4558 + $0x70] sm:$0xff]
        %v4574 = vld [vmem:[%s4558 + $0x78] sm:$0xff]
        %4575 = vmatpush.msra.mxu0 %v4574
        %4576 = vmatpush.msra.mxu0 %v4573
        %4577 = vmatpush.msra.mxu0 %v4572
        %4578 = vmatpush.msra.mxu0 %v4571
        %4579 = vmatpush.msra.mxu0 %v4570
        %4580 = vmatpush.msra.mxu0 %v4569
        %4581 = vmatpush.msra.mxu0 %v4568
        %4582 = vmatpush.msra.mxu0 %v4567
        %4583 = vmatpush.msra.mxu0 %v4566
        %4584 = vmatpush.msra.mxu0 %v4565
        %4585 = vmatpush.msra.mxu0 %v4564
        %4586 = vmatpush.msra.mxu0 %v4563
        %4587 = vmatpush.msra.mxu0 %v4562
        %4588 = vmatpush.msra.mxu0 %v4561
        %4589 = vmatpush.msra.mxu0 %v4560
        %4590 = vmatpush.msra.mxu0 %v4559
        %4591 = vmatmul.f32.gmra.mxu0 %v4513
        %v4592 = vpop.f32.mrf.mxu0
        %v4593 = vadd.f32 0.0, %v4592
        %4594 = vmatmul.f32.gmra.mxu0 %v4514
        %v4595 = vpop.f32.mrf.mxu0
        %v4596 = vadd.f32 0.0, %v4595
        %4597 = vmatmul.f32.gmra.mxu0 %v4515
        %v4598 = vpop.f32.mrf.mxu0
        %v4599 = vadd.f32 0.0, %v4598
        %4600 = vmatmul.f32.gmra.mxu0 %v4516
        %v4601 = vpop.f32.mrf.mxu0
        %v4602 = vadd.f32 0.0, %v4601
        %4603 = vdwg.mxu0
        %4604 = vmatpush.msra.mxu0 %v4557
        %4605 = vmatpush.msra.mxu0 %v4556
        %4606 = vmatpush.msra.mxu0 %v4555
        %4607 = vmatpush.msra.mxu0 %v4554
        %4608 = vmatpush.msra.mxu0 %v4553
        %4609 = vmatpush.msra.mxu0 %v4552
        %4610 = vmatpush.msra.mxu0 %v4551
        %4611 = vmatpush.msra.mxu0 %v4550
        %4612 = vmatpush.msra.mxu0 %v4549
        %4613 = vmatpush.msra.mxu0 %v4548
        %4614 = vmatpush.msra.mxu0 %v4547
        %4615 = vmatpush.msra.mxu0 %v4546
        %4616 = vmatpush.msra.mxu0 %v4545
        %4617 = vmatpush.msra.mxu0 %v4544
        %4618 = vmatpush.msra.mxu0 %v4543
        %4619 = vmatpush.msra.mxu0 %v4542
        %4620 = vmatmul.f32.gmra.mxu0 %v4525
        %v4621 = vpop.f32.mrf.mxu0
        %v4622 = vadd.f32 %v4593, %v4621
        %4623 = vmatmul.f32.gmra.mxu0 %v4526
        %v4624 = vpop.f32.mrf.mxu0
        %v4625 = vadd.f32 %v4596, %v4624
        %4626 = vmatmul.f32.gmra.mxu0 %v4527
        %v4627 = vpop.f32.mrf.mxu0
        %v4628 = vadd.f32 %v4599, %v4627
        %4629 = vmatmul.f32.gmra.mxu0 %v4528
        %v4630 = vpop.f32.mrf.mxu0
        %v4631 = vadd.f32 %v4602, %v4630
        %4632 = vdwg.mxu0
        %s4633 = scalar_lea.vmem [#allocation5], 1792
        %v4634 = vld [vmem:[%s4633] sm:$0xff]
        %v4635 = vld [vmem:[%s4633 + $0x8] sm:$0xff]
        %v4636 = vld [vmem:[%s4633 + $0x10] sm:$0xff]
        %v4637 = vld [vmem:[%s4633 + $0x18] sm:$0xff]
        %v4638 = vld [vmem:[%s4633 + $0x20] sm:$0xff]
        %v4639 = vld [vmem:[%s4633 + $0x28] sm:$0xff]
        %v4640 = vld [vmem:[%s4633 + $0x30] sm:$0xff]
        %v4641 = vld [vmem:[%s4633 + $0x38] sm:$0xff]
        %v4642 = vld [vmem:[%s4633 + $0x40] sm:$0xff]
        %v4643 = vld [vmem:[%s4633 + $0x48] sm:$0xff]
        %v4644 = vld [vmem:[%s4633 + $0x50] sm:$0xff]
        %v4645 = vld [vmem:[%s4633 + $0x58] sm:$0xff]
        %v4646 = vld [vmem:[%s4633 + $0x60] sm:$0xff]
        %v4647 = vld [vmem:[%s4633 + $0x68] sm:$0xff]
        %v4648 = vld [vmem:[%s4633 + $0x70] sm:$0xff]
        %v4649 = vld [vmem:[%s4633 + $0x78] sm:$0xff]
        %4650 = vmatpush.msra.mxu0 %v4649
        %4651 = vmatpush.msra.mxu0 %v4648
        %4652 = vmatpush.msra.mxu0 %v4647
        %4653 = vmatpush.msra.mxu0 %v4646
        %4654 = vmatpush.msra.mxu0 %v4645
        %4655 = vmatpush.msra.mxu0 %v4644
        %4656 = vmatpush.msra.mxu0 %v4643
        %4657 = vmatpush.msra.mxu0 %v4642
        %4658 = vmatpush.msra.mxu0 %v4641
        %4659 = vmatpush.msra.mxu0 %v4640
        %4660 = vmatpush.msra.mxu0 %v4639
        %4661 = vmatpush.msra.mxu0 %v4638
        %4662 = vmatpush.msra.mxu0 %v4637
        %4663 = vmatpush.msra.mxu0 %v4636
        %4664 = vmatpush.msra.mxu0 %v4635
        %4665 = vmatpush.msra.mxu0 %v4634
        %4666 = vmatmul.f32.gmra.mxu0 %v4537
        %v4667 = vpop.f32.mrf.mxu0
        %v4668 = vadd.f32 0.0, %v4667
        %4669 = vmatmul.f32.gmra.mxu0 %v4538
        %v4670 = vpop.f32.mrf.mxu0
        %v4671 = vadd.f32 0.0, %v4670
        %4672 = vmatmul.f32.gmra.mxu0 %v4539
        %v4673 = vpop.f32.mrf.mxu0
        %v4674 = vadd.f32 0.0, %v4673
        %4675 = vmatmul.f32.gmra.mxu0 %v4540
        %v4676 = vpop.f32.mrf.mxu0
        %v4677 = vadd.f32 0.0, %v4676
        %4678 = vdwg.mxu0
        %v4679 = vadd.f32 %v4622, %v4668
        %v4680 = vadd.f32 %v4625, %v4671
        %v4681 = vadd.f32 %v4628, %v4674
        %v4682 = vadd.f32 %v4631, %v4677
        %s4683 = scalar_lea.vmem %s3, 4
        %v4684 = vld [vmem:[%s4683] sm:$0x1]
        %v4686 = vperm.slane %v4684, 0
        %v4688 = vadd.f32 %v4679, %v4686
        %v4689 = vadd.f32 %v4680, %v4686
        %v4690 = vadd.f32 %v4681, %v4686
        %v4691 = vadd.f32 %v4682, %v4686
        %v4692 = vmax.f32 %v4688, 0.0
        %v4693 = vmax.f32 %v4689, 0.0
        %v4694 = vmax.f32 %v4690, 0.0
        %v4695 = vmax.f32 %v4691, 0.0
        %v4696 = vrot.slane %v4692, 1
        %v4697 = vrot.slane %v4693, 1
        %v4698 = vrot.slane %v4694, 1
        %v4699 = vrot.slane %v4695, 1
        %v4700 = vsel %vm643, %v4698, %v4699
        %v4701 = vsel %vm643, %v4697, %v4698
        %v4702 = vsel %vm643, %v4696, %v4697
        %v4703 = vsel %vm643, %v4699, %v4696
        %v4704 = vmax.f32 %v4692, %v4702
        %v4705 = vmax.f32 %v4693, %v4701
        %v4706 = vmax.f32 %v4694, %v4700
        %v4707 = vmax.f32 %v4695, %v4703
        %4708 = vst [vmem:[#allocation3] sm:$0xff] %v4704
        %4709 = vst [vmem:[#allocation3 + $0x8] sm:$0xff] %v4705
        %4710 = vst [vmem:[#allocation3 + $0x10] sm:$0xff] %v4706
        %4711 = vst [vmem:[#allocation3 + $0x18] sm:$0xff] %v4707
        %v4712 = vld [vmem:[#allocation3] ss:$2 sm:$0xff]
        %s4713 = scalar_lea.vmem [#allocation3], 16
        %v4714 = vld [vmem:[%s4713] ss:$2 sm:$0xff]
        %s4715 = smul.u32 %s28, 16
        %s4716 = scalar_lea.vmem [#allocation4], %s4715
        %4717 = vst [vmem:[%s4716] sm:$0xff] %v4712
        %4718 = vst [vmem:[%s4716 + $0x8] sm:$0xff] %v4714
        %p4719 = scmp.eq.s32.totalorder %s28, 0
        // Predicated region
        $region57: #{tpu_custom_call.1} parent=51 // pred_check
          %p4720 = pneg %p4719
        $region58: #{tpu_custom_call.1} parent=51 // pred_check_branch
          %4722 = sbr.rel (%p4720) target = $region60
        $region59: #{tpu_custom_call.1} parent=51 // pred_region
          %v4723 = vld [vmem:[#allocation4] sm:$0xff]
          %v4724 = vld [vmem:[#allocation4 + $0x8] sm:$0xff]
          %v4725 = vadd.f32 %v4723, %v4724
          %v4726 = vrot.slane %v4725, 4
          %v4727 = vadd.f32 %v4725, %v4726
          %v4728 = vrot.slane %v4727, 2
          %v4729 = vadd.f32 %v4727, %v4728
          %v4730 = vrot.slane %v4729, 1
          %v4731 = vadd.f32 %v4729, %v4730
          %v4732 = vld [vmem:[%s4] sm:$0xff]
          %v4733 = vld [vmem:[%s4 + $0x8] sm:$0xff]
          %v4734 = vld [vmem:[%s4 + $0x10] sm:$0xff]
          %v4735 = vld [vmem:[%s4 + $0x18] sm:$0xff]
          %v4736 = vld [vmem:[%s4 + $0x20] sm:$0xff]
          %v4737 = vld [vmem:[%s4 + $0x28] sm:$0xff]
          %v4738 = vld [vmem:[%s4 + $0x30] sm:$0xff]
          %v4739 = vld [vmem:[%s4 + $0x38] sm:$0xff]
          %v4740 = vld [vmem:[%s4 + $0x40] sm:$0xff]
          %v4741 = vld [vmem:[%s4 + $0x48] sm:$0xff]
          %v4742 = vld [vmem:[%s4 + $0x50] sm:$0xff]
          %v4743 = vld [vmem:[%s4 + $0x58] sm:$0xff]
          %v4744 = vld [vmem:[%s4 + $0x60] sm:$0xff]
          %v4745 = vld [vmem:[%s4 + $0x68] sm:$0xff]
          %v4746 = vld [vmem:[%s4 + $0x70] sm:$0xff]
          %v4747 = vld [vmem:[%s4 + $0x78] sm:$0xff]
          %v4748 = vld [vmem:[%s4 + $0x80] sm:$0xff]
          %v4749 = vld [vmem:[%s4 + $0x88] sm:$0xff]
          %v4750 = vld [vmem:[%s4 + $0x90] sm:$0xff]
          %v4751 = vld [vmem:[%s4 + $0x98] sm:$0xff]
          %v4752 = vld [vmem:[%s4 + $0xa0] sm:$0xff]
          %v4753 = vld [vmem:[%s4 + $0xa8] sm:$0xff]
          %v4754 = vld [vmem:[%s4 + $0xb0] sm:$0xff]
          %v4755 = vld [vmem:[%s4 + $0xb8] sm:$0xff]
          %v4756 = vld [vmem:[%s4 + $0xc0] sm:$0xff]
          %v4757 = vld [vmem:[%s4 + $0xc8] sm:$0xff]
          %v4758 = vld [vmem:[%s4 + $0xd0] sm:$0xff]
          %v4759 = vld [vmem:[%s4 + $0xd8] sm:$0xff]
          %v4760 = vld [vmem:[%s4 + $0xe0] sm:$0xff]
          %v4761 = vld [vmem:[%s4 + $0xe8] sm:$0xff]
          %v4762 = vld [vmem:[%s4 + $0xf0] sm:$0xff]
          %v4763 = vld [vmem:[%s4 + $0xf8] sm:$0xff]
          %4764 = vmatpush.msra.mxu0 %v4762
          %4765 = vmatpush.msra.mxu0 %v4760
          %4766 = vmatpush.msra.mxu0 %v4758
          %4767 = vmatpush.msra.mxu0 %v4756
          %4768 = vmatpush.msra.mxu0 %v4754
          %4769 = vmatpush.msra.mxu0 %v4752
          %4770 = vmatpush.msra.mxu0 %v4750
          %4771 = vmatpush.msra.mxu0 %v4748
          %4772 = vmatpush.msra.mxu0 %v4746
          %4773 = vmatpush.msra.mxu0 %v4744
          %4774 = vmatpush.msra.mxu0 %v4742
          %4775 = vmatpush.msra.mxu0 %v4740
          %4776 = vmatpush.msra.mxu0 %v4738
          %4777 = vmatpush.msra.mxu0 %v4736
          %4778 = vmatpush.msra.mxu0 %v4734
          %4779 = vmatpush.msra.mxu0 %v4732
          %4780 = vmatmul.f32.gmra.mxu0 %v4731
          %v4781 = vpop.f32.mrf.mxu0
          %v4782 = vadd.f32 0.0, %v4781
          %4783 = vdwg.mxu0
          %4784 = vmatpush.msra.mxu0 %v4763
          %4785 = vmatpush.msra.mxu0 %v4761
          %4786 = vmatpush.msra.mxu0 %v4759
          %4787 = vmatpush.msra.mxu0 %v4757
          %4788 = vmatpush.msra.mxu0 %v4755
          %4789 = vmatpush.msra.mxu0 %v4753
          %4790 = vmatpush.msra.mxu0 %v4751
          %4791 = vmatpush.msra.mxu0 %v4749
          %4792 = vmatpush.msra.mxu0 %v4747
          %4793 = vmatpush.msra.mxu0 %v4745
          %4794 = vmatpush.msra.mxu0 %v4743
          %4795 = vmatpush.msra.mxu0 %v4741
          %4796 = vmatpush.msra.mxu0 %v4739
          %4797 = vmatpush.msra.mxu0 %v4737
          %4798 = vmatpush.msra.mxu0 %v4735
          %4799 = vmatpush.msra.mxu0 %v4733
          %4800 = vmatmul.f32.gmra.mxu0 %v4731
          %v4801 = vpop.f32.mrf.mxu0
          %v4802 = vadd.f32 0.0, %v4801
          %4803 = vdwg.mxu0
          %s4804 = scalar_lea.vmem %s4, 256
          %v4805 = vld [vmem:[%s4804] sm:$0xff]
          %v4806 = vld [vmem:[%s4804 + $0x8] sm:$0xff]
          %v4807 = vld [vmem:[%s4804 + $0x10] sm:$0xff]
          %v4808 = vld [vmem:[%s4804 + $0x18] sm:$0xff]
          %v4809 = vld [vmem:[%s4804 + $0x20] sm:$0xff]
          %v4810 = vld [vmem:[%s4804 + $0x28] sm:$0xff]
          %v4811 = vld [vmem:[%s4804 + $0x30] sm:$0xff]
          %v4812 = vld [vmem:[%s4804 + $0x38] sm:$0xff]
          %v4813 = vld [vmem:[%s4804 + $0x40] sm:$0xff]
          %v4814 = vld [vmem:[%s4804 + $0x48] sm:$0xff]
          %v4815 = vld [vmem:[%s4804 + $0x50] sm:$0xff]
          %v4816 = vld [vmem:[%s4804 + $0x58] sm:$0xff]
          %v4817 = vld [vmem:[%s4804 + $0x60] sm:$0xff]
          %v4818 = vld [vmem:[%s4804 + $0x68] sm:$0xff]
          %v4819 = vld [vmem:[%s4804 + $0x70] sm:$0xff]
          %v4820 = vld [vmem:[%s4804 + $0x78] sm:$0xff]
          %v4821 = vld [vmem:[%s4804 + $0x80] sm:$0xff]
          %v4822 = vld [vmem:[%s4804 + $0x88] sm:$0xff]
          %v4823 = vld [vmem:[%s4804 + $0x90] sm:$0xff]
          %v4824 = vld [vmem:[%s4804 + $0x98] sm:$0xff]
          %v4825 = vld [vmem:[%s4804 + $0xa0] sm:$0xff]
          %v4826 = vld [vmem:[%s4804 + $0xa8] sm:$0xff]
          %v4827 = vld [vmem:[%s4804 + $0xb0] sm:$0xff]
          %v4828 = vld [vmem:[%s4804 + $0xb8] sm:$0xff]
          %v4829 = vld [vmem:[%s4804 + $0xc0] sm:$0xff]
          %v4830 = vld [vmem:[%s4804 + $0xc8] sm:$0xff]
          %v4831 = vld [vmem:[%s4804 + $0xd0] sm:$0xff]
          %v4832 = vld [vmem:[%s4804 + $0xd8] sm:$0xff]
          %v4833 = vld [vmem:[%s4804 + $0xe0] sm:$0xff]
          %v4834 = vld [vmem:[%s4804 + $0xe8] sm:$0xff]
          %v4835 = vld [vmem:[%s4804 + $0xf0] sm:$0xff]
          %v4836 = vld [vmem:[%s4804 + $0xf8] sm:$0xff]
          %4837 = vmatpush.msra.mxu0 %v4835
          %4838 = vmatpush.msra.mxu0 %v4833
          %4839 = vmatpush.msra.mxu0 %v4831
          %4840 = vmatpush.msra.mxu0 %v4829
          %4841 = vmatpush.msra.mxu0 %v4827
          %4842 = vmatpush.msra.mxu0 %v4825
          %4843 = vmatpush.msra.mxu0 %v4823
          %4844 = vmatpush.msra.mxu0 %v4821
          %4845 = vmatpush.msra.mxu0 %v4819
          %4846 = vmatpush.msra.mxu0 %v4817
          %4847 = vmatpush.msra.mxu0 %v4815
          %4848 = vmatpush.msra.mxu0 %v4813
          %4849 = vmatpush.msra.mxu0 %v4811
          %4850 = vmatpush.msra.mxu0 %v4809
          %4851 = vmatpush.msra.mxu0 %v4807
          %4852 = vmatpush.msra.mxu0 %v4805
          %4853 = vmatmul.f32.gmra.mxu0 %v4723
          %v4854 = vpop.f32.mrf.mxu0
          %v4855 = vadd.f32 0.0, %v4854
          %4856 = vmatmul.f32.gmra.mxu0 %v4724
          %v4857 = vpop.f32.mrf.mxu0
          %v4858 = vadd.f32 0.0, %v4857
          %4859 = vdwg.mxu0
          %4860 = vmatpush.msra.mxu0 %v4836
          %4861 = vmatpush.msra.mxu0 %v4834
          %4862 = vmatpush.msra.mxu0 %v4832
          %4863 = vmatpush.msra.mxu0 %v4830
          %4864 = vmatpush.msra.mxu0 %v4828
          %4865 = vmatpush.msra.mxu0 %v4826
          %4866 = vmatpush.msra.mxu0 %v4824
          %4867 = vmatpush.msra.mxu0 %v4822
          %4868 = vmatpush.msra.mxu0 %v4820
          %4869 = vmatpush.msra.mxu0 %v4818
          %4870 = vmatpush.msra.mxu0 %v4816
          %4871 = vmatpush.msra.mxu0 %v4814
          %4872 = vmatpush.msra.mxu0 %v4812
          %4873 = vmatpush.msra.mxu0 %v4810
          %4874 = vmatpush.msra.mxu0 %v4808
          %4875 = vmatpush.msra.mxu0 %v4806
          %4876 = vmatmul.f32.gmra.mxu0 %v4723
          %v4877 = vpop.f32.mrf.mxu0
          %v4878 = vadd.f32 0.0, %v4877
          %4879 = vmatmul.f32.gmra.mxu0 %v4724
          %v4880 = vpop.f32.mrf.mxu0
          %v4881 = vadd.f32 0.0, %v4880
          %4882 = vdwg.mxu0
          %v4883 = vperm.slane %v4782, 0
          %v4884 = vperm.slane %v4802, 0
          %v4885 = vadd.f32 %v4883, %v4855
          %v4886 = vadd.f32 %v4884, %v4878
          %v4887 = vadd.f32 %v4883, %v4858
          %v4888 = vadd.f32 %v4884, %v4881
          %v4889 = vld [vmem:[%s5] sm:$0x3]
          %v4891 = vperm.slane %v4889, 0
          %v4892 = vperm.slane %v4889, 1
          %v4895 = vadd.f32 %v4885, %v4891
          %v4896 = vadd.f32 %v4886, %v4892
          %v4897 = vadd.f32 %v4887, %v4891
          %v4898 = vadd.f32 %v4888, %v4892
          %v4899 = vmax.f32 %v4895, 0.0
          %v4900 = vmax.f32 %v4896, 0.0
          %v4901 = vmax.f32 %v4897, 0.0
          %v4902 = vmax.f32 %v4898, 0.0
          %v4903 = vld [vmem:[%s6] sm:$0xff]
          %v4904 = vld [vmem:[%s6 + $0x8] sm:$0xff]
          %v4905 = vld [vmem:[%s6 + $0x10] sm:$0xff]
          %v4906 = vld [vmem:[%s6 + $0x18] sm:$0xff]
          %v4907 = vld [vmem:[%s6 + $0x20] sm:$0xff]
          %v4908 = vld [vmem:[%s6 + $0x28] sm:$0xff]
          %v4909 = vld [vmem:[%s6 + $0x30] sm:$0xff]
          %v4910 = vld [vmem:[%s6 + $0x38] sm:$0xff]
          %v4911 = vld [vmem:[%s6 + $0x40] sm:$0xff]
          %v4912 = vld [vmem:[%s6 + $0x48] sm:$0xff]
          %v4913 = vld [vmem:[%s6 + $0x50] sm:$0xff]
          %v4914 = vld [vmem:[%s6 + $0x58] sm:$0xff]
          %v4915 = vld [vmem:[%s6 + $0x60] sm:$0xff]
          %v4916 = vld [vmem:[%s6 + $0x68] sm:$0xff]
          %v4917 = vld [vmem:[%s6 + $0x70] sm:$0xff]
          %v4918 = vld [vmem:[%s6 + $0x78] sm:$0xff]
          %v4919 = vld [vmem:[%s6 + $0x80] sm:$0xff]
          %v4920 = vld [vmem:[%s6 + $0x88] sm:$0xff]
          %v4921 = vld [vmem:[%s6 + $0x90] sm:$0xff]
          %v4922 = vld [vmem:[%s6 + $0x98] sm:$0xff]
          %v4923 = vld [vmem:[%s6 + $0xa0] sm:$0xff]
          %v4924 = vld [vmem:[%s6 + $0xa8] sm:$0xff]
          %v4925 = vld [vmem:[%s6 + $0xb0] sm:$0xff]
          %v4926 = vld [vmem:[%s6 + $0xb8] sm:$0xff]
          %v4927 = vld [vmem:[%s6 + $0xc0] sm:$0xff]
          %v4928 = vld [vmem:[%s6 + $0xc8] sm:$0xff]
          %v4929 = vld [vmem:[%s6 + $0xd0] sm:$0xff]
          %v4930 = vld [vmem:[%s6 + $0xd8] sm:$0xff]
          %v4931 = vld [vmem:[%s6 + $0xe0] sm:$0xff]
          %v4932 = vld [vmem:[%s6 + $0xe8] sm:$0xff]
          %v4933 = vld [vmem:[%s6 + $0xf0] sm:$0xff]
          %v4934 = vld [vmem:[%s6 + $0xf8] sm:$0xff]
          %v4935 = vld [vmem:[%s7] sm:$0x1]
          %v4937 = vperm.slane %v4935, 0
          %4939 = vmatpush.msra.mxu0 %v4918
          %4940 = vmatpush.msra.mxu0 %v4917
          %4941 = vmatpush.msra.mxu0 %v4916
          %4942 = vmatpush.msra.mxu0 %v4915
          %4943 = vmatpush.msra.mxu0 %v4914
          %4944 = vmatpush.msra.mxu0 %v4913
          %4945 = vmatpush.msra.mxu0 %v4912
          %4946 = vmatpush.msra.mxu0 %v4911
          %4947 = vmatpush.msra.mxu0 %v4910
          %4948 = vmatpush.msra.mxu0 %v4909
          %4949 = vmatpush.msra.mxu0 %v4908
          %4950 = vmatpush.msra.mxu0 %v4907
          %4951 = vmatpush.msra.mxu0 %v4906
          %4952 = vmatpush.msra.mxu0 %v4905
          %4953 = vmatpush.msra.mxu0 %v4904
          %4954 = vmatpush.msra.mxu0 %v4903
          %4955 = vmatmul.f32.gmra.mxu0 %v4899
          %v4956 = vpop.f32.mrf.mxu0
          %v4957 = vadd.f32 %v4937, %v4956
          %4958 = vmatmul.f32.gmra.mxu0 %v4901
          %v4959 = vpop.f32.mrf.mxu0
          %v4960 = vadd.f32 %v4937, %v4959
          %4961 = vdwg.mxu0
          %4962 = vmatpush.msra.mxu0 %v4934
          %4963 = vmatpush.msra.mxu0 %v4933
          %4964 = vmatpush.msra.mxu0 %v4932
          %4965 = vmatpush.msra.mxu0 %v4931
          %4966 = vmatpush.msra.mxu0 %v4930
          %4967 = vmatpush.msra.mxu0 %v4929
          %4968 = vmatpush.msra.mxu0 %v4928
          %4969 = vmatpush.msra.mxu0 %v4927
          %4970 = vmatpush.msra.mxu0 %v4926
          %4971 = vmatpush.msra.mxu0 %v4925
          %4972 = vmatpush.msra.mxu0 %v4924
          %4973 = vmatpush.msra.mxu0 %v4923
          %4974 = vmatpush.msra.mxu0 %v4922
          %4975 = vmatpush.msra.mxu0 %v4921
          %4976 = vmatpush.msra.mxu0 %v4920
          %4977 = vmatpush.msra.mxu0 %v4919
          %4978 = vmatmul.f32.gmra.mxu0 %v4900
          %v4979 = vpop.f32.mrf.mxu0
          %v4980 = vadd.f32 %v4957, %v4979
          %4981 = vmatmul.f32.gmra.mxu0 %v4902
          %v4982 = vpop.f32.mrf.mxu0
          %v4983 = vadd.f32 %v4960, %v4982
          %4984 = vdwg.mxu0
          %4985 = vst [vmem:[%s338] sm:$0xff] %v4980
          %4986 = vst [vmem:[%s338 + $0x8] sm:$0xff] %v4983
        $region60: #{tpu_custom_call.1} parent=51 // pred_fallthru
          _
        %s4987 = sand.u32 %s218, 1
        %s4988 = scalar_lea.sflag [#allocation7], %s4987
        %s4989 = sand.u32 %s218, 1
        %s4990 = smul.addr %s4989, 16
        %s4991 = scalar_lea.vmem [#allocation8], %s4990
        // Predicated region
        $region61: #{tpu_custom_call.1} parent=51 // pred_check
          %p4992 = pneg %p228
        $region62: #{tpu_custom_call.1} parent=51 // pred_check_branch
          %4994 = sbr.rel (%p4992) target = $region64
        $region63: #{tpu_custom_call.1} parent=51 // pred_region
          %4996 = vsyncadd %s4988, 0
          %s4997 = smul.addr %s27, 2
          %s4998 = smul.addr %s4997, 8
          %s4999 = scalar_lea.hbm %s8, %s4998
          %s5000 = sshll.u32 %s4991, 4
          %s5001 = int_to_ptr.vmem [resolvable:$true] %s5000
          %s5002 = sshll.u32 %s4999, 4
          %s5003 = int_to_ptr.hbm [resolvable:$true] %s5002
          %5008 = dma.vmem_to_hbm [thread:$0]  %s5001, 256, %s5003, %s4988, 128, 128, 8
        $region64: #{tpu_custom_call.1} parent=51 // pred_fallthru
          _
      $region52: #{tpu_custom_call.1} parent=5 // pred_fallthru
        _
      %p5009 = scmp.le.s32.totalorder 2, %s18
      // Predicated region
      $region65: #{tpu_custom_call.1} parent=5 // pred_check
        %p5010 = pneg %p5009
      $region66: #{tpu_custom_call.1} parent=5 // pred_check_branch
        %5012 = sbr.rel (%p5010) target = $region68
      $region67: #{tpu_custom_call.1} parent=5 // pred_region
        %s5013 = ssub.s32 %s18, 2
        // Predicated region
        $region69: #{tpu_custom_call.1} parent=67 // pred_check
          %p5014 = pneg %p234
        $region70: #{tpu_custom_call.1} parent=67 // pred_check_branch
          %5016 = sbr.rel (%p5014) target = $region72
        $region71: #{tpu_custom_call.1} parent=67 // pred_region
          %s5017 = sand.u32 %s219, 1
          %s5018 = scalar_lea.sflag [#allocation7], %s5017
          %s5019 = sand.u32 %s219, 1
          %s5020 = smul.addr %s5019, 16
          %s5021 = scalar_lea.vmem [#allocation8], %s5020
          %5023 = dma.done %s5018, 256
        $region72: #{tpu_custom_call.1} parent=67 // pred_fallthru
          _
      $region68: #{tpu_custom_call.1} parent=5 // pred_fallthru
        _
    $region6: #{tpu_custom_call.1} parent=1 // loop_footer
      %s22 = sadd.s32 1, %s18
    $region7: #{tpu_custom_call.1} parent=1 // loop_footer_branch
      %17 = sbr.rel target = $region3
    $region8: #{tpu_custom_call.1} parent=1 // loop_exit
      _
    %5024 = vsyncpa [#allocation6], 1
    %s5025 = scalar_lea.sflag [#allocation6], 1
    %5026 = vsyncpa %s5025, 1
    %5027 = vsyncpa [#allocation7], 1
    %s5028 = scalar_lea.sflag [#allocation7], 1
    %5029 = vsyncpa %s5028, 1

</llo_original>
